<compile_context>
chip_gen: v7x
topology: tpu7x:2x2x1
jax: 0.10.0
libtpu: 0.0.40
codegen_flags: <defaults>
</compile_context>

<pallas_src>
import functools
import math

import jax
import jax.numpy as jnp
from jax import lax
from jax.experimental import pallas as pl
from jax.experimental.pallas import tpu as pltpu

F32_EPS = 1.1920929e-07  # torch.finfo(float32).eps, used by nn.RMSNorm(eps=None)


# ----------------------------------------------------------------------------
# Fully fused forward kernel: one batch element per grid step.
# ----------------------------------------------------------------------------
def _fused_forward_kernel(
    x_ref,          # (T, input_dim)
    proj_w_ref,     # (input_dim, d_model)
    proj_b_ref,     # (1, d_model)
    cls_ref,        # (1, d_model)
    in_x_w_ref,     # (Nl, d_model, d_inner)
    in_z_w_ref,     # (Nl, d_model, d_inner)
    conv_w_ref,     # (Nl, d_conv, d_inner)
    conv_b_ref,     # (Nl, 1, d_inner)
    w_dt_ref,       # (Nl, d_inner, dt_rank)
    w_b_t_ref,      # (Nl, d_state, d_inner)
    w_c_t_ref,      # (Nl, d_state, d_inner)
    dt_w_ref,       # (Nl, dt_rank, d_inner)
    dt_b_ref,       # (Nl, 1, d_inner)
    a_t_ref,        # (Nl, d_state, d_inner)   A = -exp(A_log), transposed
    d_vec_ref,      # (Nl, 1, d_inner)
    out_w_ref,      # (Nl, d_inner, d_model)
    rms_w_ref,      # (Nl, 1, d_model)
    fc_w_ref,       # (d_model, num_labels)
    fc_b_ref,       # (1, num_labels)
    o_ref,          # (1, num_labels)
    y_ref,          # VMEM scratch (L, d_inner)
    *,
    T, L, d_model, d_inner, d_state, d_conv, dt_rank, n_layers,
):
    # ---- proj (Linear(input_dim, d_model)) ----
    xt = x_ref[...]                                              # (T, input_dim)
    hx = (
        jnp.dot(xt, proj_w_ref[...], preferred_element_type=jnp.float32)
        + proj_b_ref[...]
    )                                                            # (T, d_model)

    # ---- append cls token at the END of the sequence ----
    h = jnp.concatenate([hx, cls_ref[...]], axis=0)              # (L, d_model)

    dims = (((1,), (1,)), ((), ()))                              # contract last dims

    # ---- Mamba + RMSNorm stack (weights resident in VMEM, h stays on-chip) ----
    for li in range(n_layers):
        # in_proj split into x-branch and gate z as two lane-contiguous dots.
        xin = jnp.dot(h, in_x_w_ref[li], preferred_element_type=jnp.float32)
        z = jnp.dot(h, in_z_w_ref[li], preferred_element_type=jnp.float32)

        # causal depthwise conv1d (left pad d_conv-1 zeros) + SiLU
        conv_w = conv_w_ref[li]                                  # (d_conv, d_inner)
        xpad = jnp.concatenate(
            [jnp.zeros((d_conv - 1, d_inner), jnp.float32), xin], axis=0
        )                                                        # (L+d_conv-1, d_inner)
        acc = jnp.zeros((L, d_inner), jnp.float32)
        for k in range(d_conv):                                  # static tap loop
            acc = acc + xpad[k:k + L, :] * conv_w[k:k + 1, :]
        conv = acc + conv_b_ref[li]
        xc = conv * jax.nn.sigmoid(conv)                         # SiLU

        # input-dependent SSM parameters
        dt_low = jnp.dot(xc, w_dt_ref[li], preferred_element_type=jnp.float32)
        dt = (
            jnp.dot(dt_low, dt_w_ref[li], preferred_element_type=jnp.float32)
            + dt_b_ref[li]
        )
        # softplus (threshold 20, like torch)
        dt = jnp.where(dt > 20.0, dt, jnp.log1p(jnp.exp(jnp.minimum(dt, 20.0))))

        # B^T, C^T directly in (d_state, L) orientation
        Bt = lax.dot_general(w_b_t_ref[li], xc, dims,
                             preferred_element_type=jnp.float32)  # (d_state, L)
        Ct = lax.dot_general(w_c_t_ref[li], xc, dims,
                             preferred_element_type=jnp.float32)  # (d_state, L)

        # ---- selective scan ----
        # Precompute everything that does not depend on the carried state, so
        # the serial recurrence body is a single multiply-add.
        A_T = a_t_ref[li]                                        # (d_state, d_inner)
        dxu = dt * xc                                            # (L, d_inner)
        dA = [jnp.exp(dt[t:t + 1, :] * A_T) for t in range(L)]   # L x (d_state, d_inner)
        dBu = [dxu[t:t + 1, :] * Bt[:, t:t + 1] for t in range(L)]

        hstate = jnp.zeros((d_state, d_inner), jnp.float32)
        for t in range(L):                                       # statically unrolled (L=9)
            hstate = dA[t] * hstate + dBu[t]                     # carried dependency
            y_t = jnp.sum(hstate * Ct[:, t:t + 1], axis=0, keepdims=True)
            y_ref[pl.ds(t, 1), :] = y_t                          # row store to scratch

        y = y_ref[...]                                           # (L, d_inner)

        # skip term, gate, out_proj
        y = y + d_vec_ref[li] * xc
        y = y * (z * jax.nn.sigmoid(z))                          # y * SiLU(z)
        out = jnp.dot(y, out_w_ref[li], preferred_element_type=jnp.float32)

        # RMSNorm over d_model (no residual, matching the torch reference)
        ms = jnp.mean(out * out, axis=-1, keepdims=True)
        h = out * lax.rsqrt(ms + F32_EPS) * rms_w_ref[li]        # (L, d_model)

    # ---- cls output (last position along L) + fc ----
    cls_out = h[L - 1:L, :]                                      # (1, d_model)
    logits = (
        jnp.dot(cls_out, fc_w_ref[...], preferred_element_type=jnp.float32)
        + fc_b_ref[...]
    )
    o_ref[...] = logits


# ----------------------------------------------------------------------------
# Parameter init (deterministic, synthetic) with per-layer weights stacked
# along a leading layer axis so the whole stack rides in one pallas_call.
# ----------------------------------------------------------------------------
def init_params(key, *, input_dim, d_model, d_state, d_conv, expand,
                num_labels, num_layers):
    d_inner = expand * d_model
    dt_rank = math.ceil(d_model / 16)

    def nrm(k, shape, scale):
        return jax.random.normal(k, shape, jnp.float32) * scale

    keys = jax.random.split(key, 4 + num_layers)
    params = {
        "proj_w_t": nrm(keys[0], (input_dim, d_model), 1.0 / math.sqrt(input_dim)),
        "proj_b": jnp.zeros((1, d_model), jnp.float32),
        "cls_token": jnp.zeros((1, d_model), jnp.float32),       # torch.zeros init
        "fc_w_t": nrm(keys[1], (d_model, num_labels), 1.0 / math.sqrt(d_model)),
        "fc_b": jnp.zeros((1, num_labels), jnp.float32),
    }

    layers = []
    for li in range(num_layers):
        lk = jax.random.split(keys[4 + li], 8)
        # Mamba S4D-real init: A[c, s] = s + 1, used as -exp(A_log) = -A
        A = jnp.tile(jnp.arange(1, d_state + 1, dtype=jnp.float32)[None, :],
                     (d_inner, 1))                               # (d_inner, d_state)
        in_proj = nrm(lk[0], (d_model, 2 * d_inner), 1.0 / math.sqrt(d_model))
        layers.append(dict(
            in_x_w=in_proj[:, :d_inner],
            in_z_w=in_proj[:, d_inner:],
            conv_w=nrm(lk[1], (d_conv, d_inner), 1.0 / math.sqrt(d_conv)),
            conv_b=jnp.zeros((1, d_inner), jnp.float32),
            w_dt=nrm(lk[2], (d_inner, dt_rank), 1.0 / math.sqrt(d_inner)),
            w_b_t=nrm(lk[3], (d_state, d_inner), 1.0 / math.sqrt(d_inner)),
            w_c_t=nrm(lk[4], (d_state, d_inner), 1.0 / math.sqrt(d_inner)),
            dt_proj_w=nrm(lk[5], (dt_rank, d_inner), 1.0 / math.sqrt(dt_rank)),
            dt_proj_b=nrm(lk[6], (1, d_inner), 0.1),
            a_t=(-A).T,                                          # (d_state, d_inner)
            d_vec=jnp.ones((1, d_inner), jnp.float32),
            out_proj_w=nrm(lk[7], (d_inner, d_model), 1.0 / math.sqrt(d_inner)),
            rms_w=jnp.ones((1, d_model), jnp.float32),
        ))

    def stack(name):
        return jnp.stack([layer[name] for layer in layers], axis=0)

    for name in ("in_x_w", "in_z_w", "conv_w", "conv_b", "w_dt", "w_b_t",
                 "w_c_t", "dt_proj_w", "dt_proj_b", "a_t", "d_vec",
                 "out_proj_w", "rms_w"):
        params[name] = stack(name)
    params["num_layers"] = num_layers
    return params


# ----------------------------------------------------------------------------
# Full forward pass: ONE fused pallas_call over a parallel batch grid.
# ----------------------------------------------------------------------------
def forward(x, params, *, d_model, d_state, d_conv, expand, num_labels):
    # x: (B, input_dim, T), torch NCW convention
    B, input_dim, T = x.shape
    L = T + 1
    d_inner = expand * d_model
    dt_rank = math.ceil(d_model / 16)
    n_layers = params["num_layers"]

    xt = jnp.transpose(x, (0, 2, 1))                             # (B, T, input_dim)

    kernel = functools.partial(
        _fused_forward_kernel,
        T=T, L=L, d_model=d_model, d_inner=d_inner, d_state=d_state,
        d_conv=d_conv, dt_rank=dt_rank, n_layers=n_layers,
    )

    weights = [
        params["proj_w_t"], params["proj_b"], params["cls_token"],
        params["in_x_w"], params["in_z_w"], params["conv_w"], params["conv_b"],
        params["w_dt"], params["w_b_t"], params["w_c_t"],
        params["dt_proj_w"], params["dt_proj_b"], params["a_t"],
        params["d_vec"], params["out_proj_w"], params["rms_w"],
        params["fc_w_t"], params["fc_b"],
    ]
    w_specs = [
        pl.BlockSpec(w.shape, lambda b, n=w.ndim: (0,) * n) for w in weights
    ]

    logits3 = pl.pallas_call(
        kernel,
        out_shape=jax.ShapeDtypeStruct((B, 1, num_labels), jnp.float32),
        grid=(B,),
        in_specs=[pl.BlockSpec((None, T, input_dim), lambda b: (b, 0, 0))] + w_specs,
        out_specs=pl.BlockSpec((None, 1, num_labels), lambda b: (b, 0, 0)),
        scratch_shapes=[pltpu.VMEM((L, d_inner), jnp.float32)],
        compiler_params=pltpu.CompilerParams(dimension_semantics=("parallel",)),
    )(xt, *weights)

    return logits3[:, 0, :]                                      # (B, num_labels)


if __name__ == "__main__":
    B, input_dim, T = 2, 20, 8
    d_model, d_state, d_conv, expand = 32, 16, 4, 2
    num_labels = 10
    num_layers = 2

    key = jax.random.PRNGKey(0)
    kx, kp = jax.random.split(key)
    x = jax.random.normal(kx, (B, input_dim, T), jnp.float32)
    params = init_params(
        kp, input_dim=input_dim, d_model=d_model, d_state=d_state,
        d_conv=d_conv, expand=expand, num_labels=num_labels,
        num_layers=num_layers,
    )

    logits = forward(x, params, d_model=d_model, d_state=d_state,
                     d_conv=d_conv, expand=expand, num_labels=num_labels)
    jax.block_until_ready(logits)
    assert logits.shape == (B, num_labels)
    assert bool(jnp.all(jnp.isfinite(logits)))
    print("KERNEL_OK")
</pallas_src>

<mosaic_0001>
module attributes {stable_mosaic.version = 11 : i64} {
  func.func @_fused_forward_kernel(%arg0: i32, %arg1: memref<1x8x20xf32, #tpu.memory_space<vmem>>, %arg2: memref<20x32xf32, #tpu.memory_space<vmem>>, %arg3: memref<1x32xf32, #tpu.memory_space<vmem>>, %arg4: memref<1x32xf32, #tpu.memory_space<vmem>>, %arg5: memref<2x32x64xf32, #tpu.memory_space<vmem>>, %arg6: memref<2x32x64xf32, #tpu.memory_space<vmem>>, %arg7: memref<2x4x64xf32, #tpu.memory_space<vmem>>, %arg8: memref<2x1x64xf32, #tpu.memory_space<vmem>>, %arg9: memref<2x64x2xf32, #tpu.memory_space<vmem>>, %arg10: memref<2x16x64xf32, #tpu.memory_space<vmem>>, %arg11: memref<2x16x64xf32, #tpu.memory_space<vmem>>, %arg12: memref<2x2x64xf32, #tpu.memory_space<vmem>>, %arg13: memref<2x1x64xf32, #tpu.memory_space<vmem>>, %arg14: memref<2x16x64xf32, #tpu.memory_space<vmem>>, %arg15: memref<2x1x64xf32, #tpu.memory_space<vmem>>, %arg16: memref<2x64x32xf32, #tpu.memory_space<vmem>>, %arg17: memref<2x1x32xf32, #tpu.memory_space<vmem>>, %arg18: memref<32x10xf32, #tpu.memory_space<vmem>>, %arg19: memref<1x10xf32, #tpu.memory_space<vmem>>, %arg20: memref<1x1x10xf32, #tpu.memory_space<vmem>>, %arg21: memref<9x64xf32, #tpu.memory_space<vmem>>) attributes {dimension_semantics = [#tpu.dimension_semantics<parallel>], iteration_bounds = array<i64: 2>, scalar_prefetch = 0 : i64, scratch_operands = 1 : i64, tpu.core_type = #tpu.core_type<tc>, window_params = [{transform_indices = @transform_0, window_bounds = array<i64: 1, 8, 20>}, {pipeline_mode = #tpu.pipeline_mode<synchronous>, transform_indices = @transform_1, window_bounds = array<i64: 20, 32>}, {pipeline_mode = #tpu.pipeline_mode<synchronous>, transform_indices = @transform_2, window_bounds = array<i64: 1, 32>}, {pipeline_mode = #tpu.pipeline_mode<synchronous>, transform_indices = @transform_3, window_bounds = array<i64: 1, 32>}, {pipeline_mode = #tpu.pipeline_mode<synchronous>, transform_indices = @transform_4, window_bounds = array<i64: 2, 32, 64>}, {pipeline_mode = #tpu.pipeline_mode<synchronous>, transform_indices = @transform_5, window_bounds = array<i64: 2, 32, 64>}, {pipeline_mode = #tpu.pipeline_mode<synchronous>, transform_indices = @transform_6, window_bounds = array<i64: 2, 4, 64>}, {pipeline_mode = #tpu.pipeline_mode<synchronous>, transform_indices = @transform_7, window_bounds = array<i64: 2, 1, 64>}, {pipeline_mode = #tpu.pipeline_mode<synchronous>, transform_indices = @transform_8, window_bounds = array<i64: 2, 64, 2>}, {pipeline_mode = #tpu.pipeline_mode<synchronous>, transform_indices = @transform_9, window_bounds = array<i64: 2, 16, 64>}, {pipeline_mode = #tpu.pipeline_mode<synchronous>, transform_indices = @transform_10, window_bounds = array<i64: 2, 16, 64>}, {pipeline_mode = #tpu.pipeline_mode<synchronous>, transform_indices = @transform_11, window_bounds = array<i64: 2, 2, 64>}, {pipeline_mode = #tpu.pipeline_mode<synchronous>, transform_indices = @transform_12, window_bounds = array<i64: 2, 1, 64>}, {pipeline_mode = #tpu.pipeline_mode<synchronous>, transform_indices = @transform_13, window_bounds = array<i64: 2, 16, 64>}, {pipeline_mode = #tpu.pipeline_mode<synchronous>, transform_indices = @transform_14, window_bounds = array<i64: 2, 1, 64>}, {pipeline_mode = #tpu.pipeline_mode<synchronous>, transform_indices = @transform_15, window_bounds = array<i64: 2, 64, 32>}, {pipeline_mode = #tpu.pipeline_mode<synchronous>, transform_indices = @transform_16, window_bounds = array<i64: 2, 1, 32>}, {pipeline_mode = #tpu.pipeline_mode<synchronous>, transform_indices = @transform_17, window_bounds = array<i64: 32, 10>}, {pipeline_mode = #tpu.pipeline_mode<synchronous>, transform_indices = @transform_18, window_bounds = array<i64: 1, 10>}, {transform_indices = @transform_19, window_bounds = array<i64: 1, 1, 10>}]} {
    %c0 = arith.constant 0 : index
    %c0_0 = arith.constant 0 : index
    %c0_1 = arith.constant 0 : index
    %0 = vector.load %arg1[%c0, %c0_0, %c0_1] : memref<1x8x20xf32, #tpu.memory_space<vmem>>, vector<1x8x20xf32>
    %1 = vector.shape_cast %0 : vector<1x8x20xf32> to vector<8x20xf32>
    %c0_2 = arith.constant 0 : index
    %c0_3 = arith.constant 0 : index
    %2 = vector.load %arg2[%c0_2, %c0_3] : memref<20x32xf32, #tpu.memory_space<vmem>>, vector<20x32xf32>
    %cst = arith.constant dense<0.000000e+00> : vector<8x32xf32>
    %3 = tpu.matmul %1, %2, %cst {dimension_numbers = #tpu.dot_dimension_numbers<[1], [0], [0], [1], [0, 0, 1, 1], [], []>} : vector<8x20xf32>, vector<20x32xf32>, vector<8x32xf32> -> vector<8x32xf32>
    %c0_4 = arith.constant 0 : index
    %c0_5 = arith.constant 0 : index
    %4 = vector.load %arg3[%c0_4, %c0_5] : memref<1x32xf32, #tpu.memory_space<vmem>>, vector<1x32xf32>
    %5 = vector.broadcast %4 : vector<1x32xf32> to vector<8x32xf32>
    %6 = arith.addf %3, %5 : vector<8x32xf32>
    %c0_6 = arith.constant 0 : index
    %c0_7 = arith.constant 0 : index
    %7 = vector.load %arg4[%c0_6, %c0_7] : memref<1x32xf32, #tpu.memory_space<vmem>>, vector<1x32xf32>
    %8 = tpu.concatenate %6, %7 in 0 : vector<8x32xf32>, vector<1x32xf32> -> vector<9x32xf32>
    %c0_8 = arith.constant 0 : index
    %c0_9 = arith.constant 0 : index
    %c0_10 = arith.constant 0 : index
    %9 = vector.load %arg5[%c0_8, %c0_9, %c0_10] : memref<2x32x64xf32, #tpu.memory_space<vmem>>, vector<1x32x64xf32>
    %10 = vector.shape_cast %9 : vector<1x32x64xf32> to vector<32x64xf32>
    %cst_11 = arith.constant dense<0.000000e+00> : vector<9x64xf32>
    %11 = tpu.matmul %8, %10, %cst_11 {dimension_numbers = #tpu.dot_dimension_numbers<[1], [0], [0], [1], [0, 0, 1, 1], [], []>} : vector<9x32xf32>, vector<32x64xf32>, vector<9x64xf32> -> vector<9x64xf32>
    %c0_12 = arith.constant 0 : index
    %c0_13 = arith.constant 0 : index
    %c0_14 = arith.constant 0 : index
    %12 = vector.load %arg6[%c0_12, %c0_13, %c0_14] : memref<2x32x64xf32, #tpu.memory_space<vmem>>, vector<1x32x64xf32>
    %13 = vector.shape_cast %12 : vector<1x32x64xf32> to vector<32x64xf32>
    %cst_15 = arith.constant dense<0.000000e+00> : vector<9x64xf32>
    %14 = tpu.matmul %8, %13, %cst_15 {dimension_numbers = #tpu.dot_dimension_numbers<[1], [0], [0], [1], [0, 0, 1, 1], [], []>} : vector<9x32xf32>, vector<32x64xf32>, vector<9x64xf32> -> vector<9x64xf32>
    %c0_16 = arith.constant 0 : index
    %c0_17 = arith.constant 0 : index
    %c0_18 = arith.constant 0 : index
    %15 = vector.load %arg7[%c0_16, %c0_17, %c0_18] : memref<2x4x64xf32, #tpu.memory_space<vmem>>, vector<1x4x64xf32>
    %16 = vector.shape_cast %15 : vector<1x4x64xf32> to vector<4x64xf32>
    %cst_19 = arith.constant 0.000000e+00 : f32
    %17 = vector.broadcast %cst_19 : f32 to vector<3x64xf32>
    %18 = tpu.concatenate %17, %11 in 0 : vector<3x64xf32>, vector<9x64xf32> -> vector<12x64xf32>
    %cst_20 = arith.constant 0.000000e+00 : f32
    %19 = vector.broadcast %cst_20 : f32 to vector<9x64xf32>
    %20 = vector.extract_strided_slice %18 {offsets = [0, 0], sizes = [9, 64], strides = [1, 1]} : vector<12x64xf32> to vector<9x64xf32>
    %21 = vector.extract_strided_slice %16 {offsets = [0, 0], sizes = [1, 64], strides = [1, 1]} : vector<4x64xf32> to vector<1x64xf32>
    %22 = vector.broadcast %21 : vector<1x64xf32> to vector<9x64xf32>
    %23 = arith.mulf %20, %22 : vector<9x64xf32>
    %24 = arith.addf %19, %23 : vector<9x64xf32>
    %25 = vector.extract_strided_slice %18 {offsets = [1, 0], sizes = [9, 64], strides = [1, 1]} : vector<12x64xf32> to vector<9x64xf32>
    %26 = vector.extract_strided_slice %16 {offsets = [1, 0], sizes = [1, 64], strides = [1, 1]} : vector<4x64xf32> to vector<1x64xf32>
    %27 = vector.broadcast %26 : vector<1x64xf32> to vector<9x64xf32>
    %28 = arith.mulf %25, %27 : vector<9x64xf32>
    %29 = arith.addf %24, %28 : vector<9x64xf32>
    %30 = vector.extract_strided_slice %18 {offsets = [2, 0], sizes = [9, 64], strides = [1, 1]} : vector<12x64xf32> to vector<9x64xf32>
    %31 = vector.extract_strided_slice %16 {offsets = [2, 0], sizes = [1, 64], strides = [1, 1]} : vector<4x64xf32> to vector<1x64xf32>
    %32 = vector.broadcast %31 : vector<1x64xf32> to vector<9x64xf32>
    %33 = arith.mulf %30, %32 : vector<9x64xf32>
    %34 = arith.addf %29, %33 : vector<9x64xf32>
    %35 = vector.extract_strided_slice %18 {offsets = [3, 0], sizes = [9, 64], strides = [1, 1]} : vector<12x64xf32> to vector<9x64xf32>
    %36 = vector.extract_strided_slice %16 {offsets = [3, 0], sizes = [1, 64], strides = [1, 1]} : vector<4x64xf32> to vector<1x64xf32>
    %37 = vector.broadcast %36 : vector<1x64xf32> to vector<9x64xf32>
    %38 = arith.mulf %35, %37 : vector<9x64xf32>
    %39 = arith.addf %34, %38 : vector<9x64xf32>
    %c0_21 = arith.constant 0 : index
    %c0_22 = arith.constant 0 : index
    %c0_23 = arith.constant 0 : index
    %40 = vector.load %arg8[%c0_21, %c0_22, %c0_23] : memref<2x1x64xf32, #tpu.memory_space<vmem>>, vector<1x1x64xf32>
    %41 = vector.shape_cast %40 : vector<1x1x64xf32> to vector<1x64xf32>
    %42 = vector.broadcast %41 : vector<1x64xf32> to vector<9x64xf32>
    %43 = arith.addf %39, %42 : vector<9x64xf32>
    %44 = arith.negf %43 : vector<9x64xf32>
    %45 = math.exp %44 : vector<9x64xf32>
    %cst_24 = arith.constant 1.000000e+00 : f32
    %46 = vector.broadcast %cst_24 : f32 to vector<9x64xf32>
    %47 = arith.addf %46, %45 : vector<9x64xf32>
    %48 = arith.divf %46, %47 : vector<9x64xf32>
    %49 = arith.mulf %43, %48 : vector<9x64xf32>
    %c0_25 = arith.constant 0 : index
    %c0_26 = arith.constant 0 : index
    %c0_27 = arith.constant 0 : index
    %50 = vector.load %arg9[%c0_25, %c0_26, %c0_27] : memref<2x64x2xf32, #tpu.memory_space<vmem>>, vector<1x64x2xf32>
    %51 = vector.shape_cast %50 : vector<1x64x2xf32> to vector<64x2xf32>
    %cst_28 = arith.constant dense<0.000000e+00> : vector<9x2xf32>
    %52 = tpu.matmul %49, %51, %cst_28 {dimension_numbers = #tpu.dot_dimension_numbers<[1], [0], [0], [1], [0, 0, 1, 1], [], []>} : vector<9x64xf32>, vector<64x2xf32>, vector<9x2xf32> -> vector<9x2xf32>
    %c0_29 = arith.constant 0 : index
    %c0_30 = arith.constant 0 : index
    %c0_31 = arith.constant 0 : index
    %53 = vector.load %arg12[%c0_29, %c0_30, %c0_31] : memref<2x2x64xf32, #tpu.memory_space<vmem>>, vector<1x2x64xf32>
    %54 = vector.shape_cast %53 : vector<1x2x64xf32> to vector<2x64xf32>
    %cst_32 = arith.constant dense<0.000000e+00> : vector<9x64xf32>
    %55 = tpu.matmul %52, %54, %cst_32 {dimension_numbers = #tpu.dot_dimension_numbers<[1], [0], [0], [1], [0, 0, 1, 1], [], []>} : vector<9x2xf32>, vector<2x64xf32>, vector<9x64xf32> -> vector<9x64xf32>
    %c0_33 = arith.constant 0 : index
    %c0_34 = arith.constant 0 : index
    %c0_35 = arith.constant 0 : index
    %56 = vector.load %arg13[%c0_33, %c0_34, %c0_35] : memref<2x1x64xf32, #tpu.memory_space<vmem>>, vector<1x1x64xf32>
    %57 = vector.shape_cast %56 : vector<1x1x64xf32> to vector<1x64xf32>
    %58 = vector.broadcast %57 : vector<1x64xf32> to vector<9x64xf32>
    %59 = arith.addf %55, %58 : vector<9x64xf32>
    %cst_36 = arith.constant 2.000000e+01 : f32
    %60 = vector.broadcast %cst_36 : f32 to vector<9x64xf32>
    %61 = arith.cmpf ogt, %59, %60 : vector<9x64xf32>
    %cst_37 = arith.constant 2.000000e+01 : f32
    %62 = vector.broadcast %cst_37 : f32 to vector<9x64xf32>
    %63 = arith.minimumf %59, %62 : vector<9x64xf32>
    %64 = math.exp %63 : vector<9x64xf32>
    %65 = math.log1p %64 : vector<9x64xf32>
    %66 = arith.select %61, %59, %65 : vector<9x64xi1>, vector<9x64xf32>
    %c0_38 = arith.constant 0 : index
    %c0_39 = arith.constant 0 : index
    %c0_40 = arith.constant 0 : index
    %67 = vector.load %arg10[%c0_38, %c0_39, %c0_40] : memref<2x16x64xf32, #tpu.memory_space<vmem>>, vector<1x16x64xf32>
    %68 = vector.shape_cast %67 : vector<1x16x64xf32> to vector<16x64xf32>
    %cst_41 = arith.constant dense<0.000000e+00> : vector<16x9xf32>
    %69 = tpu.matmul %68, %49, %cst_41 {dimension_numbers = #tpu.dot_dimension_numbers<[1], [1], [0], [0], [0, 0, 1, 0], [], []>} : vector<16x64xf32>, vector<9x64xf32>, vector<16x9xf32> -> vector<16x9xf32>
    %c0_42 = arith.constant 0 : index
    %c0_43 = arith.constant 0 : index
    %c0_44 = arith.constant 0 : index
    %70 = vector.load %arg11[%c0_42, %c0_43, %c0_44] : memref<2x16x64xf32, #tpu.memory_space<vmem>>, vector<1x16x64xf32>
    %71 = vector.shape_cast %70 : vector<1x16x64xf32> to vector<16x64xf32>
    %cst_45 = arith.constant dense<0.000000e+00> : vector<16x9xf32>
    %72 = tpu.matmul %71, %49, %cst_45 {dimension_numbers = #tpu.dot_dimension_numbers<[1], [1], [0], [0], [0, 0, 1, 0], [], []>} : vector<16x64xf32>, vector<9x64xf32>, vector<16x9xf32> -> vector<16x9xf32>
    %c0_46 = arith.constant 0 : index
    %c0_47 = arith.constant 0 : index
    %c0_48 = arith.constant 0 : index
    %73 = vector.load %arg14[%c0_46, %c0_47, %c0_48] : memref<2x16x64xf32, #tpu.memory_space<vmem>>, vector<1x16x64xf32>
    %74 = vector.shape_cast %73 : vector<1x16x64xf32> to vector<16x64xf32>
    %75 = arith.mulf %66, %49 : vector<9x64xf32>
    %76 = vector.extract_strided_slice %66 {offsets = [0, 0], sizes = [1, 64], strides = [1, 1]} : vector<9x64xf32> to vector<1x64xf32>
    %77 = vector.broadcast %76 : vector<1x64xf32> to vector<16x64xf32>
    %78 = arith.mulf %77, %74 : vector<16x64xf32>
    %79 = math.exp %78 : vector<16x64xf32>
    %80 = vector.extract_strided_slice %66 {offsets = [1, 0], sizes = [1, 64], strides = [1, 1]} : vector<9x64xf32> to vector<1x64xf32>
    %81 = vector.broadcast %80 : vector<1x64xf32> to vector<16x64xf32>
    %82 = arith.mulf %81, %74 : vector<16x64xf32>
    %83 = math.exp %82 : vector<16x64xf32>
    %84 = vector.extract_strided_slice %66 {offsets = [2, 0], sizes = [1, 64], strides = [1, 1]} : vector<9x64xf32> to vector<1x64xf32>
    %85 = vector.broadcast %84 : vector<1x64xf32> to vector<16x64xf32>
    %86 = arith.mulf %85, %74 : vector<16x64xf32>
    %87 = math.exp %86 : vector<16x64xf32>
    %88 = vector.extract_strided_slice %66 {offsets = [3, 0], sizes = [1, 64], strides = [1, 1]} : vector<9x64xf32> to vector<1x64xf32>
    %89 = vector.broadcast %88 : vector<1x64xf32> to vector<16x64xf32>
    %90 = arith.mulf %89, %74 : vector<16x64xf32>
    %91 = math.exp %90 : vector<16x64xf32>
    %92 = vector.extract_strided_slice %66 {offsets = [4, 0], sizes = [1, 64], strides = [1, 1]} : vector<9x64xf32> to vector<1x64xf32>
    %93 = vector.broadcast %92 : vector<1x64xf32> to vector<16x64xf32>
    %94 = arith.mulf %93, %74 : vector<16x64xf32>
    %95 = math.exp %94 : vector<16x64xf32>
    %96 = vector.extract_strided_slice %66 {offsets = [5, 0], sizes = [1, 64], strides = [1, 1]} : vector<9x64xf32> to vector<1x64xf32>
    %97 = vector.broadcast %96 : vector<1x64xf32> to vector<16x64xf32>
    %98 = arith.mulf %97, %74 : vector<16x64xf32>
    %99 = math.exp %98 : vector<16x64xf32>
    %100 = vector.extract_strided_slice %66 {offsets = [6, 0], sizes = [1, 64], strides = [1, 1]} : vector<9x64xf32> to vector<1x64xf32>
    %101 = vector.broadcast %100 : vector<1x64xf32> to vector<16x64xf32>
    %102 = arith.mulf %101, %74 : vector<16x64xf32>
    %103 = math.exp %102 : vector<16x64xf32>
    %104 = vector.extract_strided_slice %66 {offsets = [7, 0], sizes = [1, 64], strides = [1, 1]} : vector<9x64xf32> to vector<1x64xf32>
    %105 = vector.broadcast %104 : vector<1x64xf32> to vector<16x64xf32>
    %106 = arith.mulf %105, %74 : vector<16x64xf32>
    %107 = math.exp %106 : vector<16x64xf32>
    %108 = vector.extract_strided_slice %66 {offsets = [8, 0], sizes = [1, 64], strides = [1, 1]} : vector<9x64xf32> to vector<1x64xf32>
    %109 = vector.broadcast %108 : vector<1x64xf32> to vector<16x64xf32>
    %110 = arith.mulf %109, %74 : vector<16x64xf32>
    %111 = math.exp %110 : vector<16x64xf32>
    %112 = vector.extract_strided_slice %75 {offsets = [0, 0], sizes = [1, 64], strides = [1, 1]} : vector<9x64xf32> to vector<1x64xf32>
    %113 = vector.extract_strided_slice %69 {offsets = [0, 0], sizes = [16, 1], strides = [1, 1]} : vector<16x9xf32> to vector<16x1xf32>
    %114 = vector.broadcast %112 : vector<1x64xf32> to vector<16x64xf32>
    %115 = vector.broadcast %113 : vector<16x1xf32> to vector<16x64xf32>
    %116 = arith.mulf %114, %115 : vector<16x64xf32>
    %117 = vector.extract_strided_slice %75 {offsets = [1, 0], sizes = [1, 64], strides = [1, 1]} : vector<9x64xf32> to vector<1x64xf32>
    %118 = vector.extract_strided_slice %69 {offsets = [0, 1], sizes = [16, 1], strides = [1, 1]} : vector<16x9xf32> to vector<16x1xf32>
    %119 = vector.broadcast %117 : vector<1x64xf32> to vector<16x64xf32>
    %120 = vector.broadcast %118 : vector<16x1xf32> to vector<16x64xf32>
    %121 = arith.mulf %119, %120 : vector<16x64xf32>
    %122 = vector.extract_strided_slice %75 {offsets = [2, 0], sizes = [1, 64], strides = [1, 1]} : vector<9x64xf32> to vector<1x64xf32>
    %123 = vector.extract_strided_slice %69 {offsets = [0, 2], sizes = [16, 1], strides = [1, 1]} : vector<16x9xf32> to vector<16x1xf32>
    %124 = vector.broadcast %122 : vector<1x64xf32> to vector<16x64xf32>
    %125 = vector.broadcast %123 : vector<16x1xf32> to vector<16x64xf32>
    %126 = arith.mulf %124, %125 : vector<16x64xf32>
    %127 = vector.extract_strided_slice %75 {offsets = [3, 0], sizes = [1, 64], strides = [1, 1]} : vector<9x64xf32> to vector<1x64xf32>
    %128 = vector.extract_strided_slice %69 {offsets = [0, 3], sizes = [16, 1], strides = [1, 1]} : vector<16x9xf32> to vector<16x1xf32>
    %129 = vector.broadcast %127 : vector<1x64xf32> to vector<16x64xf32>
    %130 = vector.broadcast %128 : vector<16x1xf32> to vector<16x64xf32>
    %131 = arith.mulf %129, %130 : vector<16x64xf32>
    %132 = vector.extract_strided_slice %75 {offsets = [4, 0], sizes = [1, 64], strides = [1, 1]} : vector<9x64xf32> to vector<1x64xf32>
    %133 = vector.extract_strided_slice %69 {offsets = [0, 4], sizes = [16, 1], strides = [1, 1]} : vector<16x9xf32> to vector<16x1xf32>
    %134 = vector.broadcast %132 : vector<1x64xf32> to vector<16x64xf32>
    %135 = vector.broadcast %133 : vector<16x1xf32> to vector<16x64xf32>
    %136 = arith.mulf %134, %135 : vector<16x64xf32>
    %137 = vector.extract_strided_slice %75 {offsets = [5, 0], sizes = [1, 64], strides = [1, 1]} : vector<9x64xf32> to vector<1x64xf32>
    %138 = vector.extract_strided_slice %69 {offsets = [0, 5], sizes = [16, 1], strides = [1, 1]} : vector<16x9xf32> to vector<16x1xf32>
    %139 = vector.broadcast %137 : vector<1x64xf32> to vector<16x64xf32>
    %140 = vector.broadcast %138 : vector<16x1xf32> to vector<16x64xf32>
    %141 = arith.mulf %139, %140 : vector<16x64xf32>
    %142 = vector.extract_strided_slice %75 {offsets = [6, 0], sizes = [1, 64], strides = [1, 1]} : vector<9x64xf32> to vector<1x64xf32>
    %143 = vector.extract_strided_slice %69 {offsets = [0, 6], sizes = [16, 1], strides = [1, 1]} : vector<16x9xf32> to vector<16x1xf32>
    %144 = vector.broadcast %142 : vector<1x64xf32> to vector<16x64xf32>
    %145 = vector.broadcast %143 : vector<16x1xf32> to vector<16x64xf32>
    %146 = arith.mulf %144, %145 : vector<16x64xf32>
    %147 = vector.extract_strided_slice %75 {offsets = [7, 0], sizes = [1, 64], strides = [1, 1]} : vector<9x64xf32> to vector<1x64xf32>
    %148 = vector.extract_strided_slice %69 {offsets = [0, 7], sizes = [16, 1], strides = [1, 1]} : vector<16x9xf32> to vector<16x1xf32>
    %149 = vector.broadcast %147 : vector<1x64xf32> to vector<16x64xf32>
    %150 = vector.broadcast %148 : vector<16x1xf32> to vector<16x64xf32>
    %151 = arith.mulf %149, %150 : vector<16x64xf32>
    %152 = vector.extract_strided_slice %75 {offsets = [8, 0], sizes = [1, 64], strides = [1, 1]} : vector<9x64xf32> to vector<1x64xf32>
    %153 = vector.extract_strided_slice %69 {offsets = [0, 8], sizes = [16, 1], strides = [1, 1]} : vector<16x9xf32> to vector<16x1xf32>
    %154 = vector.broadcast %152 : vector<1x64xf32> to vector<16x64xf32>
    %155 = vector.broadcast %153 : vector<16x1xf32> to vector<16x64xf32>
    %156 = arith.mulf %154, %155 : vector<16x64xf32>
    %cst_49 = arith.constant 0.000000e+00 : f32
    %157 = vector.broadcast %cst_49 : f32 to vector<16x64xf32>
    %158 = arith.mulf %79, %157 : vector<16x64xf32>
    %159 = arith.addf %158, %116 : vector<16x64xf32>
    %160 = vector.extract_strided_slice %72 {offsets = [0, 0], sizes = [16, 1], strides = [1, 1]} : vector<16x9xf32> to vector<16x1xf32>
    %161 = vector.broadcast %160 : vector<16x1xf32> to vector<16x64xf32>
    %162 = arith.mulf %159, %161 : vector<16x64xf32>
    %cst_50 = arith.constant dense<0.000000e+00> : vector<64xf32>
    %163 = vector.multi_reduction <add>, %162, %cst_50 [0] : vector<16x64xf32> to vector<64xf32>
    %164 = vector.shape_cast %163 : vector<64xf32> to vector<1x64xf32>
    %c0_51 = arith.constant 0 : index
    %c0_52 = arith.constant 0 : index
    %165 = vector.load %arg21[%c0_51, %c0_52] : memref<9x64xf32, #tpu.memory_space<vmem>>, vector<1x64xf32>
    tpu.vector_store %arg21[%c0_51, %c0_52], %164 {strides = array<i32>} : memref<9x64xf32, #tpu.memory_space<vmem>>, vector<1x64xf32>,
    %166 = arith.mulf %83, %159 : vector<16x64xf32>
    %167 = arith.addf %166, %121 : vector<16x64xf32>
    %168 = vector.extract_strided_slice %72 {offsets = [0, 1], sizes = [16, 1], strides = [1, 1]} : vector<16x9xf32> to vector<16x1xf32>
    %169 = vector.broadcast %168 : vector<16x1xf32> to vector<16x64xf32>
    %170 = arith.mulf %167, %169 : vector<16x64xf32>
    %cst_53 = arith.constant dense<0.000000e+00> : vector<64xf32>
    %171 = vector.multi_reduction <add>, %170, %cst_53 [0] : vector<16x64xf32> to vector<64xf32>
    %172 = vector.shape_cast %171 : vector<64xf32> to vector<1x64xf32>
    %c1 = arith.constant 1 : index
    %c0_54 = arith.constant 0 : index
    %173 = vector.load %arg21[%c1, %c0_54] : memref<9x64xf32, #tpu.memory_space<vmem>>, vector<1x64xf32>
    tpu.vector_store %arg21[%c1, %c0_54], %172 {strides = array<i32>} : memref<9x64xf32, #tpu.memory_space<vmem>>, vector<1x64xf32>,
    %174 = arith.mulf %87, %167 : vector<16x64xf32>
    %175 = arith.addf %174, %126 : vector<16x64xf32>
    %176 = vector.extract_strided_slice %72 {offsets = [0, 2], sizes = [16, 1], strides = [1, 1]} : vector<16x9xf32> to vector<16x1xf32>
    %177 = vector.broadcast %176 : vector<16x1xf32> to vector<16x64xf32>
    %178 = arith.mulf %175, %177 : vector<16x64xf32>
    %cst_55 = arith.constant dense<0.000000e+00> : vector<64xf32>
    %179 = vector.multi_reduction <add>, %178, %cst_55 [0] : vector<16x64xf32> to vector<64xf32>
    %180 = vector.shape_cast %179 : vector<64xf32> to vector<1x64xf32>
    %c2 = arith.constant 2 : index
    %c0_56 = arith.constant 0 : index
    %181 = vector.load %arg21[%c2, %c0_56] : memref<9x64xf32, #tpu.memory_space<vmem>>, vector<1x64xf32>
    tpu.vector_store %arg21[%c2, %c0_56], %180 {strides = array<i32>} : memref<9x64xf32, #tpu.memory_space<vmem>>, vector<1x64xf32>,
    %182 = arith.mulf %91, %175 : vector<16x64xf32>
    %183 = arith.addf %182, %131 : vector<16x64xf32>
    %184 = vector.extract_strided_slice %72 {offsets = [0, 3], sizes = [16, 1], strides = [1, 1]} : vector<16x9xf32> to vector<16x1xf32>
    %185 = vector.broadcast %184 : vector<16x1xf32> to vector<16x64xf32>
    %186 = arith.mulf %183, %185 : vector<16x64xf32>
    %cst_57 = arith.constant dense<0.000000e+00> : vector<64xf32>
    %187 = vector.multi_reduction <add>, %186, %cst_57 [0] : vector<16x64xf32> to vector<64xf32>
    %188 = vector.shape_cast %187 : vector<64xf32> to vector<1x64xf32>
    %c3 = arith.constant 3 : index
    %c0_58 = arith.constant 0 : index
    %189 = vector.load %arg21[%c3, %c0_58] : memref<9x64xf32, #tpu.memory_space<vmem>>, vector<1x64xf32>
    tpu.vector_store %arg21[%c3, %c0_58], %188 {strides = array<i32>} : memref<9x64xf32, #tpu.memory_space<vmem>>, vector<1x64xf32>,
    %190 = arith.mulf %95, %183 : vector<16x64xf32>
    %191 = arith.addf %190, %136 : vector<16x64xf32>
    %192 = vector.extract_strided_slice %72 {offsets = [0, 4], sizes = [16, 1], strides = [1, 1]} : vector<16x9xf32> to vector<16x1xf32>
    %193 = vector.broadcast %192 : vector<16x1xf32> to vector<16x64xf32>
    %194 = arith.mulf %191, %193 : vector<16x64xf32>
    %cst_59 = arith.constant dense<0.000000e+00> : vector<64xf32>
    %195 = vector.multi_reduction <add>, %194, %cst_59 [0] : vector<16x64xf32> to vector<64xf32>
    %196 = vector.shape_cast %195 : vector<64xf32> to vector<1x64xf32>
    %c4 = arith.constant 4 : index
    %c0_60 = arith.constant 0 : index
    %197 = vector.load %arg21[%c4, %c0_60] : memref<9x64xf32, #tpu.memory_space<vmem>>, vector<1x64xf32>
    tpu.vector_store %arg21[%c4, %c0_60], %196 {strides = array<i32>} : memref<9x64xf32, #tpu.memory_space<vmem>>, vector<1x64xf32>,
    %198 = arith.mulf %99, %191 : vector<16x64xf32>
    %199 = arith.addf %198, %141 : vector<16x64xf32>
    %200 = vector.extract_strided_slice %72 {offsets = [0, 5], sizes = [16, 1], strides = [1, 1]} : vector<16x9xf32> to vector<16x1xf32>
    %201 = vector.broadcast %200 : vector<16x1xf32> to vector<16x64xf32>
    %202 = arith.mulf %199, %201 : vector<16x64xf32>
    %cst_61 = arith.constant dense<0.000000e+00> : vector<64xf32>
    %203 = vector.multi_reduction <add>, %202, %cst_61 [0] : vector<16x64xf32> to vector<64xf32>
    %204 = vector.shape_cast %203 : vector<64xf32> to vector<1x64xf32>
    %c5 = arith.constant 5 : index
    %c0_62 = arith.constant 0 : index
    %205 = vector.load %arg21[%c5, %c0_62] : memref<9x64xf32, #tpu.memory_space<vmem>>, vector<1x64xf32>
    tpu.vector_store %arg21[%c5, %c0_62], %204 {strides = array<i32>} : memref<9x64xf32, #tpu.memory_space<vmem>>, vector<1x64xf32>,
    %206 = arith.mulf %103, %199 : vector<16x64xf32>
    %207 = arith.addf %206, %146 : vector<16x64xf32>
    %208 = vector.extract_strided_slice %72 {offsets = [0, 6], sizes = [16, 1], strides = [1, 1]} : vector<16x9xf32> to vector<16x1xf32>
    %209 = vector.broadcast %208 : vector<16x1xf32> to vector<16x64xf32>
    %210 = arith.mulf %207, %209 : vector<16x64xf32>
    %cst_63 = arith.constant dense<0.000000e+00> : vector<64xf32>
    %211 = vector.multi_reduction <add>, %210, %cst_63 [0] : vector<16x64xf32> to vector<64xf32>
    %212 = vector.shape_cast %211 : vector<64xf32> to vector<1x64xf32>
    %c6 = arith.constant 6 : index
    %c0_64 = arith.constant 0 : index
    %213 = vector.load %arg21[%c6, %c0_64] : memref<9x64xf32, #tpu.memory_space<vmem>>, vector<1x64xf32>
    tpu.vector_store %arg21[%c6, %c0_64], %212 {strides = array<i32>} : memref<9x64xf32, #tpu.memory_space<vmem>>, vector<1x64xf32>,
    %214 = arith.mulf %107, %207 : vector<16x64xf32>
    %215 = arith.addf %214, %151 : vector<16x64xf32>
    %216 = vector.extract_strided_slice %72 {offsets = [0, 7], sizes = [16, 1], strides = [1, 1]} : vector<16x9xf32> to vector<16x1xf32>
    %217 = vector.broadcast %216 : vector<16x1xf32> to vector<16x64xf32>
    %218 = arith.mulf %215, %217 : vector<16x64xf32>
    %cst_65 = arith.constant dense<0.000000e+00> : vector<64xf32>
    %219 = vector.multi_reduction <add>, %218, %cst_65 [0] : vector<16x64xf32> to vector<64xf32>
    %220 = vector.shape_cast %219 : vector<64xf32> to vector<1x64xf32>
    %c7 = arith.constant 7 : index
    %c0_66 = arith.constant 0 : index
    %221 = vector.load %arg21[%c7, %c0_66] : memref<9x64xf32, #tpu.memory_space<vmem>>, vector<1x64xf32>
    tpu.vector_store %arg21[%c7, %c0_66], %220 {strides = array<i32>} : memref<9x64xf32, #tpu.memory_space<vmem>>, vector<1x64xf32>,
    %222 = arith.mulf %111, %215 : vector<16x64xf32>
    %223 = arith.addf %222, %156 : vector<16x64xf32>
    %224 = vector.extract_strided_slice %72 {offsets = [0, 8], sizes = [16, 1], strides = [1, 1]} : vector<16x9xf32> to vector<16x1xf32>
    %225 = vector.broadcast %224 : vector<16x1xf32> to vector<16x64xf32>
    %226 = arith.mulf %223, %225 : vector<16x64xf32>
    %cst_67 = arith.constant dense<0.000000e+00> : vector<64xf32>
    %227 = vector.multi_reduction <add>, %226, %cst_67 [0] : vector<16x64xf32> to vector<64xf32>
    %228 = vector.shape_cast %227 : vector<64xf32> to vector<1x64xf32>
    %c8 = arith.constant 8 : index
    %c0_68 = arith.constant 0 : index
    %229 = vector.load %arg21[%c8, %c0_68] : memref<9x64xf32, #tpu.memory_space<vmem>>, vector<1x64xf32>
    tpu.vector_store %arg21[%c8, %c0_68], %228 {strides = array<i32>} : memref<9x64xf32, #tpu.memory_space<vmem>>, vector<1x64xf32>,
    %c0_69 = arith.constant 0 : index
    %c0_70 = arith.constant 0 : index
    %230 = vector.load %arg21[%c0_69, %c0_70] : memref<9x64xf32, #tpu.memory_space<vmem>>, vector<9x64xf32>
    %c0_71 = arith.constant 0 : index
    %c0_72 = arith.constant 0 : index
    %c0_73 = arith.constant 0 : index
    %231 = vector.load %arg15[%c0_71, %c0_72, %c0_73] : memref<2x1x64xf32, #tpu.memory_space<vmem>>, vector<1x1x64xf32>
    %232 = vector.shape_cast %231 : vector<1x1x64xf32> to vector<1x64xf32>
    %233 = vector.broadcast %232 : vector<1x64xf32> to vector<9x64xf32>
    %234 = arith.mulf %233, %49 : vector<9x64xf32>
    %235 = arith.addf %230, %234 : vector<9x64xf32>
    %236 = arith.negf %14 : vector<9x64xf32>
    %237 = math.exp %236 : vector<9x64xf32>
    %cst_74 = arith.constant 1.000000e+00 : f32
    %238 = vector.broadcast %cst_74 : f32 to vector<9x64xf32>
    %239 = arith.addf %238, %237 : vector<9x64xf32>
    %240 = arith.divf %238, %239 : vector<9x64xf32>
    %241 = arith.mulf %14, %240 : vector<9x64xf32>
    %242 = arith.mulf %235, %241 : vector<9x64xf32>
    %c0_75 = arith.constant 0 : index
    %c0_76 = arith.constant 0 : index
    %c0_77 = arith.constant 0 : index
    %243 = vector.load %arg16[%c0_75, %c0_76, %c0_77] : memref<2x64x32xf32, #tpu.memory_space<vmem>>, vector<1x64x32xf32>
    %244 = vector.shape_cast %243 : vector<1x64x32xf32> to vector<64x32xf32>
    %cst_78 = arith.constant dense<0.000000e+00> : vector<9x32xf32>
    %245 = tpu.matmul %242, %244, %cst_78 {dimension_numbers = #tpu.dot_dimension_numbers<[1], [0], [0], [1], [0, 0, 1, 1], [], []>} : vector<9x64xf32>, vector<64x32xf32>, vector<9x32xf32> -> vector<9x32xf32>
    %246 = arith.mulf %245, %245 : vector<9x32xf32>
    %cst_79 = arith.constant dense<0.000000e+00> : vector<9xf32>
    %247 = vector.multi_reduction <add>, %246, %cst_79 [1] : vector<9x32xf32> to vector<9xf32>
    %248 = vector.shape_cast %247 : vector<9xf32> to vector<9x1xf32>
    %cst_80 = arith.constant 3.200000e+01 : f32
    %249 = vector.broadcast %cst_80 : f32 to vector<9x1xf32>
    %250 = arith.divf %248, %249 : vector<9x1xf32>
    %cst_81 = arith.constant 1.1920929E-7 : f32
    %251 = vector.broadcast %cst_81 : f32 to vector<9x1xf32>
    %252 = arith.addf %250, %251 : vector<9x1xf32>
    %253 = math.rsqrt %252 : vector<9x1xf32>
    %254 = vector.broadcast %253 : vector<9x1xf32> to vector<9x32xf32>
    %255 = arith.mulf %245, %254 : vector<9x32xf32>
    %c0_82 = arith.constant 0 : index
    %c0_83 = arith.constant 0 : index
    %c0_84 = arith.constant 0 : index
    %256 = vector.load %arg17[%c0_82, %c0_83, %c0_84] : memref<2x1x32xf32, #tpu.memory_space<vmem>>, vector<1x1x32xf32>
    %257 = vector.shape_cast %256 : vector<1x1x32xf32> to vector<1x32xf32>
    %258 = vector.broadcast %257 : vector<1x32xf32> to vector<9x32xf32>
    %259 = arith.mulf %255, %258 : vector<9x32xf32>
    %c1_85 = arith.constant 1 : index
    %c0_86 = arith.constant 0 : index
    %c0_87 = arith.constant 0 : index
    %260 = vector.load %arg5[%c1_85, %c0_86, %c0_87] : memref<2x32x64xf32, #tpu.memory_space<vmem>>, vector<1x32x64xf32>
    %261 = vector.shape_cast %260 : vector<1x32x64xf32> to vector<32x64xf32>
    %cst_88 = arith.constant dense<0.000000e+00> : vector<9x64xf32>
    %262 = tpu.matmul %259, %261, %cst_88 {dimension_numbers = #tpu.dot_dimension_numbers<[1], [0], [0], [1], [0, 0, 1, 1], [], []>} : vector<9x32xf32>, vector<32x64xf32>, vector<9x64xf32> -> vector<9x64xf32>
    %c1_89 = arith.constant 1 : index
    %c0_90 = arith.constant 0 : index
    %c0_91 = arith.constant 0 : index
    %263 = vector.load %arg6[%c1_89, %c0_90, %c0_91] : memref<2x32x64xf32, #tpu.memory_space<vmem>>, vector<1x32x64xf32>
    %264 = vector.shape_cast %263 : vector<1x32x64xf32> to vector<32x64xf32>
    %cst_92 = arith.constant dense<0.000000e+00> : vector<9x64xf32>
    %265 = tpu.matmul %259, %264, %cst_92 {dimension_numbers = #tpu.dot_dimension_numbers<[1], [0], [0], [1], [0, 0, 1, 1], [], []>} : vector<9x32xf32>, vector<32x64xf32>, vector<9x64xf32> -> vector<9x64xf32>
    %c1_93 = arith.constant 1 : index
    %c0_94 = arith.constant 0 : index
    %c0_95 = arith.constant 0 : index
    %266 = vector.load %arg7[%c1_93, %c0_94, %c0_95] : memref<2x4x64xf32, #tpu.memory_space<vmem>>, vector<1x4x64xf32>
    %267 = vector.shape_cast %266 : vector<1x4x64xf32> to vector<4x64xf32>
    %cst_96 = arith.constant 0.000000e+00 : f32
    %268 = vector.broadcast %cst_96 : f32 to vector<3x64xf32>
    %269 = tpu.concatenate %268, %262 in 0 : vector<3x64xf32>, vector<9x64xf32> -> vector<12x64xf32>
    %cst_97 = arith.constant 0.000000e+00 : f32
    %270 = vector.broadcast %cst_97 : f32 to vector<9x64xf32>
    %271 = vector.extract_strided_slice %269 {offsets = [0, 0], sizes = [9, 64], strides = [1, 1]} : vector<12x64xf32> to vector<9x64xf32>
    %272 = vector.extract_strided_slice %267 {offsets = [0, 0], sizes = [1, 64], strides = [1, 1]} : vector<4x64xf32> to vector<1x64xf32>
    %273 = vector.broadcast %272 : vector<1x64xf32> to vector<9x64xf32>
    %274 = arith.mulf %271, %273 : vector<9x64xf32>
    %275 = arith.addf %270, %274 : vector<9x64xf32>
    %276 = vector.extract_strided_slice %269 {offsets = [1, 0], sizes = [9, 64], strides = [1, 1]} : vector<12x64xf32> to vector<9x64xf32>
    %277 = vector.extract_strided_slice %267 {offsets = [1, 0], sizes = [1, 64], strides = [1, 1]} : vector<4x64xf32> to vector<1x64xf32>
    %278 = vector.broadcast %277 : vector<1x64xf32> to vector<9x64xf32>
    %279 = arith.mulf %276, %278 : vector<9x64xf32>
    %280 = arith.addf %275, %279 : vector<9x64xf32>
    %281 = vector.extract_strided_slice %269 {offsets = [2, 0], sizes = [9, 64], strides = [1, 1]} : vector<12x64xf32> to vector<9x64xf32>
    %282 = vector.extract_strided_slice %267 {offsets = [2, 0], sizes = [1, 64], strides = [1, 1]} : vector<4x64xf32> to vector<1x64xf32>
    %283 = vector.broadcast %282 : vector<1x64xf32> to vector<9x64xf32>
    %284 = arith.mulf %281, %283 : vector<9x64xf32>
    %285 = arith.addf %280, %284 : vector<9x64xf32>
    %286 = vector.extract_strided_slice %269 {offsets = [3, 0], sizes = [9, 64], strides = [1, 1]} : vector<12x64xf32> to vector<9x64xf32>
    %287 = vector.extract_strided_slice %267 {offsets = [3, 0], sizes = [1, 64], strides = [1, 1]} : vector<4x64xf32> to vector<1x64xf32>
    %288 = vector.broadcast %287 : vector<1x64xf32> to vector<9x64xf32>
    %289 = arith.mulf %286, %288 : vector<9x64xf32>
    %290 = arith.addf %285, %289 : vector<9x64xf32>
    %c1_98 = arith.constant 1 : index
    %c0_99 = arith.constant 0 : index
    %c0_100 = arith.constant 0 : index
    %291 = vector.load %arg8[%c1_98, %c0_99, %c0_100] : memref<2x1x64xf32, #tpu.memory_space<vmem>>, vector<1x1x64xf32>
    %292 = vector.shape_cast %291 : vector<1x1x64xf32> to vector<1x64xf32>
    %293 = vector.broadcast %292 : vector<1x64xf32> to vector<9x64xf32>
    %294 = arith.addf %290, %293 : vector<9x64xf32>
    %295 = arith.negf %294 : vector<9x64xf32>
    %296 = math.exp %295 : vector<9x64xf32>
    %cst_101 = arith.constant 1.000000e+00 : f32
    %297 = vector.broadcast %cst_101 : f32 to vector<9x64xf32>
    %298 = arith.addf %297, %296 : vector<9x64xf32>
    %299 = arith.divf %297, %298 : vector<9x64xf32>
    %300 = arith.mulf %294, %299 : vector<9x64xf32>
    %c1_102 = arith.constant 1 : index
    %c0_103 = arith.constant 0 : index
    %c0_104 = arith.constant 0 : index
    %301 = vector.load %arg9[%c1_102, %c0_103, %c0_104] : memref<2x64x2xf32, #tpu.memory_space<vmem>>, vector<1x64x2xf32>
    %302 = vector.shape_cast %301 : vector<1x64x2xf32> to vector<64x2xf32>
    %cst_105 = arith.constant dense<0.000000e+00> : vector<9x2xf32>
    %303 = tpu.matmul %300, %302, %cst_105 {dimension_numbers = #tpu.dot_dimension_numbers<[1], [0], [0], [1], [0, 0, 1, 1], [], []>} : vector<9x64xf32>, vector<64x2xf32>, vector<9x2xf32> -> vector<9x2xf32>
    %c1_106 = arith.constant 1 : index
    %c0_107 = arith.constant 0 : index
    %c0_108 = arith.constant 0 : index
    %304 = vector.load %arg12[%c1_106, %c0_107, %c0_108] : memref<2x2x64xf32, #tpu.memory_space<vmem>>, vector<1x2x64xf32>
    %305 = vector.shape_cast %304 : vector<1x2x64xf32> to vector<2x64xf32>
    %cst_109 = arith.constant dense<0.000000e+00> : vector<9x64xf32>
    %306 = tpu.matmul %303, %305, %cst_109 {dimension_numbers = #tpu.dot_dimension_numbers<[1], [0], [0], [1], [0, 0, 1, 1], [], []>} : vector<9x2xf32>, vector<2x64xf32>, vector<9x64xf32> -> vector<9x64xf32>
    %c1_110 = arith.constant 1 : index
    %c0_111 = arith.constant 0 : index
    %c0_112 = arith.constant 0 : index
    %307 = vector.load %arg13[%c1_110, %c0_111, %c0_112] : memref<2x1x64xf32, #tpu.memory_space<vmem>>, vector<1x1x64xf32>
    %308 = vector.shape_cast %307 : vector<1x1x64xf32> to vector<1x64xf32>
    %309 = vector.broadcast %308 : vector<1x64xf32> to vector<9x64xf32>
    %310 = arith.addf %306, %309 : vector<9x64xf32>
    %cst_113 = arith.constant 2.000000e+01 : f32
    %311 = vector.broadcast %cst_113 : f32 to vector<9x64xf32>
    %312 = arith.cmpf ogt, %310, %311 : vector<9x64xf32>
    %cst_114 = arith.constant 2.000000e+01 : f32
    %313 = vector.broadcast %cst_114 : f32 to vector<9x64xf32>
    %314 = arith.minimumf %310, %313 : vector<9x64xf32>
    %315 = math.exp %314 : vector<9x64xf32>
    %316 = math.log1p %315 : vector<9x64xf32>
    %317 = arith.select %312, %310, %316 : vector<9x64xi1>, vector<9x64xf32>
    %c1_115 = arith.constant 1 : index
    %c0_116 = arith.constant 0 : index
    %c0_117 = arith.constant 0 : index
    %318 = vector.load %arg10[%c1_115, %c0_116, %c0_117] : memref<2x16x64xf32, #tpu.memory_space<vmem>>, vector<1x16x64xf32>
    %319 = vector.shape_cast %318 : vector<1x16x64xf32> to vector<16x64xf32>
    %cst_118 = arith.constant dense<0.000000e+00> : vector<16x9xf32>
    %320 = tpu.matmul %319, %300, %cst_118 {dimension_numbers = #tpu.dot_dimension_numbers<[1], [1], [0], [0], [0, 0, 1, 0], [], []>} : vector<16x64xf32>, vector<9x64xf32>, vector<16x9xf32> -> vector<16x9xf32>
    %c1_119 = arith.constant 1 : index
    %c0_120 = arith.constant 0 : index
    %c0_121 = arith.constant 0 : index
    %321 = vector.load %arg11[%c1_119, %c0_120, %c0_121] : memref<2x16x64xf32, #tpu.memory_space<vmem>>, vector<1x16x64xf32>
    %322 = vector.shape_cast %321 : vector<1x16x64xf32> to vector<16x64xf32>
    %cst_122 = arith.constant dense<0.000000e+00> : vector<16x9xf32>
    %323 = tpu.matmul %322, %300, %cst_122 {dimension_numbers = #tpu.dot_dimension_numbers<[1], [1], [0], [0], [0, 0, 1, 0], [], []>} : vector<16x64xf32>, vector<9x64xf32>, vector<16x9xf32> -> vector<16x9xf32>
    %c1_123 = arith.constant 1 : index
    %c0_124 = arith.constant 0 : index
    %c0_125 = arith.constant 0 : index
    %324 = vector.load %arg14[%c1_123, %c0_124, %c0_125] : memref<2x16x64xf32, #tpu.memory_space<vmem>>, vector<1x16x64xf32>
    %325 = vector.shape_cast %324 : vector<1x16x64xf32> to vector<16x64xf32>
    %326 = arith.mulf %317, %300 : vector<9x64xf32>
    %327 = vector.extract_strided_slice %317 {offsets = [0, 0], sizes = [1, 64], strides = [1, 1]} : vector<9x64xf32> to vector<1x64xf32>
    %328 = vector.broadcast %327 : vector<1x64xf32> to vector<16x64xf32>
    %329 = arith.mulf %328, %325 : vector<16x64xf32>
    %330 = math.exp %329 : vector<16x64xf32>
    %331 = vector.extract_strided_slice %317 {offsets = [1, 0], sizes = [1, 64], strides = [1, 1]} : vector<9x64xf32> to vector<1x64xf32>
    %332 = vector.broadcast %331 : vector<1x64xf32> to vector<16x64xf32>
    %333 = arith.mulf %332, %325 : vector<16x64xf32>
    %334 = math.exp %333 : vector<16x64xf32>
    %335 = vector.extract_strided_slice %317 {offsets = [2, 0], sizes = [1, 64], strides = [1, 1]} : vector<9x64xf32> to vector<1x64xf32>
    %336 = vector.broadcast %335 : vector<1x64xf32> to vector<16x64xf32>
    %337 = arith.mulf %336, %325 : vector<16x64xf32>
    %338 = math.exp %337 : vector<16x64xf32>
    %339 = vector.extract_strided_slice %317 {offsets = [3, 0], sizes = [1, 64], strides = [1, 1]} : vector<9x64xf32> to vector<1x64xf32>
    %340 = vector.broadcast %339 : vector<1x64xf32> to vector<16x64xf32>
    %341 = arith.mulf %340, %325 : vector<16x64xf32>
    %342 = math.exp %341 : vector<16x64xf32>
    %343 = vector.extract_strided_slice %317 {offsets = [4, 0], sizes = [1, 64], strides = [1, 1]} : vector<9x64xf32> to vector<1x64xf32>
    %344 = vector.broadcast %343 : vector<1x64xf32> to vector<16x64xf32>
    %345 = arith.mulf %344, %325 : vector<16x64xf32>
    %346 = math.exp %345 : vector<16x64xf32>
    %347 = vector.extract_strided_slice %317 {offsets = [5, 0], sizes = [1, 64], strides = [1, 1]} : vector<9x64xf32> to vector<1x64xf32>
    %348 = vector.broadcast %347 : vector<1x64xf32> to vector<16x64xf32>
    %349 = arith.mulf %348, %325 : vector<16x64xf32>
    %350 = math.exp %349 : vector<16x64xf32>
    %351 = vector.extract_strided_slice %317 {offsets = [6, 0], sizes = [1, 64], strides = [1, 1]} : vector<9x64xf32> to vector<1x64xf32>
    %352 = vector.broadcast %351 : vector<1x64xf32> to vector<16x64xf32>
    %353 = arith.mulf %352, %325 : vector<16x64xf32>
    %354 = math.exp %353 : vector<16x64xf32>
    %355 = vector.extract_strided_slice %317 {offsets = [7, 0], sizes = [1, 64], strides = [1, 1]} : vector<9x64xf32> to vector<1x64xf32>
    %356 = vector.broadcast %355 : vector<1x64xf32> to vector<16x64xf32>
    %357 = arith.mulf %356, %325 : vector<16x64xf32>
    %358 = math.exp %357 : vector<16x64xf32>
    %359 = vector.extract_strided_slice %317 {offsets = [8, 0], sizes = [1, 64], strides = [1, 1]} : vector<9x64xf32> to vector<1x64xf32>
    %360 = vector.broadcast %359 : vector<1x64xf32> to vector<16x64xf32>
    %361 = arith.mulf %360, %325 : vector<16x64xf32>
    %362 = math.exp %361 : vector<16x64xf32>
    %363 = vector.extract_strided_slice %326 {offsets = [0, 0], sizes = [1, 64], strides = [1, 1]} : vector<9x64xf32> to vector<1x64xf32>
    %364 = vector.extract_strided_slice %320 {offsets = [0, 0], sizes = [16, 1], strides = [1, 1]} : vector<16x9xf32> to vector<16x1xf32>
    %365 = vector.broadcast %363 : vector<1x64xf32> to vector<16x64xf32>
    %366 = vector.broadcast %364 : vector<16x1xf32> to vector<16x64xf32>
    %367 = arith.mulf %365, %366 : vector<16x64xf32>
    %368 = vector.extract_strided_slice %326 {offsets = [1, 0], sizes = [1, 64], strides = [1, 1]} : vector<9x64xf32> to vector<1x64xf32>
    %369 = vector.extract_strided_slice %320 {offsets = [0, 1], sizes = [16, 1], strides = [1, 1]} : vector<16x9xf32> to vector<16x1xf32>
    %370 = vector.broadcast %368 : vector<1x64xf32> to vector<16x64xf32>
    %371 = vector.broadcast %369 : vector<16x1xf32> to vector<16x64xf32>
    %372 = arith.mulf %370, %371 : vector<16x64xf32>
    %373 = vector.extract_strided_slice %326 {offsets = [2, 0], sizes = [1, 64], strides = [1, 1]} : vector<9x64xf32> to vector<1x64xf32>
    %374 = vector.extract_strided_slice %320 {offsets = [0, 2], sizes = [16, 1], strides = [1, 1]} : vector<16x9xf32> to vector<16x1xf32>
    %375 = vector.broadcast %373 : vector<1x64xf32> to vector<16x64xf32>
    %376 = vector.broadcast %374 : vector<16x1xf32> to vector<16x64xf32>
    %377 = arith.mulf %375, %376 : vector<16x64xf32>
    %378 = vector.extract_strided_slice %326 {offsets = [3, 0], sizes = [1, 64], strides = [1, 1]} : vector<9x64xf32> to vector<1x64xf32>
    %379 = vector.extract_strided_slice %320 {offsets = [0, 3], sizes = [16, 1], strides = [1, 1]} : vector<16x9xf32> to vector<16x1xf32>
    %380 = vector.broadcast %378 : vector<1x64xf32> to vector<16x64xf32>
    %381 = vector.broadcast %379 : vector<16x1xf32> to vector<16x64xf32>
    %382 = arith.mulf %380, %381 : vector<16x64xf32>
    %383 = vector.extract_strided_slice %326 {offsets = [4, 0], sizes = [1, 64], strides = [1, 1]} : vector<9x64xf32> to vector<1x64xf32>
    %384 = vector.extract_strided_slice %320 {offsets = [0, 4], sizes = [16, 1], strides = [1, 1]} : vector<16x9xf32> to vector<16x1xf32>
    %385 = vector.broadcast %383 : vector<1x64xf32> to vector<16x64xf32>
    %386 = vector.broadcast %384 : vector<16x1xf32> to vector<16x64xf32>
    %387 = arith.mulf %385, %386 : vector<16x64xf32>
    %388 = vector.extract_strided_slice %326 {offsets = [5, 0], sizes = [1, 64], strides = [1, 1]} : vector<9x64xf32> to vector<1x64xf32>
    %389 = vector.extract_strided_slice %320 {offsets = [0, 5], sizes = [16, 1], strides = [1, 1]} : vector<16x9xf32> to vector<16x1xf32>
    %390 = vector.broadcast %388 : vector<1x64xf32> to vector<16x64xf32>
    %391 = vector.broadcast %389 : vector<16x1xf32> to vector<16x64xf32>
    %392 = arith.mulf %390, %391 : vector<16x64xf32>
    %393 = vector.extract_strided_slice %326 {offsets = [6, 0], sizes = [1, 64], strides = [1, 1]} : vector<9x64xf32> to vector<1x64xf32>
    %394 = vector.extract_strided_slice %320 {offsets = [0, 6], sizes = [16, 1], strides = [1, 1]} : vector<16x9xf32> to vector<16x1xf32>
    %395 = vector.broadcast %393 : vector<1x64xf32> to vector<16x64xf32>
    %396 = vector.broadcast %394 : vector<16x1xf32> to vector<16x64xf32>
    %397 = arith.mulf %395, %396 : vector<16x64xf32>
    %398 = vector.extract_strided_slice %326 {offsets = [7, 0], sizes = [1, 64], strides = [1, 1]} : vector<9x64xf32> to vector<1x64xf32>
    %399 = vector.extract_strided_slice %320 {offsets = [0, 7], sizes = [16, 1], strides = [1, 1]} : vector<16x9xf32> to vector<16x1xf32>
    %400 = vector.broadcast %398 : vector<1x64xf32> to vector<16x64xf32>
    %401 = vector.broadcast %399 : vector<16x1xf32> to vector<16x64xf32>
    %402 = arith.mulf %400, %401 : vector<16x64xf32>
    %403 = vector.extract_strided_slice %326 {offsets = [8, 0], sizes = [1, 64], strides = [1, 1]} : vector<9x64xf32> to vector<1x64xf32>
    %404 = vector.extract_strided_slice %320 {offsets = [0, 8], sizes = [16, 1], strides = [1, 1]} : vector<16x9xf32> to vector<16x1xf32>
    %405 = vector.broadcast %403 : vector<1x64xf32> to vector<16x64xf32>
    %406 = vector.broadcast %404 : vector<16x1xf32> to vector<16x64xf32>
    %407 = arith.mulf %405, %406 : vector<16x64xf32>
    %cst_126 = arith.constant 0.000000e+00 : f32
    %408 = vector.broadcast %cst_126 : f32 to vector<16x64xf32>
    %409 = arith.mulf %330, %408 : vector<16x64xf32>
    %410 = arith.addf %409, %367 : vector<16x64xf32>
    %411 = vector.extract_strided_slice %323 {offsets = [0, 0], sizes = [16, 1], strides = [1, 1]} : vector<16x9xf32> to vector<16x1xf32>
    %412 = vector.broadcast %411 : vector<16x1xf32> to vector<16x64xf32>
    %413 = arith.mulf %410, %412 : vector<16x64xf32>
    %cst_127 = arith.constant dense<0.000000e+00> : vector<64xf32>
    %414 = vector.multi_reduction <add>, %413, %cst_127 [0] : vector<16x64xf32> to vector<64xf32>
    %415 = vector.shape_cast %414 : vector<64xf32> to vector<1x64xf32>
    %c0_128 = arith.constant 0 : index
    %c0_129 = arith.constant 0 : index
    %416 = vector.load %arg21[%c0_128, %c0_129] : memref<9x64xf32, #tpu.memory_space<vmem>>, vector<1x64xf32>
    tpu.vector_store %arg21[%c0_128, %c0_129], %415 {strides = array<i32>} : memref<9x64xf32, #tpu.memory_space<vmem>>, vector<1x64xf32>,
    %417 = arith.mulf %334, %410 : vector<16x64xf32>
    %418 = arith.addf %417, %372 : vector<16x64xf32>
    %419 = vector.extract_strided_slice %323 {offsets = [0, 1], sizes = [16, 1], strides = [1, 1]} : vector<16x9xf32> to vector<16x1xf32>
    %420 = vector.broadcast %419 : vector<16x1xf32> to vector<16x64xf32>
    %421 = arith.mulf %418, %420 : vector<16x64xf32>
    %cst_130 = arith.constant dense<0.000000e+00> : vector<64xf32>
    %422 = vector.multi_reduction <add>, %421, %cst_130 [0] : vector<16x64xf32> to vector<64xf32>
    %423 = vector.shape_cast %422 : vector<64xf32> to vector<1x64xf32>
    %c1_131 = arith.constant 1 : index
    %c0_132 = arith.constant 0 : index
    %424 = vector.load %arg21[%c1_131, %c0_132] : memref<9x64xf32, #tpu.memory_space<vmem>>, vector<1x64xf32>
    tpu.vector_store %arg21[%c1_131, %c0_132], %423 {strides = array<i32>} : memref<9x64xf32, #tpu.memory_space<vmem>>, vector<1x64xf32>,
    %425 = arith.mulf %338, %418 : vector<16x64xf32>
    %426 = arith.addf %425, %377 : vector<16x64xf32>
    %427 = vector.extract_strided_slice %323 {offsets = [0, 2], sizes = [16, 1], strides = [1, 1]} : vector<16x9xf32> to vector<16x1xf32>
    %428 = vector.broadcast %427 : vector<16x1xf32> to vector<16x64xf32>
    %429 = arith.mulf %426, %428 : vector<16x64xf32>
    %cst_133 = arith.constant dense<0.000000e+00> : vector<64xf32>
    %430 = vector.multi_reduction <add>, %429, %cst_133 [0] : vector<16x64xf32> to vector<64xf32>
    %431 = vector.shape_cast %430 : vector<64xf32> to vector<1x64xf32>
    %c2_134 = arith.constant 2 : index
    %c0_135 = arith.constant 0 : index
    %432 = vector.load %arg21[%c2_134, %c0_135] : memref<9x64xf32, #tpu.memory_space<vmem>>, vector<1x64xf32>
    tpu.vector_store %arg21[%c2_134, %c0_135], %431 {strides = array<i32>} : memref<9x64xf32, #tpu.memory_space<vmem>>, vector<1x64xf32>,
    %433 = arith.mulf %342, %426 : vector<16x64xf32>
    %434 = arith.addf %433, %382 : vector<16x64xf32>
    %435 = vector.extract_strided_slice %323 {offsets = [0, 3], sizes = [16, 1], strides = [1, 1]} : vector<16x9xf32> to vector<16x1xf32>
    %436 = vector.broadcast %435 : vector<16x1xf32> to vector<16x64xf32>
    %437 = arith.mulf %434, %436 : vector<16x64xf32>
    %cst_136 = arith.constant dense<0.000000e+00> : vector<64xf32>
    %438 = vector.multi_reduction <add>, %437, %cst_136 [0] : vector<16x64xf32> to vector<64xf32>
    %439 = vector.shape_cast %438 : vector<64xf32> to vector<1x64xf32>
    %c3_137 = arith.constant 3 : index
    %c0_138 = arith.constant 0 : index
    %440 = vector.load %arg21[%c3_137, %c0_138] : memref<9x64xf32, #tpu.memory_space<vmem>>, vector<1x64xf32>
    tpu.vector_store %arg21[%c3_137, %c0_138], %439 {strides = array<i32>} : memref<9x64xf32, #tpu.memory_space<vmem>>, vector<1x64xf32>,
    %441 = arith.mulf %346, %434 : vector<16x64xf32>
    %442 = arith.addf %441, %387 : vector<16x64xf32>
    %443 = vector.extract_strided_slice %323 {offsets = [0, 4], sizes = [16, 1], strides = [1, 1]} : vector<16x9xf32> to vector<16x1xf32>
    %444 = vector.broadcast %443 : vector<16x1xf32> to vector<16x64xf32>
    %445 = arith.mulf %442, %444 : vector<16x64xf32>
    %cst_139 = arith.constant dense<0.000000e+00> : vector<64xf32>
    %446 = vector.multi_reduction <add>, %445, %cst_139 [0] : vector<16x64xf32> to vector<64xf32>
    %447 = vector.shape_cast %446 : vector<64xf32> to vector<1x64xf32>
    %c4_140 = arith.constant 4 : index
    %c0_141 = arith.constant 0 : index
    %448 = vector.load %arg21[%c4_140, %c0_141] : memref<9x64xf32, #tpu.memory_space<vmem>>, vector<1x64xf32>
    tpu.vector_store %arg21[%c4_140, %c0_141], %447 {strides = array<i32>} : memref<9x64xf32, #tpu.memory_space<vmem>>, vector<1x64xf32>,
    %449 = arith.mulf %350, %442 : vector<16x64xf32>
    %450 = arith.addf %449, %392 : vector<16x64xf32>
    %451 = vector.extract_strided_slice %323 {offsets = [0, 5], sizes = [16, 1], strides = [1, 1]} : vector<16x9xf32> to vector<16x1xf32>
    %452 = vector.broadcast %451 : vector<16x1xf32> to vector<16x64xf32>
    %453 = arith.mulf %450, %452 : vector<16x64xf32>
    %cst_142 = arith.constant dense<0.000000e+00> : vector<64xf32>
    %454 = vector.multi_reduction <add>, %453, %cst_142 [0] : vector<16x64xf32> to vector<64xf32>
    %455 = vector.shape_cast %454 : vector<64xf32> to vector<1x64xf32>
    %c5_143 = arith.constant 5 : index
    %c0_144 = arith.constant 0 : index
    %456 = vector.load %arg21[%c5_143, %c0_144] : memref<9x64xf32, #tpu.memory_space<vmem>>, vector<1x64xf32>
    tpu.vector_store %arg21[%c5_143, %c0_144], %455 {strides = array<i32>} : memref<9x64xf32, #tpu.memory_space<vmem>>, vector<1x64xf32>,
    %457 = arith.mulf %354, %450 : vector<16x64xf32>
    %458 = arith.addf %457, %397 : vector<16x64xf32>
    %459 = vector.extract_strided_slice %323 {offsets = [0, 6], sizes = [16, 1], strides = [1, 1]} : vector<16x9xf32> to vector<16x1xf32>
    %460 = vector.broadcast %459 : vector<16x1xf32> to vector<16x64xf32>
    %461 = arith.mulf %458, %460 : vector<16x64xf32>
    %cst_145 = arith.constant dense<0.000000e+00> : vector<64xf32>
    %462 = vector.multi_reduction <add>, %461, %cst_145 [0] : vector<16x64xf32> to vector<64xf32>
    %463 = vector.shape_cast %462 : vector<64xf32> to vector<1x64xf32>
    %c6_146 = arith.constant 6 : index
    %c0_147 = arith.constant 0 : index
    %464 = vector.load %arg21[%c6_146, %c0_147] : memref<9x64xf32, #tpu.memory_space<vmem>>, vector<1x64xf32>
    tpu.vector_store %arg21[%c6_146, %c0_147], %463 {strides = array<i32>} : memref<9x64xf32, #tpu.memory_space<vmem>>, vector<1x64xf32>,
    %465 = arith.mulf %358, %458 : vector<16x64xf32>
    %466 = arith.addf %465, %402 : vector<16x64xf32>
    %467 = vector.extract_strided_slice %323 {offsets = [0, 7], sizes = [16, 1], strides = [1, 1]} : vector<16x9xf32> to vector<16x1xf32>
    %468 = vector.broadcast %467 : vector<16x1xf32> to vector<16x64xf32>
    %469 = arith.mulf %466, %468 : vector<16x64xf32>
    %cst_148 = arith.constant dense<0.000000e+00> : vector<64xf32>
    %470 = vector.multi_reduction <add>, %469, %cst_148 [0] : vector<16x64xf32> to vector<64xf32>
    %471 = vector.shape_cast %470 : vector<64xf32> to vector<1x64xf32>
    %c7_149 = arith.constant 7 : index
    %c0_150 = arith.constant 0 : index
    %472 = vector.load %arg21[%c7_149, %c0_150] : memref<9x64xf32, #tpu.memory_space<vmem>>, vector<1x64xf32>
    tpu.vector_store %arg21[%c7_149, %c0_150], %471 {strides = array<i32>} : memref<9x64xf32, #tpu.memory_space<vmem>>, vector<1x64xf32>,
    %473 = arith.mulf %362, %466 : vector<16x64xf32>
    %474 = arith.addf %473, %407 : vector<16x64xf32>
    %475 = vector.extract_strided_slice %323 {offsets = [0, 8], sizes = [16, 1], strides = [1, 1]} : vector<16x9xf32> to vector<16x1xf32>
    %476 = vector.broadcast %475 : vector<16x1xf32> to vector<16x64xf32>
    %477 = arith.mulf %474, %476 : vector<16x64xf32>
    %cst_151 = arith.constant dense<0.000000e+00> : vector<64xf32>
    %478 = vector.multi_reduction <add>, %477, %cst_151 [0] : vector<16x64xf32> to vector<64xf32>
    %479 = vector.shape_cast %478 : vector<64xf32> to vector<1x64xf32>
    %c8_152 = arith.constant 8 : index
    %c0_153 = arith.constant 0 : index
    %480 = vector.load %arg21[%c8_152, %c0_153] : memref<9x64xf32, #tpu.memory_space<vmem>>, vector<1x64xf32>
    tpu.vector_store %arg21[%c8_152, %c0_153], %479 {strides = array<i32>} : memref<9x64xf32, #tpu.memory_space<vmem>>, vector<1x64xf32>,
    %c0_154 = arith.constant 0 : index
    %c0_155 = arith.constant 0 : index
    %481 = vector.load %arg21[%c0_154, %c0_155] : memref<9x64xf32, #tpu.memory_space<vmem>>, vector<9x64xf32>
    %c1_156 = arith.constant 1 : index
    %c0_157 = arith.constant 0 : index
    %c0_158 = arith.constant 0 : index
    %482 = vector.load %arg15[%c1_156, %c0_157, %c0_158] : memref<2x1x64xf32, #tpu.memory_space<vmem>>, vector<1x1x64xf32>
    %483 = vector.shape_cast %482 : vector<1x1x64xf32> to vector<1x64xf32>
    %484 = vector.broadcast %483 : vector<1x64xf32> to vector<9x64xf32>
    %485 = arith.mulf %484, %300 : vector<9x64xf32>
    %486 = arith.addf %481, %485 : vector<9x64xf32>
    %487 = arith.negf %265 : vector<9x64xf32>
    %488 = math.exp %487 : vector<9x64xf32>
    %cst_159 = arith.constant 1.000000e+00 : f32
    %489 = vector.broadcast %cst_159 : f32 to vector<9x64xf32>
    %490 = arith.addf %489, %488 : vector<9x64xf32>
    %491 = arith.divf %489, %490 : vector<9x64xf32>
    %492 = arith.mulf %265, %491 : vector<9x64xf32>
    %493 = arith.mulf %486, %492 : vector<9x64xf32>
    %c1_160 = arith.constant 1 : index
    %c0_161 = arith.constant 0 : index
    %c0_162 = arith.constant 0 : index
    %494 = vector.load %arg16[%c1_160, %c0_161, %c0_162] : memref<2x64x32xf32, #tpu.memory_space<vmem>>, vector<1x64x32xf32>
    %495 = vector.shape_cast %494 : vector<1x64x32xf32> to vector<64x32xf32>
    %cst_163 = arith.constant dense<0.000000e+00> : vector<9x32xf32>
    %496 = tpu.matmul %493, %495, %cst_163 {dimension_numbers = #tpu.dot_dimension_numbers<[1], [0], [0], [1], [0, 0, 1, 1], [], []>} : vector<9x64xf32>, vector<64x32xf32>, vector<9x32xf32> -> vector<9x32xf32>
    %497 = arith.mulf %496, %496 : vector<9x32xf32>
    %cst_164 = arith.constant dense<0.000000e+00> : vector<9xf32>
    %498 = vector.multi_reduction <add>, %497, %cst_164 [1] : vector<9x32xf32> to vector<9xf32>
    %499 = vector.shape_cast %498 : vector<9xf32> to vector<9x1xf32>
    %cst_165 = arith.constant 3.200000e+01 : f32
    %500 = vector.broadcast %cst_165 : f32 to vector<9x1xf32>
    %501 = arith.divf %499, %500 : vector<9x1xf32>
    %cst_166 = arith.constant 1.1920929E-7 : f32
    %502 = vector.broadcast %cst_166 : f32 to vector<9x1xf32>
    %503 = arith.addf %501, %502 : vector<9x1xf32>
    %504 = math.rsqrt %503 : vector<9x1xf32>
    %505 = vector.broadcast %504 : vector<9x1xf32> to vector<9x32xf32>
    %506 = arith.mulf %496, %505 : vector<9x32xf32>
    %c1_167 = arith.constant 1 : index
    %c0_168 = arith.constant 0 : index
    %c0_169 = arith.constant 0 : index
    %507 = vector.load %arg17[%c1_167, %c0_168, %c0_169] : memref<2x1x32xf32, #tpu.memory_space<vmem>>, vector<1x1x32xf32>
    %508 = vector.shape_cast %507 : vector<1x1x32xf32> to vector<1x32xf32>
    %509 = vector.broadcast %508 : vector<1x32xf32> to vector<9x32xf32>
    %510 = arith.mulf %506, %509 : vector<9x32xf32>
    %511 = vector.extract_strided_slice %510 {offsets = [8, 0], sizes = [1, 32], strides = [1, 1]} : vector<9x32xf32> to vector<1x32xf32>
    %c0_170 = arith.constant 0 : index
    %c0_171 = arith.constant 0 : index
    %512 = vector.load %arg18[%c0_170, %c0_171] : memref<32x10xf32, #tpu.memory_space<vmem>>, vector<32x10xf32>
    %cst_172 = arith.constant dense<0.000000e+00> : vector<1x10xf32>
    %513 = tpu.matmul %511, %512, %cst_172 {dimension_numbers = #tpu.dot_dimension_numbers<[1], [0], [0], [1], [0, 0, 1, 1], [], []>} : vector<1x32xf32>, vector<32x10xf32>, vector<1x10xf32> -> vector<1x10xf32>
    %c0_173 = arith.constant 0 : index
    %c0_174 = arith.constant 0 : index
    %514 = vector.load %arg19[%c0_173, %c0_174] : memref<1x10xf32, #tpu.memory_space<vmem>>, vector<1x10xf32>
    %515 = arith.addf %513, %514 : vector<1x10xf32>
    %c0_175 = arith.constant 0 : index
    %c0_176 = arith.constant 0 : index
    %c0_177 = arith.constant 0 : index
    %516 = vector.load %arg20[%c0_175, %c0_176, %c0_177] : memref<1x1x10xf32, #tpu.memory_space<vmem>>, vector<1x1x10xf32>
    %517 = vector.shape_cast %516 : vector<1x1x10xf32> to vector<1x10xf32>
    %518 = vector.shape_cast %515 : vector<1x10xf32> to vector<1x1x10xf32>
    tpu.vector_store %arg20[%c0_175, %c0_176, %c0_177], %518 {strides = array<i32>} : memref<1x1x10xf32, #tpu.memory_space<vmem>>, vector<1x1x10xf32>,
    return
  }
  func.func @transform_0(%arg0: i32) -> (i32, i32, i32) {
    %c0_i32 = arith.constant 0 : i32
    %c0_i32_0 = arith.constant 0 : i32
    %c0_i32_1 = arith.constant 0 : i32
    return %arg0, %c0_i32, %c0_i32_0 : i32, i32, i32
  }
  func.func @transform_1(%arg0: i32) -> (i32, i32) {
    %c0_i32 = arith.constant 0 : i32
    %c0_i32_0 = arith.constant 0 : i32
    %c0_i32_1 = arith.constant 0 : i32
    return %c0_i32, %c0_i32_0 : i32, i32
  }
  func.func @transform_2(%arg0: i32) -> (i32, i32) {
    %c0_i32 = arith.constant 0 : i32
    %c0_i32_0 = arith.constant 0 : i32
    %c0_i32_1 = arith.constant 0 : i32
    return %c0_i32, %c0_i32_0 : i32, i32
  }
  func.func @transform_3(%arg0: i32) -> (i32, i32) {
    %c0_i32 = arith.constant 0 : i32
    %c0_i32_0 = arith.constant 0 : i32
    %c0_i32_1 = arith.constant 0 : i32
    return %c0_i32, %c0_i32_0 : i32, i32
  }
  func.func @transform_4(%arg0: i32) -> (i32, i32, i32) {
    %c0_i32 = arith.constant 0 : i32
    %c0_i32_0 = arith.constant 0 : i32
    %c0_i32_1 = arith.constant 0 : i32
    %c0_i32_2 = arith.constant 0 : i32
    return %c0_i32, %c0_i32_0, %c0_i32_1 : i32, i32, i32
  }
  func.func @transform_5(%arg0: i32) -> (i32, i32, i32) {
    %c0_i32 = arith.constant 0 : i32
    %c0_i32_0 = arith.constant 0 : i32
    %c0_i32_1 = arith.constant 0 : i32
    %c0_i32_2 = arith.constant 0 : i32
    return %c0_i32, %c0_i32_0, %c0_i32_1 : i32, i32, i32
  }
  func.func @transform_6(%arg0: i32) -> (i32, i32, i32) {
    %c0_i32 = arith.constant 0 : i32
    %c0_i32_0 = arith.constant 0 : i32
    %c0_i32_1 = arith.constant 0 : i32
    %c0_i32_2 = arith.constant 0 : i32
    return %c0_i32, %c0_i32_0, %c0_i32_1 : i32, i32, i32
  }
  func.func @transform_7(%arg0: i32) -> (i32, i32, i32) {
    %c0_i32 = arith.constant 0 : i32
    %c0_i32_0 = arith.constant 0 : i32
    %c0_i32_1 = arith.constant 0 : i32
    %c0_i32_2 = arith.constant 0 : i32
    return %c0_i32, %c0_i32_0, %c0_i32_1 : i32, i32, i32
  }
  func.func @transform_8(%arg0: i32) -> (i32, i32, i32) {
    %c0_i32 = arith.constant 0 : i32
    %c0_i32_0 = arith.constant 0 : i32
    %c0_i32_1 = arith.constant 0 : i32
    %c0_i32_2 = arith.constant 0 : i32
    return %c0_i32, %c0_i32_0, %c0_i32_1 : i32, i32, i32
  }
  func.func @transform_9(%arg0: i32) -> (i32, i32, i32) {
    %c0_i32 = arith.constant 0 : i32
    %c0_i32_0 = arith.constant 0 : i32
    %c0_i32_1 = arith.constant 0 : i32
    %c0_i32_2 = arith.constant 0 : i32
    return %c0_i32, %c0_i32_0, %c0_i32_1 : i32, i32, i32
  }
  func.func @transform_10(%arg0: i32) -> (i32, i32, i32) {
    %c0_i32 = arith.constant 0 : i32
    %c0_i32_0 = arith.constant 0 : i32
    %c0_i32_1 = arith.constant 0 : i32
    %c0_i32_2 = arith.constant 0 : i32
    return %c0_i32, %c0_i32_0, %c0_i32_1 : i32, i32, i32
  }
  func.func @transform_11(%arg0: i32) -> (i32, i32, i32) {
    %c0_i32 = arith.constant 0 : i32
    %c0_i32_0 = arith.constant 0 : i32
    %c0_i32_1 = arith.constant 0 : i32
    %c0_i32_2 = arith.constant 0 : i32
    return %c0_i32, %c0_i32_0, %c0_i32_1 : i32, i32, i32
  }
  func.func @transform_12(%arg0: i32) -> (i32, i32, i32) {
    %c0_i32 = arith.constant 0 : i32
    %c0_i32_0 = arith.constant 0 : i32
    %c0_i32_1 = arith.constant 0 : i32
    %c0_i32_2 = arith.constant 0 : i32
    return %c0_i32, %c0_i32_0, %c0_i32_1 : i32, i32, i32
  }
  func.func @transform_13(%arg0: i32) -> (i32, i32, i32) {
    %c0_i32 = arith.constant 0 : i32
    %c0_i32_0 = arith.constant 0 : i32
    %c0_i32_1 = arith.constant 0 : i32
    %c0_i32_2 = arith.constant 0 : i32
    return %c0_i32, %c0_i32_0, %c0_i32_1 : i32, i32, i32
  }
  func.func @transform_14(%arg0: i32) -> (i32, i32, i32) {
    %c0_i32 = arith.constant 0 : i32
    %c0_i32_0 = arith.constant 0 : i32
    %c0_i32_1 = arith.constant 0 : i32
    %c0_i32_2 = arith.constant 0 : i32
    return %c0_i32, %c0_i32_0, %c0_i32_1 : i32, i32, i32
  }
  func.func @transform_15(%arg0: i32) -> (i32, i32, i32) {
    %c0_i32 = arith.constant 0 : i32
    %c0_i32_0 = arith.constant 0 : i32
    %c0_i32_1 = arith.constant 0 : i32
    %c0_i32_2 = arith.constant 0 : i32
    return %c0_i32, %c0_i32_0, %c0_i32_1 : i32, i32, i32
  }
  func.func @transform_16(%arg0: i32) -> (i32, i32, i32) {
    %c0_i32 = arith.constant 0 : i32
    %c0_i32_0 = arith.constant 0 : i32
    %c0_i32_1 = arith.constant 0 : i32
    %c0_i32_2 = arith.constant 0 : i32
    return %c0_i32, %c0_i32_0, %c0_i32_1 : i32, i32, i32
  }
  func.func @transform_17(%arg0: i32) -> (i32, i32) {
    %c0_i32 = arith.constant 0 : i32
    %c0_i32_0 = arith.constant 0 : i32
    %c0_i32_1 = arith.constant 0 : i32
    return %c0_i32, %c0_i32_0 : i32, i32
  }
  func.func @transform_18(%arg0: i32) -> (i32, i32) {
    %c0_i32 = arith.constant 0 : i32
    %c0_i32_0 = arith.constant 0 : i32
    %c0_i32_1 = arith.constant 0 : i32
    return %c0_i32, %c0_i32_0 : i32, i32
  }
  func.func @transform_19(%arg0: i32) -> (i32, i32, i32) {
    %c0_i32 = arith.constant 0 : i32
    %c0_i32_0 = arith.constant 0 : i32
    %c0_i32_1 = arith.constant 0 : i32
    return %arg0, %c0_i32, %c0_i32_0 : i32, i32, i32
  }
}

</mosaic_0001>

<llo_original>
// kernel: tpu_custom_call.1
$region0: #{tpu_custom_call.1}
  #allocation0 [shape = 'u32[]', space=smem, size = 0x4, offset = 0x4, fixed_abs, tag = 'smem constant byte address 0x4 - core index']
  #allocation1 [shape = 'u32[144,128]{1,0:T(1,128)}', space=vmem, size = 0x12000, scoped, tag = 'internal scratch']
  #allocation2 [shape = 'f32[9,64]{1,0:T(8,128)}', space=vmem, size = 0x2000, scoped, tag = 'scratch operand']
  %s0 = inlined_call_operand.vmem [shape: f32[2,8,20], index: 0, kind: input, shape index: {}]
  %s1 = inlined_call_operand.vmem [shape: f32[20,32], index: 1, kind: input, shape index: {}]
  %s2 = inlined_call_operand.vmem [shape: f32[1,32], index: 2, kind: input, shape index: {}]
  %s3 = inlined_call_operand.vmem [shape: f32[1,32], index: 3, kind: input, shape index: {}]
  %s4 = inlined_call_operand.vmem [shape: f32[2,32,64], index: 4, kind: input, shape index: {}]
  %s5 = inlined_call_operand.vmem [shape: f32[2,32,64], index: 5, kind: input, shape index: {}]
  %s6 = inlined_call_operand.vmem [shape: f32[2,4,64], index: 6, kind: input, shape index: {}]
  %s7 = inlined_call_operand.vmem [shape: f32[2,1,64], index: 7, kind: input, shape index: {}]
  %s8 = inlined_call_operand.vmem [shape: f32[2,64,2], index: 8, kind: input, shape index: {}]
  %s9 = inlined_call_operand.vmem [shape: f32[2,16,64], index: 9, kind: input, shape index: {}]
  %s10 = inlined_call_operand.vmem [shape: f32[2,16,64], index: 10, kind: input, shape index: {}]
  %s11 = inlined_call_operand.vmem [shape: f32[2,2,64], index: 11, kind: input, shape index: {}]
  %s12 = inlined_call_operand.vmem [shape: f32[2,1,64], index: 12, kind: input, shape index: {}]
  %s13 = inlined_call_operand.vmem [shape: f32[2,16,64], index: 13, kind: input, shape index: {}]
  %s14 = inlined_call_operand.vmem [shape: f32[2,1,64], index: 14, kind: input, shape index: {}]
  %s15 = inlined_call_operand.vmem [shape: f32[2,64,32], index: 15, kind: input, shape index: {}]
  %s16 = inlined_call_operand.vmem [shape: f32[2,1,32], index: 16, kind: input, shape index: {}]
  %s17 = inlined_call_operand.vmem [shape: f32[32,10], index: 17, kind: input, shape index: {}]
  %s18 = inlined_call_operand.vmem [shape: f32[1,10], index: 18, kind: input, shape index: {}]
  %s19 = inlined_call_operand.hbm [shape: f32[2,1,10], index: 19, kind: output, shape index: {}]
  %s20 = sld [smem:[#allocation0]]
  $region109: #{tpu_custom_call.1} parent=0
    _
  %s22 = ssub.s32 1, %s20
  %s23 = scalar_select 0, %s22, %s20
  $region1: #{tpu_custom_call.1} parent=0
    #allocation3 [shape = 'u8[1024]{0}', space=vmem, size = 0x400, scoped, tag = 'output window, operand 0']
    #allocation4 [shape = 's32[2]{0}', space=sflag, size = 0x8, scoped, tag = 'scoped memory for tpu_custom_call.1']
    %24 = vsyncpa [#allocation4], 0
    %s25 = scalar_lea.sflag [#allocation4], 1
    %26 = vsyncpa %s25, 0
    loop: start=0, step=1, limit=4
    $region2: #{tpu_custom_call.1} parent=1 // loop_pre_header
      _
    $region3: #{tpu_custom_call.1} parent=1 // loop_header
      %s28 = sphi 0, %s32
      %p29 = scmp.ge.s32.totalorder %s28, 4
      %s38 = sphi 0, %s40
      %s41 = sphi 0, %s38
      %s42 = sphi 0, %s41
      %s58 = sphi 0, %s42
      %s62 = sphi 0, %s62
      %s64 = sphi 0, %s62
      %s65 = sphi 0, %s64
      %s79 = sphi 0, %s65
      %s83 = sphi 0, %s83
      %s85 = sphi 0, %s83
      %s86 = sphi 0, %s85
      %s100 = sphi 0, %s86
      %s104 = sphi 0, %s104
      %s106 = sphi 0, %s104
      %s107 = sphi 0, %s106
      %s121 = sphi 0, %s107
      %s125 = sphi 0, %s125
      %s127 = sphi 0, %s125
      %s128 = sphi 0, %s127
      %s142 = sphi 0, %s128
      %s146 = sphi 0, %s146
      %s148 = sphi 0, %s146
      %s149 = sphi 0, %s148
      %s163 = sphi 0, %s149
      %s167 = sphi 0, %s167
      %s169 = sphi 0, %s167
      %s170 = sphi 0, %s169
      %s184 = sphi 0, %s170
      %s188 = sphi 0, %s188
      %s190 = sphi 0, %s188
      %s191 = sphi 0, %s190
      %s205 = sphi 0, %s191
      %s209 = sphi 0, %s209
      %s211 = sphi 0, %s209
      %s212 = sphi 0, %s211
      %s226 = sphi 0, %s212
      %s230 = sphi 0, %s230
      %s232 = sphi 0, %s230
      %s233 = sphi 0, %s232
      %s247 = sphi 0, %s233
      %s251 = sphi 0, %s251
      %s253 = sphi 0, %s251
      %s254 = sphi 0, %s253
      %s268 = sphi 0, %s254
      %s272 = sphi 0, %s272
      %s274 = sphi 0, %s272
      %s275 = sphi 0, %s274
      %s289 = sphi 0, %s275
      %s293 = sphi 0, %s293
      %s295 = sphi 0, %s293
      %s296 = sphi 0, %s295
      %s310 = sphi 0, %s296
      %s314 = sphi 0, %s314
      %s316 = sphi 0, %s314
      %s317 = sphi 0, %s316
      %s331 = sphi 0, %s317
      %s335 = sphi 0, %s335
      %s337 = sphi 0, %s335
      %s338 = sphi 0, %s337
      %s352 = sphi 0, %s338
      %s356 = sphi 0, %s356
      %s358 = sphi 0, %s356
      %s359 = sphi 0, %s358
      %s373 = sphi 0, %s359
      %s377 = sphi 0, %s377
      %s379 = sphi 0, %s377
      %s380 = sphi 0, %s379
      %s394 = sphi 0, %s380
      %s398 = sphi 0, %s398
      %s400 = sphi 0, %s398
      %s401 = sphi 0, %s400
      %s415 = sphi 0, %s401
      %s419 = sphi 0, %s419
      %s421 = sphi 0, %s419
      %s422 = sphi 0, %s421
      %s436 = sphi 0, %s422
      %s442 = sphi 0, %s444
      %s445 = sphi 0, %s442
      %s446 = sphi 0, %s445
      %s462 = sphi 0, %s446
    $region4: #{tpu_custom_call.1} parent=1 // loop_header_branch
      %31 = sbr.rel (%p29) target = $region8
    $region5: #{tpu_custom_call.1} parent=1 // loop_body
      %s33 = ssub.s32 %s28, 1
      %s34 = ssub.s32 %s28, 2
      %s35 = sadd.s32 %s28, 1
      %s36 = ssub.s32 %s28, %s35
      %p37 = scmp.eq.s32.totalorder %s36, 0
      %s39 = sadd.s32 %s38, 1
      %s40 = scalar_select %p37, %s38, %s39
      %p43 = pneg %p37
      %p44 = scmp.eq.s32.totalorder %s28, 1
      %p45 = por %p43, %p44
      %p46 = scmp.ne.s32.totalorder %s38, %s41
      %p47 = scmp.eq.s32.totalorder %s28, 0
      %p48 = por %p46, %p47
      %p49 = scmp.ne.s32.totalorder %s38, %s41
      %p50 = scmp.eq.s32.totalorder %s33, 1
      %p51 = por %p49, %p50
      %p52 = scmp.ne.s32.totalorder %s41, %s42
      %p53 = scmp.eq.s32.totalorder %s33, 0
      %p54 = por %p52, %p53
      %p55 = scmp.ne.s32.totalorder %s41, %s42
      %p56 = scmp.eq.s32.totalorder %s34, 1
      %p57 = por %p55, %p56
      %p59 = scmp.ne.s32.totalorder %s42, %s58
      %p60 = scmp.eq.s32.totalorder %s34, 0
      %p61 = por %p59, %p60
      %s63 = sadd.s32 %s62, 1
      %p66 = scmp.eq.s32.totalorder %s28, 1
      %p67 = scmp.ne.s32.totalorder %s62, %s64
      %p68 = scmp.eq.s32.totalorder %s28, 0
      %p69 = por %p67, %p68
      %p70 = scmp.ne.s32.totalorder %s62, %s64
      %p71 = scmp.eq.s32.totalorder %s33, 1
      %p72 = por %p70, %p71
      %p73 = scmp.ne.s32.totalorder %s64, %s65
      %p74 = scmp.eq.s32.totalorder %s33, 0
      %p75 = por %p73, %p74
      %p76 = scmp.ne.s32.totalorder %s64, %s65
      %p77 = scmp.eq.s32.totalorder %s34, 1
      %p78 = por %p76, %p77
      %p80 = scmp.ne.s32.totalorder %s65, %s79
      %p81 = scmp.eq.s32.totalorder %s34, 0
      %p82 = por %p80, %p81
      %s84 = sadd.s32 %s83, 1
      %p87 = scmp.eq.s32.totalorder %s28, 1
      %p88 = scmp.ne.s32.totalorder %s83, %s85
      %p89 = scmp.eq.s32.totalorder %s28, 0
      %p90 = por %p88, %p89
      %p91 = scmp.ne.s32.totalorder %s83, %s85
      %p92 = scmp.eq.s32.totalorder %s33, 1
      %p93 = por %p91, %p92
      %p94 = scmp.ne.s32.totalorder %s85, %s86
      %p95 = scmp.eq.s32.totalorder %s33, 0
      %p96 = por %p94, %p95
      %p97 = scmp.ne.s32.totalorder %s85, %s86
      %p98 = scmp.eq.s32.totalorder %s34, 1
      %p99 = por %p97, %p98
      %p101 = scmp.ne.s32.totalorder %s86, %s100
      %p102 = scmp.eq.s32.totalorder %s34, 0
      %p103 = por %p101, %p102
      %s105 = sadd.s32 %s104, 1
      %p108 = scmp.eq.s32.totalorder %s28, 1
      %p109 = scmp.ne.s32.totalorder %s104, %s106
      %p110 = scmp.eq.s32.totalorder %s28, 0
      %p111 = por %p109, %p110
      %p112 = scmp.ne.s32.totalorder %s104, %s106
      %p113 = scmp.eq.s32.totalorder %s33, 1
      %p114 = por %p112, %p113
      %p115 = scmp.ne.s32.totalorder %s106, %s107
      %p116 = scmp.eq.s32.totalorder %s33, 0
      %p117 = por %p115, %p116
      %p118 = scmp.ne.s32.totalorder %s106, %s107
      %p119 = scmp.eq.s32.totalorder %s34, 1
      %p120 = por %p118, %p119
      %p122 = scmp.ne.s32.totalorder %s107, %s121
      %p123 = scmp.eq.s32.totalorder %s34, 0
      %p124 = por %p122, %p123
      %s126 = sadd.s32 %s125, 1
      %p129 = scmp.eq.s32.totalorder %s28, 1
      %p130 = scmp.ne.s32.totalorder %s125, %s127
      %p131 = scmp.eq.s32.totalorder %s28, 0
      %p132 = por %p130, %p131
      %p133 = scmp.ne.s32.totalorder %s125, %s127
      %p134 = scmp.eq.s32.totalorder %s33, 1
      %p135 = por %p133, %p134
      %p136 = scmp.ne.s32.totalorder %s127, %s128
      %p137 = scmp.eq.s32.totalorder %s33, 0
      %p138 = por %p136, %p137
      %p139 = scmp.ne.s32.totalorder %s127, %s128
      %p140 = scmp.eq.s32.totalorder %s34, 1
      %p141 = por %p139, %p140
      %p143 = scmp.ne.s32.totalorder %s128, %s142
      %p144 = scmp.eq.s32.totalorder %s34, 0
      %p145 = por %p143, %p144
      %s147 = sadd.s32 %s146, 1
      %p150 = scmp.eq.s32.totalorder %s28, 1
      %p151 = scmp.ne.s32.totalorder %s146, %s148
      %p152 = scmp.eq.s32.totalorder %s28, 0
      %p153 = por %p151, %p152
      %p154 = scmp.ne.s32.totalorder %s146, %s148
      %p155 = scmp.eq.s32.totalorder %s33, 1
      %p156 = por %p154, %p155
      %p157 = scmp.ne.s32.totalorder %s148, %s149
      %p158 = scmp.eq.s32.totalorder %s33, 0
      %p159 = por %p157, %p158
      %p160 = scmp.ne.s32.totalorder %s148, %s149
      %p161 = scmp.eq.s32.totalorder %s34, 1
      %p162 = por %p160, %p161
      %p164 = scmp.ne.s32.totalorder %s149, %s163
      %p165 = scmp.eq.s32.totalorder %s34, 0
      %p166 = por %p164, %p165
      %s168 = sadd.s32 %s167, 1
      %p171 = scmp.eq.s32.totalorder %s28, 1
      %p172 = scmp.ne.s32.totalorder %s167, %s169
      %p173 = scmp.eq.s32.totalorder %s28, 0
      %p174 = por %p172, %p173
      %p175 = scmp.ne.s32.totalorder %s167, %s169
      %p176 = scmp.eq.s32.totalorder %s33, 1
      %p177 = por %p175, %p176
      %p178 = scmp.ne.s32.totalorder %s169, %s170
      %p179 = scmp.eq.s32.totalorder %s33, 0
      %p180 = por %p178, %p179
      %p181 = scmp.ne.s32.totalorder %s169, %s170
      %p182 = scmp.eq.s32.totalorder %s34, 1
      %p183 = por %p181, %p182
      %p185 = scmp.ne.s32.totalorder %s170, %s184
      %p186 = scmp.eq.s32.totalorder %s34, 0
      %p187 = por %p185, %p186
      %s189 = sadd.s32 %s188, 1
      %p192 = scmp.eq.s32.totalorder %s28, 1
      %p193 = scmp.ne.s32.totalorder %s188, %s190
      %p194 = scmp.eq.s32.totalorder %s28, 0
      %p195 = por %p193, %p194
      %p196 = scmp.ne.s32.totalorder %s188, %s190
      %p197 = scmp.eq.s32.totalorder %s33, 1
      %p198 = por %p196, %p197
      %p199 = scmp.ne.s32.totalorder %s190, %s191
      %p200 = scmp.eq.s32.totalorder %s33, 0
      %p201 = por %p199, %p200
      %p202 = scmp.ne.s32.totalorder %s190, %s191
      %p203 = scmp.eq.s32.totalorder %s34, 1
      %p204 = por %p202, %p203
      %p206 = scmp.ne.s32.totalorder %s191, %s205
      %p207 = scmp.eq.s32.totalorder %s34, 0
      %p208 = por %p206, %p207
      %s210 = sadd.s32 %s209, 1
      %p213 = scmp.eq.s32.totalorder %s28, 1
      %p214 = scmp.ne.s32.totalorder %s209, %s211
      %p215 = scmp.eq.s32.totalorder %s28, 0
      %p216 = por %p214, %p215
      %p217 = scmp.ne.s32.totalorder %s209, %s211
      %p218 = scmp.eq.s32.totalorder %s33, 1
      %p219 = por %p217, %p218
      %p220 = scmp.ne.s32.totalorder %s211, %s212
      %p221 = scmp.eq.s32.totalorder %s33, 0
      %p222 = por %p220, %p221
      %p223 = scmp.ne.s32.totalorder %s211, %s212
      %p224 = scmp.eq.s32.totalorder %s34, 1
      %p225 = por %p223, %p224
      %p227 = scmp.ne.s32.totalorder %s212, %s226
      %p228 = scmp.eq.s32.totalorder %s34, 0
      %p229 = por %p227, %p228
      %s231 = sadd.s32 %s230, 1
      %p234 = scmp.eq.s32.totalorder %s28, 1
      %p235 = scmp.ne.s32.totalorder %s230, %s232
      %p236 = scmp.eq.s32.totalorder %s28, 0
      %p237 = por %p235, %p236
      %p238 = scmp.ne.s32.totalorder %s230, %s232
      %p239 = scmp.eq.s32.totalorder %s33, 1
      %p240 = por %p238, %p239
      %p241 = scmp.ne.s32.totalorder %s232, %s233
      %p242 = scmp.eq.s32.totalorder %s33, 0
      %p243 = por %p241, %p242
      %p244 = scmp.ne.s32.totalorder %s232, %s233
      %p245 = scmp.eq.s32.totalorder %s34, 1
      %p246 = por %p244, %p245
      %p248 = scmp.ne.s32.totalorder %s233, %s247
      %p249 = scmp.eq.s32.totalorder %s34, 0
      %p250 = por %p248, %p249
      %s252 = sadd.s32 %s251, 1
      %p255 = scmp.eq.s32.totalorder %s28, 1
      %p256 = scmp.ne.s32.totalorder %s251, %s253
      %p257 = scmp.eq.s32.totalorder %s28, 0
      %p258 = por %p256, %p257
      %p259 = scmp.ne.s32.totalorder %s251, %s253
      %p260 = scmp.eq.s32.totalorder %s33, 1
      %p261 = por %p259, %p260
      %p262 = scmp.ne.s32.totalorder %s253, %s254
      %p263 = scmp.eq.s32.totalorder %s33, 0
      %p264 = por %p262, %p263
      %p265 = scmp.ne.s32.totalorder %s253, %s254
      %p266 = scmp.eq.s32.totalorder %s34, 1
      %p267 = por %p265, %p266
      %p269 = scmp.ne.s32.totalorder %s254, %s268
      %p270 = scmp.eq.s32.totalorder %s34, 0
      %p271 = por %p269, %p270
      %s273 = sadd.s32 %s272, 1
      %p276 = scmp.eq.s32.totalorder %s28, 1
      %p277 = scmp.ne.s32.totalorder %s272, %s274
      %p278 = scmp.eq.s32.totalorder %s28, 0
      %p279 = por %p277, %p278
      %p280 = scmp.ne.s32.totalorder %s272, %s274
      %p281 = scmp.eq.s32.totalorder %s33, 1
      %p282 = por %p280, %p281
      %p283 = scmp.ne.s32.totalorder %s274, %s275
      %p284 = scmp.eq.s32.totalorder %s33, 0
      %p285 = por %p283, %p284
      %p286 = scmp.ne.s32.totalorder %s274, %s275
      %p287 = scmp.eq.s32.totalorder %s34, 1
      %p288 = por %p286, %p287
      %p290 = scmp.ne.s32.totalorder %s275, %s289
      %p291 = scmp.eq.s32.totalorder %s34, 0
      %p292 = por %p290, %p291
      %s294 = sadd.s32 %s293, 1
      %p297 = scmp.eq.s32.totalorder %s28, 1
      %p298 = scmp.ne.s32.totalorder %s293, %s295
      %p299 = scmp.eq.s32.totalorder %s28, 0
      %p300 = por %p298, %p299
      %p301 = scmp.ne.s32.totalorder %s293, %s295
      %p302 = scmp.eq.s32.totalorder %s33, 1
      %p303 = por %p301, %p302
      %p304 = scmp.ne.s32.totalorder %s295, %s296
      %p305 = scmp.eq.s32.totalorder %s33, 0
      %p306 = por %p304, %p305
      %p307 = scmp.ne.s32.totalorder %s295, %s296
      %p308 = scmp.eq.s32.totalorder %s34, 1
      %p309 = por %p307, %p308
      %p311 = scmp.ne.s32.totalorder %s296, %s310
      %p312 = scmp.eq.s32.totalorder %s34, 0
      %p313 = por %p311, %p312
      %s315 = sadd.s32 %s314, 1
      %p318 = scmp.eq.s32.totalorder %s28, 1
      %p319 = scmp.ne.s32.totalorder %s314, %s316
      %p320 = scmp.eq.s32.totalorder %s28, 0
      %p321 = por %p319, %p320
      %p322 = scmp.ne.s32.totalorder %s314, %s316
      %p323 = scmp.eq.s32.totalorder %s33, 1
      %p324 = por %p322, %p323
      %p325 = scmp.ne.s32.totalorder %s316, %s317
      %p326 = scmp.eq.s32.totalorder %s33, 0
      %p327 = por %p325, %p326
      %p328 = scmp.ne.s32.totalorder %s316, %s317
      %p329 = scmp.eq.s32.totalorder %s34, 1
      %p330 = por %p328, %p329
      %p332 = scmp.ne.s32.totalorder %s317, %s331
      %p333 = scmp.eq.s32.totalorder %s34, 0
      %p334 = por %p332, %p333
      %s336 = sadd.s32 %s335, 1
      %p339 = scmp.eq.s32.totalorder %s28, 1
      %p340 = scmp.ne.s32.totalorder %s335, %s337
      %p341 = scmp.eq.s32.totalorder %s28, 0
      %p342 = por %p340, %p341
      %p343 = scmp.ne.s32.totalorder %s335, %s337
      %p344 = scmp.eq.s32.totalorder %s33, 1
      %p345 = por %p343, %p344
      %p346 = scmp.ne.s32.totalorder %s337, %s338
      %p347 = scmp.eq.s32.totalorder %s33, 0
      %p348 = por %p346, %p347
      %p349 = scmp.ne.s32.totalorder %s337, %s338
      %p350 = scmp.eq.s32.totalorder %s34, 1
      %p351 = por %p349, %p350
      %p353 = scmp.ne.s32.totalorder %s338, %s352
      %p354 = scmp.eq.s32.totalorder %s34, 0
      %p355 = por %p353, %p354
      %s357 = sadd.s32 %s356, 1
      %p360 = scmp.eq.s32.totalorder %s28, 1
      %p361 = scmp.ne.s32.totalorder %s356, %s358
      %p362 = scmp.eq.s32.totalorder %s28, 0
      %p363 = por %p361, %p362
      %p364 = scmp.ne.s32.totalorder %s356, %s358
      %p365 = scmp.eq.s32.totalorder %s33, 1
      %p366 = por %p364, %p365
      %p367 = scmp.ne.s32.totalorder %s358, %s359
      %p368 = scmp.eq.s32.totalorder %s33, 0
      %p369 = por %p367, %p368
      %p370 = scmp.ne.s32.totalorder %s358, %s359
      %p371 = scmp.eq.s32.totalorder %s34, 1
      %p372 = por %p370, %p371
      %p374 = scmp.ne.s32.totalorder %s359, %s373
      %p375 = scmp.eq.s32.totalorder %s34, 0
      %p376 = por %p374, %p375
      %s378 = sadd.s32 %s377, 1
      %p381 = scmp.eq.s32.totalorder %s28, 1
      %p382 = scmp.ne.s32.totalorder %s377, %s379
      %p383 = scmp.eq.s32.totalorder %s28, 0
      %p384 = por %p382, %p383
      %p385 = scmp.ne.s32.totalorder %s377, %s379
      %p386 = scmp.eq.s32.totalorder %s33, 1
      %p387 = por %p385, %p386
      %p388 = scmp.ne.s32.totalorder %s379, %s380
      %p389 = scmp.eq.s32.totalorder %s33, 0
      %p390 = por %p388, %p389
      %p391 = scmp.ne.s32.totalorder %s379, %s380
      %p392 = scmp.eq.s32.totalorder %s34, 1
      %p393 = por %p391, %p392
      %p395 = scmp.ne.s32.totalorder %s380, %s394
      %p396 = scmp.eq.s32.totalorder %s34, 0
      %p397 = por %p395, %p396
      %s399 = sadd.s32 %s398, 1
      %p402 = scmp.eq.s32.totalorder %s28, 1
      %p403 = scmp.ne.s32.totalorder %s398, %s400
      %p404 = scmp.eq.s32.totalorder %s28, 0
      %p405 = por %p403, %p404
      %p406 = scmp.ne.s32.totalorder %s398, %s400
      %p407 = scmp.eq.s32.totalorder %s33, 1
      %p408 = por %p406, %p407
      %p409 = scmp.ne.s32.totalorder %s400, %s401
      %p410 = scmp.eq.s32.totalorder %s33, 0
      %p411 = por %p409, %p410
      %p412 = scmp.ne.s32.totalorder %s400, %s401
      %p413 = scmp.eq.s32.totalorder %s34, 1
      %p414 = por %p412, %p413
      %p416 = scmp.ne.s32.totalorder %s401, %s415
      %p417 = scmp.eq.s32.totalorder %s34, 0
      %p418 = por %p416, %p417
      %s420 = sadd.s32 %s419, 1
      %p423 = scmp.eq.s32.totalorder %s28, 1
      %p424 = scmp.ne.s32.totalorder %s419, %s421
      %p425 = scmp.eq.s32.totalorder %s28, 0
      %p426 = por %p424, %p425
      %p427 = scmp.ne.s32.totalorder %s419, %s421
      %p428 = scmp.eq.s32.totalorder %s33, 1
      %p429 = por %p427, %p428
      %p430 = scmp.ne.s32.totalorder %s421, %s422
      %p431 = scmp.eq.s32.totalorder %s33, 0
      %p432 = por %p430, %p431
      %p433 = scmp.ne.s32.totalorder %s421, %s422
      %p434 = scmp.eq.s32.totalorder %s34, 1
      %p435 = por %p433, %p434
      %p437 = scmp.ne.s32.totalorder %s422, %s436
      %p438 = scmp.eq.s32.totalorder %s34, 0
      %p439 = por %p437, %p438
      %s440 = ssub.s32 %s28, %s35
      %p441 = scmp.eq.s32.totalorder %s440, 0
      %s443 = sadd.s32 %s442, 1
      %s444 = scalar_select %p441, %s442, %s443
      %p447 = pneg %p441
      %p448 = scmp.eq.s32.totalorder %s28, 1
      %p449 = por %p447, %p448
      %p450 = scmp.ne.s32.totalorder %s442, %s445
      %p451 = scmp.eq.s32.totalorder %s28, 0
      %p452 = por %p450, %p451
      %p453 = scmp.ne.s32.totalorder %s442, %s445
      %p454 = scmp.eq.s32.totalorder %s33, 1
      %p455 = por %p453, %p454
      %p456 = scmp.ne.s32.totalorder %s445, %s446
      %p457 = scmp.eq.s32.totalorder %s33, 0
      %p458 = por %p456, %p457
      %p459 = scmp.ne.s32.totalorder %s445, %s446
      %p460 = scmp.eq.s32.totalorder %s34, 1
      %p461 = por %p459, %p460
      %p463 = scmp.ne.s32.totalorder %s446, %s462
      %p464 = scmp.eq.s32.totalorder %s34, 0
      %p465 = por %p463, %p464
      %p466 = scmp.le.s32.totalorder 1, %s28
      %p467 = scmp.lt.s32.totalorder %s28, 3
      %p468 = pnand %p466, %p467
      %p469 = pneg %p468
      // Predicated region
      $region9: #{tpu_custom_call.1} parent=5 // pred_check
        _
      $region10: #{tpu_custom_call.1} parent=5 // pred_check_branch
        %471 = sbr.rel (%p468) target = $region12
      $region11: #{tpu_custom_call.1} parent=5 // pred_region
        %s472 = ssub.s32 %s28, 1
        // Predicated region
        $region13: #{tpu_custom_call.1} parent=11 // pred_check
          %p473 = pneg %p75
        $region14: #{tpu_custom_call.1} parent=11 // pred_check_branch
          %475 = sbr.rel (%p473) target = $region16
        $region15: #{tpu_custom_call.1} parent=11 // pred_region
          _
        $region16: #{tpu_custom_call.1} parent=11 // pred_fallthru
          _
        // Predicated region
        $region17: #{tpu_custom_call.1} parent=11 // pred_check
          %p476 = pneg %p96
        $region18: #{tpu_custom_call.1} parent=11 // pred_check_branch
          %478 = sbr.rel (%p476) target = $region20
        $region19: #{tpu_custom_call.1} parent=11 // pred_region
          _
        $region20: #{tpu_custom_call.1} parent=11 // pred_fallthru
          _
        // Predicated region
        $region21: #{tpu_custom_call.1} parent=11 // pred_check
          %p479 = pneg %p117
        $region22: #{tpu_custom_call.1} parent=11 // pred_check_branch
          %481 = sbr.rel (%p479) target = $region24
        $region23: #{tpu_custom_call.1} parent=11 // pred_region
          _
        $region24: #{tpu_custom_call.1} parent=11 // pred_fallthru
          _
        // Predicated region
        $region25: #{tpu_custom_call.1} parent=11 // pred_check
          %p482 = pneg %p138
        $region26: #{tpu_custom_call.1} parent=11 // pred_check_branch
          %484 = sbr.rel (%p482) target = $region28
        $region27: #{tpu_custom_call.1} parent=11 // pred_region
          _
        $region28: #{tpu_custom_call.1} parent=11 // pred_fallthru
          _
        // Predicated region
        $region29: #{tpu_custom_call.1} parent=11 // pred_check
          %p485 = pneg %p159
        $region30: #{tpu_custom_call.1} parent=11 // pred_check_branch
          %487 = sbr.rel (%p485) target = $region32
        $region31: #{tpu_custom_call.1} parent=11 // pred_region
          _
        $region32: #{tpu_custom_call.1} parent=11 // pred_fallthru
          _
        // Predicated region
        $region33: #{tpu_custom_call.1} parent=11 // pred_check
          %p488 = pneg %p180
        $region34: #{tpu_custom_call.1} parent=11 // pred_check_branch
          %490 = sbr.rel (%p488) target = $region36
        $region35: #{tpu_custom_call.1} parent=11 // pred_region
          _
        $region36: #{tpu_custom_call.1} parent=11 // pred_fallthru
          _
        // Predicated region
        $region37: #{tpu_custom_call.1} parent=11 // pred_check
          %p491 = pneg %p201
        $region38: #{tpu_custom_call.1} parent=11 // pred_check_branch
          %493 = sbr.rel (%p491) target = $region40
        $region39: #{tpu_custom_call.1} parent=11 // pred_region
          _
        $region40: #{tpu_custom_call.1} parent=11 // pred_fallthru
          _
        // Predicated region
        $region41: #{tpu_custom_call.1} parent=11 // pred_check
          %p494 = pneg %p222
        $region42: #{tpu_custom_call.1} parent=11 // pred_check_branch
          %496 = sbr.rel (%p494) target = $region44
        $region43: #{tpu_custom_call.1} parent=11 // pred_region
          _
        $region44: #{tpu_custom_call.1} parent=11 // pred_fallthru
          _
        // Predicated region
        $region45: #{tpu_custom_call.1} parent=11 // pred_check
          %p497 = pneg %p243
        $region46: #{tpu_custom_call.1} parent=11 // pred_check_branch
          %499 = sbr.rel (%p497) target = $region48
        $region47: #{tpu_custom_call.1} parent=11 // pred_region
          _
        $region48: #{tpu_custom_call.1} parent=11 // pred_fallthru
          _
        // Predicated region
        $region49: #{tpu_custom_call.1} parent=11 // pred_check
          %p500 = pneg %p264
        $region50: #{tpu_custom_call.1} parent=11 // pred_check_branch
          %502 = sbr.rel (%p500) target = $region52
        $region51: #{tpu_custom_call.1} parent=11 // pred_region
          _
        $region52: #{tpu_custom_call.1} parent=11 // pred_fallthru
          _
        // Predicated region
        $region53: #{tpu_custom_call.1} parent=11 // pred_check
          %p503 = pneg %p285
        $region54: #{tpu_custom_call.1} parent=11 // pred_check_branch
          %505 = sbr.rel (%p503) target = $region56
        $region55: #{tpu_custom_call.1} parent=11 // pred_region
          _
        $region56: #{tpu_custom_call.1} parent=11 // pred_fallthru
          _
        // Predicated region
        $region57: #{tpu_custom_call.1} parent=11 // pred_check
          %p506 = pneg %p306
        $region58: #{tpu_custom_call.1} parent=11 // pred_check_branch
          %508 = sbr.rel (%p506) target = $region60
        $region59: #{tpu_custom_call.1} parent=11 // pred_region
          _
        $region60: #{tpu_custom_call.1} parent=11 // pred_fallthru
          _
        // Predicated region
        $region61: #{tpu_custom_call.1} parent=11 // pred_check
          %p509 = pneg %p327
        $region62: #{tpu_custom_call.1} parent=11 // pred_check_branch
          %511 = sbr.rel (%p509) target = $region64
        $region63: #{tpu_custom_call.1} parent=11 // pred_region
          _
        $region64: #{tpu_custom_call.1} parent=11 // pred_fallthru
          _
        // Predicated region
        $region65: #{tpu_custom_call.1} parent=11 // pred_check
          %p512 = pneg %p348
        $region66: #{tpu_custom_call.1} parent=11 // pred_check_branch
          %514 = sbr.rel (%p512) target = $region68
        $region67: #{tpu_custom_call.1} parent=11 // pred_region
          _
        $region68: #{tpu_custom_call.1} parent=11 // pred_fallthru
          _
        // Predicated region
        $region69: #{tpu_custom_call.1} parent=11 // pred_check
          %p515 = pneg %p369
        $region70: #{tpu_custom_call.1} parent=11 // pred_check_branch
          %517 = sbr.rel (%p515) target = $region72
        $region71: #{tpu_custom_call.1} parent=11 // pred_region
          _
        $region72: #{tpu_custom_call.1} parent=11 // pred_fallthru
          _
        // Predicated region
        $region73: #{tpu_custom_call.1} parent=11 // pred_check
          %p518 = pneg %p390
        $region74: #{tpu_custom_call.1} parent=11 // pred_check_branch
          %520 = sbr.rel (%p518) target = $region76
        $region75: #{tpu_custom_call.1} parent=11 // pred_region
          _
        $region76: #{tpu_custom_call.1} parent=11 // pred_fallthru
          _
        // Predicated region
        $region77: #{tpu_custom_call.1} parent=11 // pred_check
          %p521 = pneg %p411
        $region78: #{tpu_custom_call.1} parent=11 // pred_check_branch
          %523 = sbr.rel (%p521) target = $region80
        $region79: #{tpu_custom_call.1} parent=11 // pred_region
          _
        $region80: #{tpu_custom_call.1} parent=11 // pred_fallthru
          _
        // Predicated region
        $region81: #{tpu_custom_call.1} parent=11 // pred_check
          %p524 = pneg %p432
        $region82: #{tpu_custom_call.1} parent=11 // pred_check_branch
          %526 = sbr.rel (%p524) target = $region84
        $region83: #{tpu_custom_call.1} parent=11 // pred_region
          _
        $region84: #{tpu_custom_call.1} parent=11 // pred_fallthru
          _
      $region12: #{tpu_custom_call.1} parent=5 // pred_fallthru
        _
      %p527 = scmp.lt.s32.totalorder %s28, 2
      // Predicated region
      $region85: #{tpu_custom_call.1} parent=5 // pred_check
        %p528 = pneg %p527
      $region86: #{tpu_custom_call.1} parent=5 // pred_check_branch
        %530 = sbr.rel (%p528) target = $region88
      $region87: #{tpu_custom_call.1} parent=5 // pred_region
        // Predicated region
        $region89: #{tpu_custom_call.1} parent=87 // pred_check
          %p531 = pneg %p48
        $region90: #{tpu_custom_call.1} parent=87 // pred_check_branch
          %533 = sbr.rel (%p531) target = $region92
        $region91: #{tpu_custom_call.1} parent=87 // pred_region
          %p534 = scmp.lt.s32.totalorder %s28, 1
          %s535 = scalar_select %p534, %s28, 1
          %s536 = smul.addr %s535, 8
          %s537 = scalar_lea.vmem %s0, %s536
        $region92: #{tpu_custom_call.1} parent=87 // pred_fallthru
          _
      $region88: #{tpu_custom_call.1} parent=5 // pred_fallthru
        _
      %p538 = scmp.le.s32.totalorder 1, %s28
      %p539 = scmp.lt.s32.totalorder %s28, 3
      %p540 = pnand %p538, %p539
      %p541 = pneg %p540
      // Predicated region
      $region93: #{tpu_custom_call.1} parent=5 // pred_check
        _
      $region94: #{tpu_custom_call.1} parent=5 // pred_check_branch
        %543 = sbr.rel (%p540) target = $region96
      $region95: #{tpu_custom_call.1} parent=5 // pred_region
        %s544 = ssub.s32 %s28, 1
        %p545 = scmp.lt.s32.totalorder %s33, 1
        %s546 = scalar_select %p545, %s33, 1
        %s547 = smul.addr %s546, 8
        %s548 = scalar_lea.vmem %s0, %s547
        %p549 = pneg %p54
        %p550 = pneg %p51
        %p551 = pneg %p75
        %p552 = pneg %p72
        %p553 = pneg %p96
        %p554 = pneg %p93
        %p555 = pneg %p117
        %p556 = pneg %p114
        %p557 = pneg %p138
        %p558 = pneg %p135
        %p559 = pneg %p159
        %p560 = pneg %p156
        %p561 = pneg %p180
        %p562 = pneg %p177
        %p563 = pneg %p201
        %p564 = pneg %p198
        %p565 = pneg %p222
        %p566 = pneg %p219
        %p567 = pneg %p243
        %p568 = pneg %p240
        %p569 = pneg %p264
        %p570 = pneg %p261
        %p571 = pneg %p285
        %p572 = pneg %p282
        %p573 = pneg %p306
        %p574 = pneg %p303
        %p575 = pneg %p327
        %p576 = pneg %p324
        %p577 = pneg %p348
        %p578 = pneg %p345
        %p579 = pneg %p369
        %p580 = pneg %p366
        %p581 = pneg %p390
        %p582 = pneg %p387
        %p583 = pneg %p411
        %p584 = pneg %p408
        %p585 = pneg %p432
        %p586 = pneg %p429
        %p587 = pneg %p458
        %p588 = pneg %p455
        %s589 = sand.u32 %s445, 1
        %s590 = scalar_lea.sflag [#allocation4], %s589
        %s591 = sand.u32 %s445, 1
        %s592 = scalar_lea.vmem [#allocation3], %s591
        %p593 = scmp.lt.s32.totalorder %s33, 1
        %s594 = scalar_select %p593, %s33, 1
        %s595 = smul.addr %s594, 8
        %s596 = scalar_lea.vmem %s0, %s595
        %v597 = vld [vmem:[%s596] sm:$0xff]
        %v598 = vld [vmem:[%s1] sm:$0xff]
        %v599 = vld [vmem:[%s1 + $0x8] sm:$0xff]
        %v600 = vld [vmem:[%s1 + $0x10] sm:$0xf]
        %v601 = vld [vmem:[%s2] sm:$0x1]
        %v603 = vlaneseq
        %v604 = vshrl.u32 %v603, 7
        %v605 = vsub.s32 0, %v604
        %v606 = vrot.slane %v601, %v605
        %vm608 = vcmask 162816
        %v610 = vsel %vm608, %v597, 0
        %vm612 = vcmask 1043456
        %v614 = vsel %vm612, %v600, 0
        %616 = vmatprep.subr.mxu0 0.0
        %617 = vmatpush1.msra.mxu0 %v598
        %618 = vmatprep.subr.mxu0 0.0
        %619 = vmatpush1.msra.mxu0 %v599
        %620 = vmatprep.subr.mxu0 0.0
        %621 = vmatpush1.msra.mxu0 %v614
        %622 = vmatprep.subr.mxu0 0.0
        %623 = vmatpush1.msra.mxu0 0.0
        %624 = vmatprep.subr.mxu0 0.0
        %625 = vmatpush1.msra.mxu0 0.0
        %626 = vmatprep.subr.mxu0 0.0
        %627 = vmatpush1.msra.mxu0 0.0
        %628 = vmatprep.subr.mxu0 0.0
        %629 = vmatpush1.msra.mxu0 0.0
        %630 = vmatprep.subr.mxu0 0.0
        %631 = vmatpush1.msra.mxu0 0.0
        %632 = vmatprep.subr.mxu0 0.0
        %633 = vmatpush1.msra.mxu0 0.0
        %634 = vmatprep.subr.mxu0 0.0
        %635 = vmatpush1.msra.mxu0 0.0
        %636 = vmatprep.subr.mxu0 0.0
        %637 = vmatpush1.msra.mxu0 0.0
        %638 = vmatprep.subr.mxu0 0.0
        %639 = vmatpush1.msra.mxu0 0.0
        %640 = vmatprep.subr.mxu0 0.0
        %641 = vmatpush1.msra.mxu0 0.0
        %642 = vmatprep.subr.mxu0 0.0
        %643 = vmatpush1.msra.mxu0 0.0
        %644 = vmatprep.subr.mxu0 0.0
        %645 = vmatpush1.msra.mxu0 0.0
        %646 = vmatprep.subr.mxu0 0.0
        %647 = vmatpush1.msra.mxu0 0.0
        %648 = vmatprep.subr.mxu0 0.0
        %649 = vmatpush1.msra.mxu0 0.0
        %650 = vmatprep.subr.mxu0 0.0
        %651 = vmatpush1.msra.mxu0 0.0
        %652 = vmatprep.subr.mxu0 0.0
        %653 = vmatpush1.msra.mxu0 0.0
        %654 = vmatprep.subr.mxu0 0.0
        %655 = vmatpush1.msra.mxu0 0.0
        %656 = vmatprep.subr.mxu0 0.0
        %657 = vmatpush1.msra.mxu0 0.0
        %658 = vmatprep.subr.mxu0 0.0
        %659 = vmatpush1.msra.mxu0 0.0
        %660 = vmatprep.subr.mxu0 0.0
        %661 = vmatpush1.msra.mxu0 0.0
        %662 = vmatprep.subr.mxu0 0.0
        %663 = vmatpush1.msra.mxu0 0.0
        %664 = vmatprep.subr.mxu0 0.0
        %665 = vmatpush1.msra.mxu0 0.0
        %666 = vmatprep.subr.mxu0 0.0
        %667 = vmatpush1.msra.mxu0 0.0
        %668 = vmatprep.subr.mxu0 0.0
        %669 = vmatpush1.msra.mxu0 0.0
        %670 = vmatprep.subr.mxu0 0.0
        %671 = vmatpush1.msra.mxu0 0.0
        %672 = vmatprep.subr.mxu0 0.0
        %673 = vmatpush1.msra.mxu0 0.0
        %674 = vmatprep.subr.mxu0 0.0
        %675 = vmatpush1.msra.mxu0 0.0
        %676 = vmatprep.subr.mxu0 0.0
        %677 = vmatpush1.msra.mxu0 0.0
        %678 = vmatprep.subr.mxu0 0.0
        %679 = vmatpush1.msra.mxu0 0.0
        %680 = vmatprep.mubr.f32.mxu0 0.0
        %681 = vmatmul.mubr.f32.gmra.mrb[0].mxu0 %v610
        %v682 = vpop.f32.mrb[0].mxu0
        %v683 = vadd.f32 %v606, %v682
        %v684 = vpop.f32.mrb[0].mxu0
        %685 = vdwg.mxu0
        %v686 = vld [vmem:[%s3] sm:$0x1]
        %v687 = vld [vmem:[%s4] sm:$0xff]
        %v688 = vld [vmem:[%s4 + $0x8] sm:$0xff]
        %v689 = vld [vmem:[%s4 + $0x10] sm:$0xff]
        %v690 = vld [vmem:[%s4 + $0x18] sm:$0xff]
        %vm691 = vcmask 261120
        %v693 = vsel %vm691, %v683, 0
        %v696 = vsel %vm691, %v686, 0
        %698 = vmatprep.subr.mxu0 0.0
        %699 = vmatpush1.msra.mxu0 %v687
        %700 = vmatprep.subr.mxu0 0.0
        %701 = vmatpush1.msra.mxu0 %v688
        %702 = vmatprep.subr.mxu0 0.0
        %703 = vmatpush1.msra.mxu0 %v689
        %704 = vmatprep.subr.mxu0 0.0
        %705 = vmatpush1.msra.mxu0 %v690
        %706 = vmatprep.subr.mxu0 0.0
        %707 = vmatpush1.msra.mxu0 0.0
        %708 = vmatprep.subr.mxu0 0.0
        %709 = vmatpush1.msra.mxu0 0.0
        %710 = vmatprep.subr.mxu0 0.0
        %711 = vmatpush1.msra.mxu0 0.0
        %712 = vmatprep.subr.mxu0 0.0
        %713 = vmatpush1.msra.mxu0 0.0
        %714 = vmatprep.subr.mxu0 0.0
        %715 = vmatpush1.msra.mxu0 0.0
        %716 = vmatprep.subr.mxu0 0.0
        %717 = vmatpush1.msra.mxu0 0.0
        %718 = vmatprep.subr.mxu0 0.0
        %719 = vmatpush1.msra.mxu0 0.0
        %720 = vmatprep.subr.mxu0 0.0
        %721 = vmatpush1.msra.mxu0 0.0
        %722 = vmatprep.subr.mxu0 0.0
        %723 = vmatpush1.msra.mxu0 0.0
        %724 = vmatprep.subr.mxu0 0.0
        %725 = vmatpush1.msra.mxu0 0.0
        %726 = vmatprep.subr.mxu0 0.0
        %727 = vmatpush1.msra.mxu0 0.0
        %728 = vmatprep.subr.mxu0 0.0
        %729 = vmatpush1.msra.mxu0 0.0
        %730 = vmatprep.subr.mxu0 0.0
        %731 = vmatpush1.msra.mxu0 0.0
        %732 = vmatprep.subr.mxu0 0.0
        %733 = vmatpush1.msra.mxu0 0.0
        %734 = vmatprep.subr.mxu0 0.0
        %735 = vmatpush1.msra.mxu0 0.0
        %736 = vmatprep.subr.mxu0 0.0
        %737 = vmatpush1.msra.mxu0 0.0
        %738 = vmatprep.subr.mxu0 0.0
        %739 = vmatpush1.msra.mxu0 0.0
        %740 = vmatprep.subr.mxu0 0.0
        %741 = vmatpush1.msra.mxu0 0.0
        %742 = vmatprep.subr.mxu0 0.0
        %743 = vmatpush1.msra.mxu0 0.0
        %744 = vmatprep.subr.mxu0 0.0
        %745 = vmatpush1.msra.mxu0 0.0
        %746 = vmatprep.subr.mxu0 0.0
        %747 = vmatpush1.msra.mxu0 0.0
        %748 = vmatprep.subr.mxu0 0.0
        %749 = vmatpush1.msra.mxu0 0.0
        %750 = vmatprep.subr.mxu0 0.0
        %751 = vmatpush1.msra.mxu0 0.0
        %752 = vmatprep.subr.mxu0 0.0
        %753 = vmatpush1.msra.mxu0 0.0
        %754 = vmatprep.subr.mxu0 0.0
        %755 = vmatpush1.msra.mxu0 0.0
        %756 = vmatprep.subr.mxu0 0.0
        %757 = vmatpush1.msra.mxu0 0.0
        %758 = vmatprep.subr.mxu0 0.0
        %759 = vmatpush1.msra.mxu0 0.0
        %760 = vmatprep.subr.mxu0 0.0
        %761 = vmatpush1.msra.mxu0 0.0
        %762 = vmatprep.mubr.f32.mxu0 0.0
        %763 = vmatmul.mubr.f32.gmra.mrb[0].mxu0 %v693
        %v764 = vpop.f32.mrb[0].mxu0
        %v765 = vadd.f32 0.0, %v764
        %v766 = vpop.f32.mrb[0].mxu0
        %767 = vmatprep.mubr.f32.mxu0 0.0
        %768 = vmatmul.mubr.f32.gmra.mrb[0].mxu0 %v696
        %v769 = vpop.f32.mrb[0].mxu0
        %v770 = vadd.f32 0.0, %v769
        %v771 = vpop.f32.mrb[0].mxu0
        %772 = vdwg.mxu0
        %v773 = vld [vmem:[%s5] sm:$0xff]
        %v774 = vld [vmem:[%s5 + $0x8] sm:$0xff]
        %v775 = vld [vmem:[%s5 + $0x10] sm:$0xff]
        %v776 = vld [vmem:[%s5 + $0x18] sm:$0xff]
        %777 = vmatprep.subr.mxu0 0.0
        %778 = vmatpush1.msra.mxu0 %v773
        %779 = vmatprep.subr.mxu0 0.0
        %780 = vmatpush1.msra.mxu0 %v774
        %781 = vmatprep.subr.mxu0 0.0
        %782 = vmatpush1.msra.mxu0 %v775
        %783 = vmatprep.subr.mxu0 0.0
        %784 = vmatpush1.msra.mxu0 %v776
        %785 = vmatprep.subr.mxu0 0.0
        %786 = vmatpush1.msra.mxu0 0.0
        %787 = vmatprep.subr.mxu0 0.0
        %788 = vmatpush1.msra.mxu0 0.0
        %789 = vmatprep.subr.mxu0 0.0
        %790 = vmatpush1.msra.mxu0 0.0
        %791 = vmatprep.subr.mxu0 0.0
        %792 = vmatpush1.msra.mxu0 0.0
        %793 = vmatprep.subr.mxu0 0.0
        %794 = vmatpush1.msra.mxu0 0.0
        %795 = vmatprep.subr.mxu0 0.0
        %796 = vmatpush1.msra.mxu0 0.0
        %797 = vmatprep.subr.mxu0 0.0
        %798 = vmatpush1.msra.mxu0 0.0
        %799 = vmatprep.subr.mxu0 0.0
        %800 = vmatpush1.msra.mxu0 0.0
        %801 = vmatprep.subr.mxu0 0.0
        %802 = vmatpush1.msra.mxu0 0.0
        %803 = vmatprep.subr.mxu0 0.0
        %804 = vmatpush1.msra.mxu0 0.0
        %805 = vmatprep.subr.mxu0 0.0
        %806 = vmatpush1.msra.mxu0 0.0
        %807 = vmatprep.subr.mxu0 0.0
        %808 = vmatpush1.msra.mxu0 0.0
        %809 = vmatprep.subr.mxu0 0.0
        %810 = vmatpush1.msra.mxu0 0.0
        %811 = vmatprep.subr.mxu0 0.0
        %812 = vmatpush1.msra.mxu0 0.0
        %813 = vmatprep.subr.mxu0 0.0
        %814 = vmatpush1.msra.mxu0 0.0
        %815 = vmatprep.subr.mxu0 0.0
        %816 = vmatpush1.msra.mxu0 0.0
        %817 = vmatprep.subr.mxu0 0.0
        %818 = vmatpush1.msra.mxu0 0.0
        %819 = vmatprep.subr.mxu0 0.0
        %820 = vmatpush1.msra.mxu0 0.0
        %821 = vmatprep.subr.mxu0 0.0
        %822 = vmatpush1.msra.mxu0 0.0
        %823 = vmatprep.subr.mxu0 0.0
        %824 = vmatpush1.msra.mxu0 0.0
        %825 = vmatprep.subr.mxu0 0.0
        %826 = vmatpush1.msra.mxu0 0.0
        %827 = vmatprep.subr.mxu0 0.0
        %828 = vmatpush1.msra.mxu0 0.0
        %829 = vmatprep.subr.mxu0 0.0
        %830 = vmatpush1.msra.mxu0 0.0
        %831 = vmatprep.subr.mxu0 0.0
        %832 = vmatpush1.msra.mxu0 0.0
        %833 = vmatprep.subr.mxu0 0.0
        %834 = vmatpush1.msra.mxu0 0.0
        %835 = vmatprep.subr.mxu0 0.0
        %836 = vmatpush1.msra.mxu0 0.0
        %837 = vmatprep.subr.mxu0 0.0
        %838 = vmatpush1.msra.mxu0 0.0
        %839 = vmatprep.subr.mxu0 0.0
        %840 = vmatpush1.msra.mxu0 0.0
        %841 = vmatprep.mubr.f32.mxu0 0.0
        %842 = vmatmul.mubr.f32.gmra.mrb[0].mxu0 %v693
        %v843 = vpop.f32.mrb[0].mxu0
        %v844 = vadd.f32 0.0, %v843
        %v845 = vpop.f32.mrb[0].mxu0
        %846 = vmatprep.mubr.f32.mxu0 0.0
        %847 = vmatmul.mubr.f32.gmra.mrb[0].mxu0 %v696
        %v848 = vpop.f32.mrb[0].mxu0
        %v849 = vadd.f32 0.0, %v848
        %v850 = vpop.f32.mrb[0].mxu0
        %851 = vdwg.mxu0
        %v852 = vld [vmem:[%s6] sm:$0xf]
        %vm855 = vcmask 1042432
        %v856 = vrot.slane %v765, 5
        %v857 = vrot.slane %v770, 5
        %v858 = vsel %vm855, %v856, %v857
        %v861 = vsel %vm855, 0.0, %v856
        %v862 = vlaneseq
        %v863 = vshrl.u32 %v862, 7
        %v864 = vsub.s32 0, %v863
        %v865 = vrot.slane %v852, %v864
        %v866 = vmul.f32 %v861, %v865
        %v867 = vmul.f32 %v858, %v865
        %v868 = vadd.f32 %v866, 0.0
        %v869 = vadd.f32 %v867, 0.0
        %v870 = vlaneseq
        %v871 = vshrl.u32 %v870, 7
        %v872 = vsub.s32 1, %v871
        %v873 = vrot.slane %v852, %v872
        %v874 = vmul.f32 %v861, %v873
        %v875 = vmul.f32 %v858, %v873
        %vm878 = vcmask 1046528
        %v879 = vrot.slane %v874, 1
        %v880 = vrot.slane %v875, 1
        %v881 = vsel %vm878, %v879, %v880
        %v884 = vadd.f32 %v868, %v881
        %v885 = vadd.f32 %v869, %v880
        %v886 = vlaneseq
        %v887 = vshrl.u32 %v886, 7
        %v888 = vsub.s32 2, %v887
        %v889 = vrot.slane %v852, %v888
        %v890 = vmul.f32 %v861, %v889
        %v891 = vmul.f32 %v858, %v889
        %vm894 = vcmask 1045504
        %v895 = vrot.slane %v890, 2
        %v896 = vrot.slane %v891, 2
        %v897 = vsel %vm894, %v895, %v896
        %v900 = vadd.f32 %v884, %v897
        %v901 = vadd.f32 %v885, %v896
        %v902 = vlaneseq
        %v903 = vshrl.u32 %v902, 7
        %v904 = vsub.s32 3, %v903
        %v905 = vrot.slane %v852, %v904
        %v906 = vmul.f32 %v861, %v905
        %v907 = vmul.f32 %v858, %v905
        %vm910 = vcmask 1044480
        %v911 = vrot.slane %v906, 3
        %v912 = vrot.slane %v907, 3
        %v913 = vsel %vm910, %v911, %v912
        %v916 = vadd.f32 %v900, %v913
        %v917 = vadd.f32 %v901, %v912
        %v918 = vld [vmem:[%s7] sm:$0x1]
        %v920 = vlaneseq
        %v921 = vshrl.u32 %v920, 7
        %v922 = vsub.s32 0, %v921
        %v923 = vrot.slane %v918, %v922
        %v925 = vadd.f32 %v916, %v923
        %v926 = vadd.f32 %v917, %v923
        %v927 = vxor.u32 %v925, 2147483648
        %v928 = vxor.u32 %v926, 2147483648
        %v929 = vmul.f32 %v927, 1.442695
        %v930 = vpow.pop %v929
        %v931 = vmul.f32 %v928, 1.442695
        %v932 = vpow.pop %v931
        %v933 = vadd.f32 %v930, 1.0
        %v934 = vadd.f32 %v932, 1.0
        %v935 = vrcp.pop %v933
        %v936 = vmul.f32 1.0, %v935
        %v937 = vrcp.pop %v934
        %v938 = vmul.f32 1.0, %v937
        %v939 = vmul.f32 %v925, %v936
        %v940 = vmul.f32 %v926, %v938
        %v941 = vld [vmem:[%s8] sm:$0xff]
        %v942 = vld [vmem:[%s8 + $0x8] sm:$0xff]
        %v943 = vld [vmem:[%s8 + $0x10] sm:$0xff]
        %v944 = vld [vmem:[%s8 + $0x18] sm:$0xff]
        %v945 = vld [vmem:[%s8 + $0x20] sm:$0xff]
        %v946 = vld [vmem:[%s8 + $0x28] sm:$0xff]
        %v947 = vld [vmem:[%s8 + $0x30] sm:$0xff]
        %v948 = vld [vmem:[%s8 + $0x38] sm:$0xff]
        %vm949 = vcmask 523264
        %v951 = vsel %vm949, %v939, 0
        %v954 = vsel %vm949, %v940, 0
        %956 = vmatprep.subr.mxu0 0.0
        %957 = vmatpush1.msra.mxu0 %v941
        %958 = vmatprep.subr.mxu0 0.0
        %959 = vmatpush1.msra.mxu0 %v942
        %960 = vmatprep.subr.mxu0 0.0
        %961 = vmatpush1.msra.mxu0 %v943
        %962 = vmatprep.subr.mxu0 0.0
        %963 = vmatpush1.msra.mxu0 %v944
        %964 = vmatprep.subr.mxu0 0.0
        %965 = vmatpush1.msra.mxu0 %v945
        %966 = vmatprep.subr.mxu0 0.0
        %967 = vmatpush1.msra.mxu0 %v946
        %968 = vmatprep.subr.mxu0 0.0
        %969 = vmatpush1.msra.mxu0 %v947
        %970 = vmatprep.subr.mxu0 0.0
        %971 = vmatpush1.msra.mxu0 %v948
        %972 = vmatprep.subr.mxu0 0.0
        %973 = vmatpush1.msra.mxu0 0.0
        %974 = vmatprep.subr.mxu0 0.0
        %975 = vmatpush1.msra.mxu0 0.0
        %976 = vmatprep.subr.mxu0 0.0
        %977 = vmatpush1.msra.mxu0 0.0
        %978 = vmatprep.subr.mxu0 0.0
        %979 = vmatpush1.msra.mxu0 0.0
        %980 = vmatprep.subr.mxu0 0.0
        %981 = vmatpush1.msra.mxu0 0.0
        %982 = vmatprep.subr.mxu0 0.0
        %983 = vmatpush1.msra.mxu0 0.0
        %984 = vmatprep.subr.mxu0 0.0
        %985 = vmatpush1.msra.mxu0 0.0
        %986 = vmatprep.subr.mxu0 0.0
        %987 = vmatpush1.msra.mxu0 0.0
        %988 = vmatprep.subr.mxu0 0.0
        %989 = vmatpush1.msra.mxu0 0.0
        %990 = vmatprep.subr.mxu0 0.0
        %991 = vmatpush1.msra.mxu0 0.0
        %992 = vmatprep.subr.mxu0 0.0
        %993 = vmatpush1.msra.mxu0 0.0
        %994 = vmatprep.subr.mxu0 0.0
        %995 = vmatpush1.msra.mxu0 0.0
        %996 = vmatprep.subr.mxu0 0.0
        %997 = vmatpush1.msra.mxu0 0.0
        %998 = vmatprep.subr.mxu0 0.0
        %999 = vmatpush1.msra.mxu0 0.0
        %1000 = vmatprep.subr.mxu0 0.0
        %1001 = vmatpush1.msra.mxu0 0.0
        %1002 = vmatprep.subr.mxu0 0.0
        %1003 = vmatpush1.msra.mxu0 0.0
        %1004 = vmatprep.subr.mxu0 0.0
        %1005 = vmatpush1.msra.mxu0 0.0
        %1006 = vmatprep.subr.mxu0 0.0
        %1007 = vmatpush1.msra.mxu0 0.0
        %1008 = vmatprep.subr.mxu0 0.0
        %1009 = vmatpush1.msra.mxu0 0.0
        %1010 = vmatprep.subr.mxu0 0.0
        %1011 = vmatpush1.msra.mxu0 0.0
        %1012 = vmatprep.subr.mxu0 0.0
        %1013 = vmatpush1.msra.mxu0 0.0
        %1014 = vmatprep.subr.mxu0 0.0
        %1015 = vmatpush1.msra.mxu0 0.0
        %1016 = vmatprep.subr.mxu0 0.0
        %1017 = vmatpush1.msra.mxu0 0.0
        %1018 = vmatprep.subr.mxu0 0.0
        %1019 = vmatpush1.msra.mxu0 0.0
        %1020 = vmatprep.mubr.f32.mxu0 0.0
        %1021 = vmatmul.mubr.f32.gmra.mrb[0].mxu0 %v951
        %v1022 = vpop.f32.mrb[0].mxu0
        %v1023 = vadd.f32 0.0, %v1022
        %v1024 = vpop.f32.mrb[0].mxu0
        %1025 = vmatprep.mubr.f32.mxu0 0.0
        %1026 = vmatmul.mubr.f32.gmra.mrb[0].mxu0 %v954
        %v1027 = vpop.f32.mrb[0].mxu0
        %v1028 = vadd.f32 0.0, %v1027
        %v1029 = vpop.f32.mrb[0].mxu0
        %1030 = vdwg.mxu0
        %v1031 = vld [vmem:[%s11] sm:$0x3]
        %v1032 = vld [vmem:[%s12] sm:$0x1]
        %v1034 = vlaneseq
        %v1035 = vshrl.u32 %v1034, 7
        %v1036 = vsub.s32 0, %v1035
        %v1037 = vrot.slane %v1032, %v1036
        %vm1039 = vcmask 15360
        %v1041 = vsel %vm1039, %v1023, 0
        %v1044 = vsel %vm1039, %v1028, 0
        %vm1046 = vcmask 1041408
        %v1048 = vsel %vm1046, %v1031, 0
        %1050 = vmatprep.subr.mxu0 0.0
        %1051 = vmatpush1.msra.mxu0 %v1048
        %1052 = vmatprep.subr.mxu0 0.0
        %1053 = vmatpush1.msra.mxu0 0.0
        %1054 = vmatprep.subr.mxu0 0.0
        %1055 = vmatpush1.msra.mxu0 0.0
        %1056 = vmatprep.subr.mxu0 0.0
        %1057 = vmatpush1.msra.mxu0 0.0
        %1058 = vmatprep.subr.mxu0 0.0
        %1059 = vmatpush1.msra.mxu0 0.0
        %1060 = vmatprep.subr.mxu0 0.0
        %1061 = vmatpush1.msra.mxu0 0.0
        %1062 = vmatprep.subr.mxu0 0.0
        %1063 = vmatpush1.msra.mxu0 0.0
        %1064 = vmatprep.subr.mxu0 0.0
        %1065 = vmatpush1.msra.mxu0 0.0
        %1066 = vmatprep.subr.mxu0 0.0
        %1067 = vmatpush1.msra.mxu0 0.0
        %1068 = vmatprep.subr.mxu0 0.0
        %1069 = vmatpush1.msra.mxu0 0.0
        %1070 = vmatprep.subr.mxu0 0.0
        %1071 = vmatpush1.msra.mxu0 0.0
        %1072 = vmatprep.subr.mxu0 0.0
        %1073 = vmatpush1.msra.mxu0 0.0
        %1074 = vmatprep.subr.mxu0 0.0
        %1075 = vmatpush1.msra.mxu0 0.0
        %1076 = vmatprep.subr.mxu0 0.0
        %1077 = vmatpush1.msra.mxu0 0.0
        %1078 = vmatprep.subr.mxu0 0.0
        %1079 = vmatpush1.msra.mxu0 0.0
        %1080 = vmatprep.subr.mxu0 0.0
        %1081 = vmatpush1.msra.mxu0 0.0
        %1082 = vmatprep.subr.mxu0 0.0
        %1083 = vmatpush1.msra.mxu0 0.0
        %1084 = vmatprep.subr.mxu0 0.0
        %1085 = vmatpush1.msra.mxu0 0.0
        %1086 = vmatprep.subr.mxu0 0.0
        %1087 = vmatpush1.msra.mxu0 0.0
        %1088 = vmatprep.subr.mxu0 0.0
        %1089 = vmatpush1.msra.mxu0 0.0
        %1090 = vmatprep.subr.mxu0 0.0
        %1091 = vmatpush1.msra.mxu0 0.0
        %1092 = vmatprep.subr.mxu0 0.0
        %1093 = vmatpush1.msra.mxu0 0.0
        %1094 = vmatprep.subr.mxu0 0.0
        %1095 = vmatpush1.msra.mxu0 0.0
        %1096 = vmatprep.subr.mxu0 0.0
        %1097 = vmatpush1.msra.mxu0 0.0
        %1098 = vmatprep.subr.mxu0 0.0
        %1099 = vmatpush1.msra.mxu0 0.0
        %1100 = vmatprep.subr.mxu0 0.0
        %1101 = vmatpush1.msra.mxu0 0.0
        %1102 = vmatprep.subr.mxu0 0.0
        %1103 = vmatpush1.msra.mxu0 0.0
        %1104 = vmatprep.subr.mxu0 0.0
        %1105 = vmatpush1.msra.mxu0 0.0
        %1106 = vmatprep.subr.mxu0 0.0
        %1107 = vmatpush1.msra.mxu0 0.0
        %1108 = vmatprep.subr.mxu0 0.0
        %1109 = vmatpush1.msra.mxu0 0.0
        %1110 = vmatprep.subr.mxu0 0.0
        %1111 = vmatpush1.msra.mxu0 0.0
        %1112 = vmatprep.subr.mxu0 0.0
        %1113 = vmatpush1.msra.mxu0 0.0
        %1114 = vmatprep.mubr.f32.mxu0 0.0
        %1115 = vmatmul.mubr.f32.gmra.mrb[0].mxu0 %v1041
        %v1116 = vpop.f32.mrb[0].mxu0
        %v1117 = vadd.f32 %v1037, %v1116
        %v1118 = vpop.f32.mrb[0].mxu0
        %1119 = vmatprep.mubr.f32.mxu0 0.0
        %1120 = vmatmul.mubr.f32.gmra.mrb[0].mxu0 %v1044
        %v1121 = vpop.f32.mrb[0].mxu0
        %v1122 = vadd.f32 %v1037, %v1121
        %v1123 = vpop.f32.mrb[0].mxu0
        %1124 = vdwg.mxu0
        %vm1125 = vcmp.gt.f32.partialorder %v1117, 20.0
        %vm1126 = vcmp.gt.f32.partialorder %v1122, 20.0
        %v1127 = vmin.f32 %v1117, 20.0
        %v1128 = vmin.f32 %v1122, 20.0
        %v1129 = vmul.f32 %v1127, 1.442695
        %v1130 = vpow.pop %v1129
        %v1131 = vmul.f32 %v1128, 1.442695
        %v1132 = vpow.pop %v1131
        %v1133 = vadd.f32 %v1130, 1.0
        %v1134 = vlog2.pop %v1133
        %v1135 = vmul.f32 %v1134, 0.6931472
        %v1136 = vmul.f32 -0.5, %v1130
        %v1137 = vadd.f32 %v1136, 1.0
        %v1138 = vmul.f32 %v1137, %v1130
        %v1139 = vand.u32 2147483647, %v1130
        %vm1140 = vcmp.lt.f32.partialorder %v1139, 0.0004427343
        %v1141 = vsel %vm1140, %v1138, %v1135
        %v1142 = vadd.f32 %v1132, 1.0
        %v1143 = vlog2.pop %v1142
        %v1144 = vmul.f32 %v1143, 0.6931472
        %v1145 = vmul.f32 -0.5, %v1132
        %v1146 = vadd.f32 %v1145, 1.0
        %v1147 = vmul.f32 %v1146, %v1132
        %v1148 = vand.u32 2147483647, %v1132
        %vm1149 = vcmp.lt.f32.partialorder %v1148, 0.0004427343
        %v1150 = vsel %vm1149, %v1147, %v1144
        %v1151 = vsel %vm1125, %v1117, %v1141
        %v1152 = vsel %vm1126, %v1122, %v1150
        %v1153 = vld [vmem:[%s9] sm:$0xff]
        %v1154 = vld [vmem:[%s9 + $0x8] sm:$0xff]
        %v1156 = vsel %vm949, %v1153, 0
        %v1159 = vsel %vm949, %v1154, 0
        %1161 = vmatprep.subr.mxu0 0.0
        %1162 = vmatpush1.xpose.msra.mxu0 %v951
        %1163 = vmatprep.subr.mxu0 0.0
        %1164 = vmatpush1.xpose.msra.mxu0 %v954
        %1165 = vmatprep.subr.mxu0 0.0
        %1166 = vmatpush1.xpose.msra.mxu0 0.0
        %1167 = vmatprep.subr.mxu0 0.0
        %1168 = vmatpush1.xpose.msra.mxu0 0.0
        %1169 = vmatprep.subr.mxu0 0.0
        %1170 = vmatpush1.xpose.msra.mxu0 0.0
        %1171 = vmatprep.subr.mxu0 0.0
        %1172 = vmatpush1.xpose.msra.mxu0 0.0
        %1173 = vmatprep.subr.mxu0 0.0
        %1174 = vmatpush1.xpose.msra.mxu0 0.0
        %1175 = vmatprep.subr.mxu0 0.0
        %1176 = vmatpush1.xpose.msra.mxu0 0.0
        %1177 = vmatprep.subr.mxu0 0.0
        %1178 = vmatpush1.xpose.msra.mxu0 0.0
        %1179 = vmatprep.subr.mxu0 0.0
        %1180 = vmatpush1.xpose.msra.mxu0 0.0
        %1181 = vmatprep.subr.mxu0 0.0
        %1182 = vmatpush1.xpose.msra.mxu0 0.0
        %1183 = vmatprep.subr.mxu0 0.0
        %1184 = vmatpush1.xpose.msra.mxu0 0.0
        %1185 = vmatprep.subr.mxu0 0.0
        %1186 = vmatpush1.xpose.msra.mxu0 0.0
        %1187 = vmatprep.subr.mxu0 0.0
        %1188 = vmatpush1.xpose.msra.mxu0 0.0
        %1189 = vmatprep.subr.mxu0 0.0
        %1190 = vmatpush1.xpose.msra.mxu0 0.0
        %1191 = vmatprep.subr.mxu0 0.0
        %1192 = vmatpush1.xpose.msra.mxu0 0.0
        %1193 = vmatprep.subr.mxu0 0.0
        %1194 = vmatpush1.xpose.msra.mxu0 0.0
        %1195 = vmatprep.subr.mxu0 0.0
        %1196 = vmatpush1.xpose.msra.mxu0 0.0
        %1197 = vmatprep.subr.mxu0 0.0
        %1198 = vmatpush1.xpose.msra.mxu0 0.0
        %1199 = vmatprep.subr.mxu0 0.0
        %1200 = vmatpush1.xpose.msra.mxu0 0.0
        %1201 = vmatprep.subr.mxu0 0.0
        %1202 = vmatpush1.xpose.msra.mxu0 0.0
        %1203 = vmatprep.subr.mxu0 0.0
        %1204 = vmatpush1.xpose.msra.mxu0 0.0
        %1205 = vmatprep.subr.mxu0 0.0
        %1206 = vmatpush1.xpose.msra.mxu0 0.0
        %1207 = vmatprep.subr.mxu0 0.0
        %1208 = vmatpush1.xpose.msra.mxu0 0.0
        %1209 = vmatprep.subr.mxu0 0.0
        %1210 = vmatpush1.xpose.msra.mxu0 0.0
        %1211 = vmatprep.subr.mxu0 0.0
        %1212 = vmatpush1.xpose.msra.mxu0 0.0
        %1213 = vmatprep.subr.mxu0 0.0
        %1214 = vmatpush1.xpose.msra.mxu0 0.0
        %1215 = vmatprep.subr.mxu0 0.0
        %1216 = vmatpush1.xpose.msra.mxu0 0.0
        %1217 = vmatprep.subr.mxu0 0.0
        %1218 = vmatpush1.xpose.msra.mxu0 0.0
        %1219 = vmatprep.subr.mxu0 0.0
        %1220 = vmatpush1.xpose.msra.mxu0 0.0
        %1221 = vmatprep.subr.mxu0 0.0
        %1222 = vmatpush1.xpose.msra.mxu0 0.0
        %1223 = vmatprep.subr.mxu0 0.0
        %1224 = vmatpush1.xpose.msra.mxu0 0.0
        %1225 = vmatprep.mubr.f32.mxu0 0.0
        %1226 = vmatmul.mubr.f32.gmra.mrb[0].mxu0 %v1156
        %v1227 = vpop.f32.mrb[0].mxu0
        %v1228 = vadd.f32 0.0, %v1227
        %v1229 = vpop.f32.mrb[0].mxu0
        %1230 = vmatprep.mubr.f32.mxu0 0.0
        %1231 = vmatmul.mubr.f32.gmra.mrb[0].mxu0 %v1159
        %v1232 = vpop.f32.mrb[0].mxu0
        %v1233 = vadd.f32 0.0, %v1232
        %v1234 = vpop.f32.mrb[0].mxu0
        %1235 = vdwg.mxu0
        %v1236 = vld [vmem:[%s10] sm:$0xff]
        %v1237 = vld [vmem:[%s10 + $0x8] sm:$0xff]
        %v1239 = vsel %vm949, %v1236, 0
        %v1242 = vsel %vm949, %v1237, 0
        %1244 = vmatprep.subr.mxu0 0.0
        %1245 = vmatpush1.xpose.msra.mxu0 %v951
        %1246 = vmatprep.subr.mxu0 0.0
        %1247 = vmatpush1.xpose.msra.mxu0 %v954
        %1248 = vmatprep.subr.mxu0 0.0
        %1249 = vmatpush1.xpose.msra.mxu0 0.0
        %1250 = vmatprep.subr.mxu0 0.0
        %1251 = vmatpush1.xpose.msra.mxu0 0.0
        %1252 = vmatprep.subr.mxu0 0.0
        %1253 = vmatpush1.xpose.msra.mxu0 0.0
        %1254 = vmatprep.subr.mxu0 0.0
        %1255 = vmatpush1.xpose.msra.mxu0 0.0
        %1256 = vmatprep.subr.mxu0 0.0
        %1257 = vmatpush1.xpose.msra.mxu0 0.0
        %1258 = vmatprep.subr.mxu0 0.0
        %1259 = vmatpush1.xpose.msra.mxu0 0.0
        %1260 = vmatprep.subr.mxu0 0.0
        %1261 = vmatpush1.xpose.msra.mxu0 0.0
        %1262 = vmatprep.subr.mxu0 0.0
        %1263 = vmatpush1.xpose.msra.mxu0 0.0
        %1264 = vmatprep.subr.mxu0 0.0
        %1265 = vmatpush1.xpose.msra.mxu0 0.0
        %1266 = vmatprep.subr.mxu0 0.0
        %1267 = vmatpush1.xpose.msra.mxu0 0.0
        %1268 = vmatprep.subr.mxu0 0.0
        %1269 = vmatpush1.xpose.msra.mxu0 0.0
        %1270 = vmatprep.subr.mxu0 0.0
        %1271 = vmatpush1.xpose.msra.mxu0 0.0
        %1272 = vmatprep.subr.mxu0 0.0
        %1273 = vmatpush1.xpose.msra.mxu0 0.0
        %1274 = vmatprep.subr.mxu0 0.0
        %1275 = vmatpush1.xpose.msra.mxu0 0.0
        %1276 = vmatprep.subr.mxu0 0.0
        %1277 = vmatpush1.xpose.msra.mxu0 0.0
        %1278 = vmatprep.subr.mxu0 0.0
        %1279 = vmatpush1.xpose.msra.mxu0 0.0
        %1280 = vmatprep.subr.mxu0 0.0
        %1281 = vmatpush1.xpose.msra.mxu0 0.0
        %1282 = vmatprep.subr.mxu0 0.0
        %1283 = vmatpush1.xpose.msra.mxu0 0.0
        %1284 = vmatprep.subr.mxu0 0.0
        %1285 = vmatpush1.xpose.msra.mxu0 0.0
        %1286 = vmatprep.subr.mxu0 0.0
        %1287 = vmatpush1.xpose.msra.mxu0 0.0
        %1288 = vmatprep.subr.mxu0 0.0
        %1289 = vmatpush1.xpose.msra.mxu0 0.0
        %1290 = vmatprep.subr.mxu0 0.0
        %1291 = vmatpush1.xpose.msra.mxu0 0.0
        %1292 = vmatprep.subr.mxu0 0.0
        %1293 = vmatpush1.xpose.msra.mxu0 0.0
        %1294 = vmatprep.subr.mxu0 0.0
        %1295 = vmatpush1.xpose.msra.mxu0 0.0
        %1296 = vmatprep.subr.mxu0 0.0
        %1297 = vmatpush1.xpose.msra.mxu0 0.0
        %1298 = vmatprep.subr.mxu0 0.0
        %1299 = vmatpush1.xpose.msra.mxu0 0.0
        %1300 = vmatprep.subr.mxu0 0.0
        %1301 = vmatpush1.xpose.msra.mxu0 0.0
        %1302 = vmatprep.subr.mxu0 0.0
        %1303 = vmatpush1.xpose.msra.mxu0 0.0
        %1304 = vmatprep.subr.mxu0 0.0
        %1305 = vmatpush1.xpose.msra.mxu0 0.0
        %1306 = vmatprep.subr.mxu0 0.0
        %1307 = vmatpush1.xpose.msra.mxu0 0.0
        %1308 = vmatprep.mubr.f32.mxu0 0.0
        %1309 = vmatmul.mubr.f32.gmra.mrb[0].mxu0 %v1239
        %v1310 = vpop.f32.mrb[0].mxu0
        %v1311 = vadd.f32 0.0, %v1310
        %v1312 = vpop.f32.mrb[0].mxu0
        %1313 = vmatprep.mubr.f32.mxu0 0.0
        %1314 = vmatmul.mubr.f32.gmra.mrb[0].mxu0 %v1242
        %v1315 = vpop.f32.mrb[0].mxu0
        %v1316 = vadd.f32 0.0, %v1315
        %v1317 = vpop.f32.mrb[0].mxu0
        %1318 = vdwg.mxu0
        %v1319 = vld [vmem:[%s13] sm:$0xff]
        %v1320 = vld [vmem:[%s13 + $0x8] sm:$0xff]
        %v1321 = vmul.f32 %v1151, %v939
        %v1322 = vmul.f32 %v1152, %v940
        %v1323 = vlaneseq
        %v1324 = vshrl.u32 %v1323, 7
        %v1325 = vsub.s32 0, %v1324
        %v1326 = vrot.slane %v1151, %v1325
        %v1327 = vmul.f32 %v1326, %v1319
        %v1328 = vmul.f32 %v1326, %v1320
        %v1329 = vmul.f32 %v1327, 1.442695
        %v1330 = vpow.pop %v1329
        %v1331 = vmul.f32 %v1328, 1.442695
        %v1332 = vpow.pop %v1331
        %v1333 = vlaneseq
        %v1334 = vshrl.u32 %v1333, 7
        %v1335 = vsub.s32 1, %v1334
        %v1336 = vrot.slane %v1151, %v1335
        %v1337 = vmul.f32 %v1336, %v1319
        %v1338 = vmul.f32 %v1336, %v1320
        %v1339 = vmul.f32 %v1337, 1.442695
        %v1340 = vpow.pop %v1339
        %v1341 = vmul.f32 %v1338, 1.442695
        %v1342 = vpow.pop %v1341
        %v1343 = vlaneseq
        %v1344 = vshrl.u32 %v1343, 7
        %v1345 = vsub.s32 2, %v1344
        %v1346 = vrot.slane %v1151, %v1345
        %v1347 = vmul.f32 %v1346, %v1319
        %v1348 = vmul.f32 %v1346, %v1320
        %v1349 = vmul.f32 %v1347, 1.442695
        %v1350 = vpow.pop %v1349
        %v1351 = vmul.f32 %v1348, 1.442695
        %v1352 = vpow.pop %v1351
        %v1353 = vlaneseq
        %v1354 = vshrl.u32 %v1353, 7
        %v1355 = vsub.s32 3, %v1354
        %v1356 = vrot.slane %v1151, %v1355
        %v1357 = vmul.f32 %v1356, %v1319
        %v1358 = vmul.f32 %v1356, %v1320
        %v1359 = vmul.f32 %v1357, 1.442695
        %v1360 = vpow.pop %v1359
        %v1361 = vmul.f32 %v1358, 1.442695
        %v1362 = vpow.pop %v1361
        %v1363 = vlaneseq
        %v1364 = vshrl.u32 %v1363, 7
        %v1365 = vsub.s32 4, %v1364
        %v1366 = vrot.slane %v1151, %v1365
        %v1367 = vmul.f32 %v1366, %v1319
        %v1368 = vmul.f32 %v1366, %v1320
        %v1369 = vmul.f32 %v1367, 1.442695
        %v1370 = vpow.pop %v1369
        %v1371 = vmul.f32 %v1368, 1.442695
        %v1372 = vpow.pop %v1371
        %v1373 = vlaneseq
        %v1374 = vshrl.u32 %v1373, 7
        %v1375 = vsub.s32 5, %v1374
        %v1376 = vrot.slane %v1151, %v1375
        %v1377 = vmul.f32 %v1376, %v1319
        %v1378 = vmul.f32 %v1376, %v1320
        %v1379 = vmul.f32 %v1377, 1.442695
        %v1380 = vpow.pop %v1379
        %v1381 = vmul.f32 %v1378, 1.442695
        %v1382 = vpow.pop %v1381
        %v1383 = vlaneseq
        %v1384 = vshrl.u32 %v1383, 7
        %v1385 = vsub.s32 6, %v1384
        %v1386 = vrot.slane %v1151, %v1385
        %v1387 = vmul.f32 %v1386, %v1319
        %v1388 = vmul.f32 %v1386, %v1320
        %v1389 = vmul.f32 %v1387, 1.442695
        %v1390 = vpow.pop %v1389
        %v1391 = vmul.f32 %v1388, 1.442695
        %v1392 = vpow.pop %v1391
        %v1393 = vlaneseq
        %v1394 = vshrl.u32 %v1393, 7
        %v1395 = vsub.s32 7, %v1394
        %v1396 = vrot.slane %v1151, %v1395
        %v1397 = vmul.f32 %v1396, %v1319
        %v1398 = vmul.f32 %v1396, %v1320
        %v1399 = vmul.f32 %v1397, 1.442695
        %v1400 = vpow.pop %v1399
        %v1401 = vmul.f32 %v1398, 1.442695
        %v1402 = vpow.pop %v1401
        %v1403 = vlaneseq
        %v1404 = vshrl.u32 %v1403, 7
        %v1405 = vsub.s32 0, %v1404
        %v1406 = vrot.slane %v1152, %v1405
        %v1407 = vmul.f32 %v1406, %v1319
        %v1408 = vmul.f32 %v1406, %v1320
        %v1409 = vmul.f32 %v1407, 1.442695
        %v1410 = vpow.pop %v1409
        %v1411 = vmul.f32 %v1408, 1.442695
        %v1412 = vpow.pop %v1411
        %v1413 = vlaneseq
        %v1414 = vshrl.u32 %v1413, 7
        %v1415 = vsub.s32 0, %v1414
        %v1416 = vrot.slane %v1321, %v1415
        %1418 = vset.pattern.permute.xlu0 0
        %1419 = vperm.xlu0 %1418, %v1228
        %v1420 = vpop.permute.xlu0 %1419
        %1423 = vset.pattern.permute.xlu0 0
        %1424 = vperm.xlu0 %1423, %v1233
        %v1425 = vpop.permute.xlu0 %1424
        %v1427 = vmul.f32 %v1416, %v1420
        %v1428 = vmul.f32 %v1416, %v1425
        %v1429 = vlaneseq
        %v1430 = vshrl.u32 %v1429, 7
        %v1431 = vsub.s32 1, %v1430
        %v1432 = vrot.slane %v1321, %v1431
        %1433 = vset.pattern.permute.xlu0 1
        %1434 = vperm.xlu0 %1433, %v1228
        %v1435 = vpop.permute.xlu0 %1434
        %1437 = vset.pattern.permute.xlu0 1
        %1438 = vperm.xlu0 %1437, %v1233
        %v1439 = vpop.permute.xlu0 %1438
        %v1441 = vmul.f32 %v1432, %v1435
        %v1442 = vmul.f32 %v1432, %v1439
        %v1443 = vlaneseq
        %v1444 = vshrl.u32 %v1443, 7
        %v1445 = vsub.s32 2, %v1444
        %v1446 = vrot.slane %v1321, %v1445
        %1447 = vset.pattern.permute.xlu0 2
        %1448 = vperm.xlu0 %1447, %v1228
        %v1449 = vpop.permute.xlu0 %1448
        %1451 = vset.pattern.permute.xlu0 2
        %1452 = vperm.xlu0 %1451, %v1233
        %v1453 = vpop.permute.xlu0 %1452
        %v1455 = vmul.f32 %v1446, %v1449
        %v1456 = vmul.f32 %v1446, %v1453
        %v1457 = vlaneseq
        %v1458 = vshrl.u32 %v1457, 7
        %v1459 = vsub.s32 3, %v1458
        %v1460 = vrot.slane %v1321, %v1459
        %1461 = vset.pattern.permute.xlu0 3
        %1462 = vperm.xlu0 %1461, %v1228
        %v1463 = vpop.permute.xlu0 %1462
        %1465 = vset.pattern.permute.xlu0 3
        %1466 = vperm.xlu0 %1465, %v1233
        %v1467 = vpop.permute.xlu0 %1466
        %v1469 = vmul.f32 %v1460, %v1463
        %v1470 = vmul.f32 %v1460, %v1467
        %v1471 = vlaneseq
        %v1472 = vshrl.u32 %v1471, 7
        %v1473 = vsub.s32 4, %v1472
        %v1474 = vrot.slane %v1321, %v1473
        %1475 = vset.pattern.permute.xlu0 4
        %1476 = vperm.xlu0 %1475, %v1228
        %v1477 = vpop.permute.xlu0 %1476
        %1479 = vset.pattern.permute.xlu0 4
        %1480 = vperm.xlu0 %1479, %v1233
        %v1481 = vpop.permute.xlu0 %1480
        %v1483 = vmul.f32 %v1474, %v1477
        %v1484 = vmul.f32 %v1474, %v1481
        %v1485 = vlaneseq
        %v1486 = vshrl.u32 %v1485, 7
        %v1487 = vsub.s32 5, %v1486
        %v1488 = vrot.slane %v1321, %v1487
        %1489 = vset.pattern.permute.xlu0 5
        %1490 = vperm.xlu0 %1489, %v1228
        %v1491 = vpop.permute.xlu0 %1490
        %1493 = vset.pattern.permute.xlu0 5
        %1494 = vperm.xlu0 %1493, %v1233
        %v1495 = vpop.permute.xlu0 %1494
        %v1497 = vmul.f32 %v1488, %v1491
        %v1498 = vmul.f32 %v1488, %v1495
        %v1499 = vlaneseq
        %v1500 = vshrl.u32 %v1499, 7
        %v1501 = vsub.s32 6, %v1500
        %v1502 = vrot.slane %v1321, %v1501
        %1503 = vset.pattern.permute.xlu0 6
        %1504 = vperm.xlu0 %1503, %v1228
        %v1505 = vpop.permute.xlu0 %1504
        %1507 = vset.pattern.permute.xlu0 6
        %1508 = vperm.xlu0 %1507, %v1233
        %v1509 = vpop.permute.xlu0 %1508
        %v1511 = vmul.f32 %v1502, %v1505
        %v1512 = vmul.f32 %v1502, %v1509
        %v1513 = vlaneseq
        %v1514 = vshrl.u32 %v1513, 7
        %v1515 = vsub.s32 7, %v1514
        %v1516 = vrot.slane %v1321, %v1515
        %1517 = vset.pattern.permute.xlu0 7
        %1518 = vperm.xlu0 %1517, %v1228
        %v1519 = vpop.permute.xlu0 %1518
        %1521 = vset.pattern.permute.xlu0 7
        %1522 = vperm.xlu0 %1521, %v1233
        %v1523 = vpop.permute.xlu0 %1522
        %v1525 = vmul.f32 %v1516, %v1519
        %v1526 = vmul.f32 %v1516, %v1523
        %v1527 = vlaneseq
        %v1528 = vshrl.u32 %v1527, 7
        %v1529 = vsub.s32 0, %v1528
        %v1530 = vrot.slane %v1322, %v1529
        %1531 = vset.pattern.permute.xlu0 8
        %1532 = vperm.xlu0 %1531, %v1228
        %v1533 = vpop.permute.xlu0 %1532
        %1535 = vset.pattern.permute.xlu0 8
        %1536 = vperm.xlu0 %1535, %v1233
        %v1537 = vpop.permute.xlu0 %1536
        %v1539 = vmul.f32 %v1530, %v1533
        %v1540 = vmul.f32 %v1530, %v1537
        %v1541 = vmul.f32 %v1330, 0.0
        %v1542 = vmul.f32 %v1332, 0.0
        %v1543 = vadd.f32 %v1541, %v1427
        %v1544 = vadd.f32 %v1542, %v1428
        %1546 = vset.pattern.permute.xlu0 0
        %1547 = vperm.xlu0 %1546, %v1311
        %v1548 = vpop.permute.xlu0 %1547
        %1551 = vset.pattern.permute.xlu0 0
        %1552 = vperm.xlu0 %1551, %v1316
        %v1553 = vpop.permute.xlu0 %1552
        %v1555 = vmul.f32 %v1543, %v1548
        %v1556 = vmul.f32 %v1544, %v1553
        %v1557 = vsel %vm949, %v1555, 0.0
        %v1558 = vsel %vm949, %v1556, 0.0
        %v1559 = vadd.f32 %v1557, %v1558
        %v1560 = vrot.slane %v1559, 4
        %v1561 = vadd.f32 %v1559, %v1560
        %v1562 = vrot.slane %v1561, 2
        %v1563 = vadd.f32 %v1561, %v1562
        %v1564 = vrot.slane %v1563, 1
        %v1565 = vadd.f32 %v1563, %v1564
        %vm1566 = vcmask 516096
        %1567 = vst.msk [vmem:[#allocation2] sm:$0x1] %vm1566, %v1565
        %v1568 = vmul.f32 %v1340, %v1543
        %v1569 = vmul.f32 %v1342, %v1544
        %v1570 = vadd.f32 %v1568, %v1441
        %v1571 = vadd.f32 %v1569, %v1442
        %1572 = vset.pattern.permute.xlu0 1
        %1573 = vperm.xlu0 %1572, %v1311
        %v1574 = vpop.permute.xlu0 %1573
        %1576 = vset.pattern.permute.xlu0 1
        %1577 = vperm.xlu0 %1576, %v1316
        %v1578 = vpop.permute.xlu0 %1577
        %v1580 = vmul.f32 %v1570, %v1574
        %v1581 = vmul.f32 %v1571, %v1578
        %v1582 = vsel %vm949, %v1580, 0.0
        %v1583 = vsel %vm949, %v1581, 0.0
        %v1584 = vadd.f32 %v1582, %v1583
        %v1585 = vrot.slane %v1584, 4
        %v1586 = vadd.f32 %v1584, %v1585
        %v1587 = vrot.slane %v1586, 2
        %v1588 = vadd.f32 %v1586, %v1587
        %v1589 = vrot.slane %v1588, 1
        %v1590 = vadd.f32 %v1588, %v1589
        %1591 = vst.msk [vmem:[#allocation2 + $0x1] sm:$0x1] %vm1566, %v1590
        %v1592 = vmul.f32 %v1350, %v1570
        %v1593 = vmul.f32 %v1352, %v1571
        %v1594 = vadd.f32 %v1592, %v1455
        %v1595 = vadd.f32 %v1593, %v1456
        %1596 = vset.pattern.permute.xlu0 2
        %1597 = vperm.xlu0 %1596, %v1311
        %v1598 = vpop.permute.xlu0 %1597
        %1600 = vset.pattern.permute.xlu0 2
        %1601 = vperm.xlu0 %1600, %v1316
        %v1602 = vpop.permute.xlu0 %1601
        %v1604 = vmul.f32 %v1594, %v1598
        %v1605 = vmul.f32 %v1595, %v1602
        %v1606 = vsel %vm949, %v1604, 0.0
        %v1607 = vsel %vm949, %v1605, 0.0
        %v1608 = vadd.f32 %v1606, %v1607
        %v1609 = vrot.slane %v1608, 4
        %v1610 = vadd.f32 %v1608, %v1609
        %v1611 = vrot.slane %v1610, 2
        %v1612 = vadd.f32 %v1610, %v1611
        %v1613 = vrot.slane %v1612, 1
        %v1614 = vadd.f32 %v1612, %v1613
        %1615 = vst.msk [vmem:[#allocation2 + $0x2] sm:$0x1] %vm1566, %v1614
        %v1616 = vmul.f32 %v1360, %v1594
        %v1617 = vmul.f32 %v1362, %v1595
        %v1618 = vadd.f32 %v1616, %v1469
        %v1619 = vadd.f32 %v1617, %v1470
        %1620 = vset.pattern.permute.xlu0 3
        %1621 = vperm.xlu0 %1620, %v1311
        %v1622 = vpop.permute.xlu0 %1621
        %1624 = vset.pattern.permute.xlu0 3
        %1625 = vperm.xlu0 %1624, %v1316
        %v1626 = vpop.permute.xlu0 %1625
        %v1628 = vmul.f32 %v1618, %v1622
        %v1629 = vmul.f32 %v1619, %v1626
        %v1630 = vsel %vm949, %v1628, 0.0
        %v1631 = vsel %vm949, %v1629, 0.0
        %v1632 = vadd.f32 %v1630, %v1631
        %v1633 = vrot.slane %v1632, 4
        %v1634 = vadd.f32 %v1632, %v1633
        %v1635 = vrot.slane %v1634, 2
        %v1636 = vadd.f32 %v1634, %v1635
        %v1637 = vrot.slane %v1636, 1
        %v1638 = vadd.f32 %v1636, %v1637
        %1639 = vst.msk [vmem:[#allocation2 + $0x3] sm:$0x1] %vm1566, %v1638
        %v1640 = vmul.f32 %v1370, %v1618
        %v1641 = vmul.f32 %v1372, %v1619
        %v1642 = vadd.f32 %v1640, %v1483
        %v1643 = vadd.f32 %v1641, %v1484
        %1644 = vset.pattern.permute.xlu0 4
        %1645 = vperm.xlu0 %1644, %v1311
        %v1646 = vpop.permute.xlu0 %1645
        %1648 = vset.pattern.permute.xlu0 4
        %1649 = vperm.xlu0 %1648, %v1316
        %v1650 = vpop.permute.xlu0 %1649
        %v1652 = vmul.f32 %v1642, %v1646
        %v1653 = vmul.f32 %v1643, %v1650
        %v1654 = vsel %vm949, %v1652, 0.0
        %v1655 = vsel %vm949, %v1653, 0.0
        %v1656 = vadd.f32 %v1654, %v1655
        %v1657 = vrot.slane %v1656, 4
        %v1658 = vadd.f32 %v1656, %v1657
        %v1659 = vrot.slane %v1658, 2
        %v1660 = vadd.f32 %v1658, %v1659
        %v1661 = vrot.slane %v1660, 1
        %v1662 = vadd.f32 %v1660, %v1661
        %1663 = vst.msk [vmem:[#allocation2 + $0x4] sm:$0x1] %vm1566, %v1662
        %v1664 = vmul.f32 %v1380, %v1642
        %v1665 = vmul.f32 %v1382, %v1643
        %v1666 = vadd.f32 %v1664, %v1497
        %v1667 = vadd.f32 %v1665, %v1498
        %1668 = vset.pattern.permute.xlu0 5
        %1669 = vperm.xlu0 %1668, %v1311
        %v1670 = vpop.permute.xlu0 %1669
        %1672 = vset.pattern.permute.xlu0 5
        %1673 = vperm.xlu0 %1672, %v1316
        %v1674 = vpop.permute.xlu0 %1673
        %v1676 = vmul.f32 %v1666, %v1670
        %v1677 = vmul.f32 %v1667, %v1674
        %v1678 = vsel %vm949, %v1676, 0.0
        %v1679 = vsel %vm949, %v1677, 0.0
        %v1680 = vadd.f32 %v1678, %v1679
        %v1681 = vrot.slane %v1680, 4
        %v1682 = vadd.f32 %v1680, %v1681
        %v1683 = vrot.slane %v1682, 2
        %v1684 = vadd.f32 %v1682, %v1683
        %v1685 = vrot.slane %v1684, 1
        %v1686 = vadd.f32 %v1684, %v1685
        %1687 = vst.msk [vmem:[#allocation2 + $0x5] sm:$0x1] %vm1566, %v1686
        %v1688 = vmul.f32 %v1390, %v1666
        %v1689 = vmul.f32 %v1392, %v1667
        %v1690 = vadd.f32 %v1688, %v1511
        %v1691 = vadd.f32 %v1689, %v1512
        %1692 = vset.pattern.permute.xlu0 6
        %1693 = vperm.xlu0 %1692, %v1311
        %v1694 = vpop.permute.xlu0 %1693
        %1696 = vset.pattern.permute.xlu0 6
        %1697 = vperm.xlu0 %1696, %v1316
        %v1698 = vpop.permute.xlu0 %1697
        %v1700 = vmul.f32 %v1690, %v1694
        %v1701 = vmul.f32 %v1691, %v1698
        %v1702 = vsel %vm949, %v1700, 0.0
        %v1703 = vsel %vm949, %v1701, 0.0
        %v1704 = vadd.f32 %v1702, %v1703
        %v1705 = vrot.slane %v1704, 4
        %v1706 = vadd.f32 %v1704, %v1705
        %v1707 = vrot.slane %v1706, 2
        %v1708 = vadd.f32 %v1706, %v1707
        %v1709 = vrot.slane %v1708, 1
        %v1710 = vadd.f32 %v1708, %v1709
        %1711 = vst.msk [vmem:[#allocation2 + $0x6] sm:$0x1] %vm1566, %v1710
        %v1712 = vmul.f32 %v1400, %v1690
        %v1713 = vmul.f32 %v1402, %v1691
        %v1714 = vadd.f32 %v1712, %v1525
        %v1715 = vadd.f32 %v1713, %v1526
        %1716 = vset.pattern.permute.xlu0 7
        %1717 = vperm.xlu0 %1716, %v1311
        %v1718 = vpop.permute.xlu0 %1717
        %1720 = vset.pattern.permute.xlu0 7
        %1721 = vperm.xlu0 %1720, %v1316
        %v1722 = vpop.permute.xlu0 %1721
        %v1724 = vmul.f32 %v1714, %v1718
        %v1725 = vmul.f32 %v1715, %v1722
        %v1726 = vsel %vm949, %v1724, 0.0
        %v1727 = vsel %vm949, %v1725, 0.0
        %v1728 = vadd.f32 %v1726, %v1727
        %v1729 = vrot.slane %v1728, 4
        %v1730 = vadd.f32 %v1728, %v1729
        %v1731 = vrot.slane %v1730, 2
        %v1732 = vadd.f32 %v1730, %v1731
        %v1733 = vrot.slane %v1732, 1
        %v1734 = vadd.f32 %v1732, %v1733
        %1735 = vst.msk [vmem:[#allocation2 + $0x7] sm:$0x1] %vm1566, %v1734
        %v1736 = vmul.f32 %v1410, %v1714
        %v1737 = vmul.f32 %v1412, %v1715
        %v1738 = vadd.f32 %v1736, %v1539
        %v1739 = vadd.f32 %v1737, %v1540
        %1740 = vset.pattern.permute.xlu0 8
        %1741 = vperm.xlu0 %1740, %v1311
        %v1742 = vpop.permute.xlu0 %1741
        %1744 = vset.pattern.permute.xlu0 8
        %1745 = vperm.xlu0 %1744, %v1316
        %v1746 = vpop.permute.xlu0 %1745
        %v1748 = vmul.f32 %v1738, %v1742
        %v1749 = vmul.f32 %v1739, %v1746
        %v1750 = vsel %vm949, %v1748, 0.0
        %v1751 = vsel %vm949, %v1749, 0.0
        %v1752 = vadd.f32 %v1750, %v1751
        %v1753 = vrot.slane %v1752, 4
        %v1754 = vadd.f32 %v1752, %v1753
        %v1755 = vrot.slane %v1754, 2
        %v1756 = vadd.f32 %v1754, %v1755
        %v1757 = vrot.slane %v1756, 1
        %v1758 = vadd.f32 %v1756, %v1757
        %1759 = vst.msk [vmem:[#allocation2 + $0x8] sm:$0x1] %vm1566, %v1758
        %v1760 = vld [vmem:[#allocation2] sm:$0xff]
        %v1761 = vld [vmem:[#allocation2 + $0x8] sm:$0x1]
        %v1762 = vld [vmem:[%s14] sm:$0x1]
        %v1764 = vlaneseq
        %v1765 = vshrl.u32 %v1764, 7
        %v1766 = vsub.s32 0, %v1765
        %v1767 = vrot.slane %v1762, %v1766
        %v1769 = vmul.f32 %v1767, %v939
        %v1770 = vmul.f32 %v1767, %v940
        %v1771 = vadd.f32 %v1760, %v1769
        %v1772 = vadd.f32 %v1761, %v1770
        %v1773 = vxor.u32 %v844, 2147483648
        %v1774 = vxor.u32 %v849, 2147483648
        %v1775 = vmul.f32 %v1773, 1.442695
        %v1776 = vpow.pop %v1775
        %v1777 = vmul.f32 %v1774, 1.442695
        %v1778 = vpow.pop %v1777
        %v1779 = vadd.f32 %v1776, 1.0
        %v1780 = vadd.f32 %v1778, 1.0
        %v1781 = vrcp.pop %v1779
        %v1782 = vmul.f32 1.0, %v1781
        %v1783 = vrcp.pop %v1780
        %v1784 = vmul.f32 1.0, %v1783
        %v1785 = vmul.f32 %v844, %v1782
        %v1786 = vmul.f32 %v849, %v1784
        %v1787 = vmul.f32 %v1771, %v1785
        %v1788 = vmul.f32 %v1772, %v1786
        %v1789 = vld [vmem:[%s15] sm:$0xff]
        %v1790 = vld [vmem:[%s15 + $0x8] sm:$0xff]
        %v1791 = vld [vmem:[%s15 + $0x10] sm:$0xff]
        %v1792 = vld [vmem:[%s15 + $0x18] sm:$0xff]
        %v1793 = vld [vmem:[%s15 + $0x20] sm:$0xff]
        %v1794 = vld [vmem:[%s15 + $0x28] sm:$0xff]
        %v1795 = vld [vmem:[%s15 + $0x30] sm:$0xff]
        %v1796 = vld [vmem:[%s15 + $0x38] sm:$0xff]
        %v1798 = vsel %vm949, %v1787, 0
        %v1801 = vsel %vm949, %v1788, 0
        %1803 = vmatprep.subr.mxu0 0.0
        %1804 = vmatpush1.msra.mxu0 %v1789
        %1805 = vmatprep.subr.mxu0 0.0
        %1806 = vmatpush1.msra.mxu0 %v1790
        %1807 = vmatprep.subr.mxu0 0.0
        %1808 = vmatpush1.msra.mxu0 %v1791
        %1809 = vmatprep.subr.mxu0 0.0
        %1810 = vmatpush1.msra.mxu0 %v1792
        %1811 = vmatprep.subr.mxu0 0.0
        %1812 = vmatpush1.msra.mxu0 %v1793
        %1813 = vmatprep.subr.mxu0 0.0
        %1814 = vmatpush1.msra.mxu0 %v1794
        %1815 = vmatprep.subr.mxu0 0.0
        %1816 = vmatpush1.msra.mxu0 %v1795
        %1817 = vmatprep.subr.mxu0 0.0
        %1818 = vmatpush1.msra.mxu0 %v1796
        %1819 = vmatprep.subr.mxu0 0.0
        %1820 = vmatpush1.msra.mxu0 0.0
        %1821 = vmatprep.subr.mxu0 0.0
        %1822 = vmatpush1.msra.mxu0 0.0
        %1823 = vmatprep.subr.mxu0 0.0
        %1824 = vmatpush1.msra.mxu0 0.0
        %1825 = vmatprep.subr.mxu0 0.0
        %1826 = vmatpush1.msra.mxu0 0.0
        %1827 = vmatprep.subr.mxu0 0.0
        %1828 = vmatpush1.msra.mxu0 0.0
        %1829 = vmatprep.subr.mxu0 0.0
        %1830 = vmatpush1.msra.mxu0 0.0
        %1831 = vmatprep.subr.mxu0 0.0
        %1832 = vmatpush1.msra.mxu0 0.0
        %1833 = vmatprep.subr.mxu0 0.0
        %1834 = vmatpush1.msra.mxu0 0.0
        %1835 = vmatprep.subr.mxu0 0.0
        %1836 = vmatpush1.msra.mxu0 0.0
        %1837 = vmatprep.subr.mxu0 0.0
        %1838 = vmatpush1.msra.mxu0 0.0
        %1839 = vmatprep.subr.mxu0 0.0
        %1840 = vmatpush1.msra.mxu0 0.0
        %1841 = vmatprep.subr.mxu0 0.0
        %1842 = vmatpush1.msra.mxu0 0.0
        %1843 = vmatprep.subr.mxu0 0.0
        %1844 = vmatpush1.msra.mxu0 0.0
        %1845 = vmatprep.subr.mxu0 0.0
        %1846 = vmatpush1.msra.mxu0 0.0
        %1847 = vmatprep.subr.mxu0 0.0
        %1848 = vmatpush1.msra.mxu0 0.0
        %1849 = vmatprep.subr.mxu0 0.0
        %1850 = vmatpush1.msra.mxu0 0.0
        %1851 = vmatprep.subr.mxu0 0.0
        %1852 = vmatpush1.msra.mxu0 0.0
        %1853 = vmatprep.subr.mxu0 0.0
        %1854 = vmatpush1.msra.mxu0 0.0
        %1855 = vmatprep.subr.mxu0 0.0
        %1856 = vmatpush1.msra.mxu0 0.0
        %1857 = vmatprep.subr.mxu0 0.0
        %1858 = vmatpush1.msra.mxu0 0.0
        %1859 = vmatprep.subr.mxu0 0.0
        %1860 = vmatpush1.msra.mxu0 0.0
        %1861 = vmatprep.subr.mxu0 0.0
        %1862 = vmatpush1.msra.mxu0 0.0
        %1863 = vmatprep.subr.mxu0 0.0
        %1864 = vmatpush1.msra.mxu0 0.0
        %1865 = vmatprep.subr.mxu0 0.0
        %1866 = vmatpush1.msra.mxu0 0.0
        %1867 = vmatprep.mubr.f32.mxu0 0.0
        %1868 = vmatmul.mubr.f32.gmra.mrb[0].mxu0 %v1798
        %v1869 = vpop.f32.mrb[0].mxu0
        %v1870 = vadd.f32 0.0, %v1869
        %v1871 = vpop.f32.mrb[0].mxu0
        %1872 = vmatprep.mubr.f32.mxu0 0.0
        %1873 = vmatmul.mubr.f32.gmra.mrb[0].mxu0 %v1801
        %v1874 = vpop.f32.mrb[0].mxu0
        %v1875 = vadd.f32 0.0, %v1874
        %v1876 = vpop.f32.mrb[0].mxu0
        %1877 = vdwg.mxu0
        %v1878 = vmul.f32 %v1870, %v1870
        %v1879 = vmul.f32 %v1875, %v1875
        %v1880 = vsel %vm691, %v1878, 0.0
        %1881 = vadd.xlane.f32.xlu0 %v1880
        %v1882 = vpop.xlane.xlu0 %1881
        %vm1883 = vcmask 253952
        %v1884 = vsel %vm1883, %v1879, 0.0
        %1885 = vadd.xlane.f32.xlu0 %v1884
        %v1886 = vpop.xlane.xlu0 %1885
        %v1887 = vrcp.pop 32.0
        %v1888 = vmul.f32 %v1882, %v1887
        %v1889 = vmul.f32 %v1886, %v1887
        %v1890 = vadd.f32 %v1888, 1.1920929e-07
        %v1891 = vadd.f32 %v1889, 1.1920929e-07
        %v1892 = vrsqrt.pop %v1890
        %v1893 = vrsqrt.pop %v1891
        %v1894 = vmul.f32 %v1870, %v1892
        %v1895 = vmul.f32 %v1875, %v1893
        %v1896 = vld [vmem:[%s16] sm:$0x1]
        %v1898 = vlaneseq
        %v1899 = vshrl.u32 %v1898, 7
        %v1900 = vsub.s32 0, %v1899
        %v1901 = vrot.slane %v1896, %v1900
        %v1903 = vmul.f32 %v1894, %v1901
        %v1904 = vmul.f32 %v1895, %v1901
        %s1905 = scalar_lea.vmem %s4, 32
        %v1906 = vld [vmem:[%s1905] sm:$0xff]
        %v1907 = vld [vmem:[%s1905 + $0x8] sm:$0xff]
        %v1908 = vld [vmem:[%s1905 + $0x10] sm:$0xff]
        %v1909 = vld [vmem:[%s1905 + $0x18] sm:$0xff]
        %v1911 = vsel %vm691, %v1903, 0
        %v1914 = vsel %vm691, %v1904, 0
        %1916 = vmatprep.subr.mxu0 0.0
        %1917 = vmatpush1.msra.mxu0 %v1906
        %1918 = vmatprep.subr.mxu0 0.0
        %1919 = vmatpush1.msra.mxu0 %v1907
        %1920 = vmatprep.subr.mxu0 0.0
        %1921 = vmatpush1.msra.mxu0 %v1908
        %1922 = vmatprep.subr.mxu0 0.0
        %1923 = vmatpush1.msra.mxu0 %v1909
        %1924 = vmatprep.subr.mxu0 0.0
        %1925 = vmatpush1.msra.mxu0 0.0
        %1926 = vmatprep.subr.mxu0 0.0
        %1927 = vmatpush1.msra.mxu0 0.0
        %1928 = vmatprep.subr.mxu0 0.0
        %1929 = vmatpush1.msra.mxu0 0.0
        %1930 = vmatprep.subr.mxu0 0.0
        %1931 = vmatpush1.msra.mxu0 0.0
        %1932 = vmatprep.subr.mxu0 0.0
        %1933 = vmatpush1.msra.mxu0 0.0
        %1934 = vmatprep.subr.mxu0 0.0
        %1935 = vmatpush1.msra.mxu0 0.0
        %1936 = vmatprep.subr.mxu0 0.0
        %1937 = vmatpush1.msra.mxu0 0.0
        %1938 = vmatprep.subr.mxu0 0.0
        %1939 = vmatpush1.msra.mxu0 0.0
        %1940 = vmatprep.subr.mxu0 0.0
        %1941 = vmatpush1.msra.mxu0 0.0
        %1942 = vmatprep.subr.mxu0 0.0
        %1943 = vmatpush1.msra.mxu0 0.0
        %1944 = vmatprep.subr.mxu0 0.0
        %1945 = vmatpush1.msra.mxu0 0.0
        %1946 = vmatprep.subr.mxu0 0.0
        %1947 = vmatpush1.msra.mxu0 0.0
        %1948 = vmatprep.subr.mxu0 0.0
        %1949 = vmatpush1.msra.mxu0 0.0
        %1950 = vmatprep.subr.mxu0 0.0
        %1951 = vmatpush1.msra.mxu0 0.0
        %1952 = vmatprep.subr.mxu0 0.0
        %1953 = vmatpush1.msra.mxu0 0.0
        %1954 = vmatprep.subr.mxu0 0.0
        %1955 = vmatpush1.msra.mxu0 0.0
        %1956 = vmatprep.subr.mxu0 0.0
        %1957 = vmatpush1.msra.mxu0 0.0
        %1958 = vmatprep.subr.mxu0 0.0
        %1959 = vmatpush1.msra.mxu0 0.0
        %1960 = vmatprep.subr.mxu0 0.0
        %1961 = vmatpush1.msra.mxu0 0.0
        %1962 = vmatprep.subr.mxu0 0.0
        %1963 = vmatpush1.msra.mxu0 0.0
        %1964 = vmatprep.subr.mxu0 0.0
        %1965 = vmatpush1.msra.mxu0 0.0
        %1966 = vmatprep.subr.mxu0 0.0
        %1967 = vmatpush1.msra.mxu0 0.0
        %1968 = vmatprep.subr.mxu0 0.0
        %1969 = vmatpush1.msra.mxu0 0.0
        %1970 = vmatprep.subr.mxu0 0.0
        %1971 = vmatpush1.msra.mxu0 0.0
        %1972 = vmatprep.subr.mxu0 0.0
        %1973 = vmatpush1.msra.mxu0 0.0
        %1974 = vmatprep.subr.mxu0 0.0
        %1975 = vmatpush1.msra.mxu0 0.0
        %1976 = vmatprep.subr.mxu0 0.0
        %1977 = vmatpush1.msra.mxu0 0.0
        %1978 = vmatprep.subr.mxu0 0.0
        %1979 = vmatpush1.msra.mxu0 0.0
        %1980 = vmatprep.mubr.f32.mxu0 0.0
        %1981 = vmatmul.mubr.f32.gmra.mrb[0].mxu0 %v1911
        %v1982 = vpop.f32.mrb[0].mxu0
        %v1983 = vadd.f32 0.0, %v1982
        %v1984 = vpop.f32.mrb[0].mxu0
        %1985 = vmatprep.mubr.f32.mxu0 0.0
        %1986 = vmatmul.mubr.f32.gmra.mrb[0].mxu0 %v1914
        %v1987 = vpop.f32.mrb[0].mxu0
        %v1988 = vadd.f32 0.0, %v1987
        %v1989 = vpop.f32.mrb[0].mxu0
        %1990 = vdwg.mxu0
        %s1991 = scalar_lea.vmem %s5, 32
        %v1992 = vld [vmem:[%s1991] sm:$0xff]
        %v1993 = vld [vmem:[%s1991 + $0x8] sm:$0xff]
        %v1994 = vld [vmem:[%s1991 + $0x10] sm:$0xff]
        %v1995 = vld [vmem:[%s1991 + $0x18] sm:$0xff]
        %1996 = vmatprep.subr.mxu0 0.0
        %1997 = vmatpush1.msra.mxu0 %v1992
        %1998 = vmatprep.subr.mxu0 0.0
        %1999 = vmatpush1.msra.mxu0 %v1993
        %2000 = vmatprep.subr.mxu0 0.0
        %2001 = vmatpush1.msra.mxu0 %v1994
        %2002 = vmatprep.subr.mxu0 0.0
        %2003 = vmatpush1.msra.mxu0 %v1995
        %2004 = vmatprep.subr.mxu0 0.0
        %2005 = vmatpush1.msra.mxu0 0.0
        %2006 = vmatprep.subr.mxu0 0.0
        %2007 = vmatpush1.msra.mxu0 0.0
        %2008 = vmatprep.subr.mxu0 0.0
        %2009 = vmatpush1.msra.mxu0 0.0
        %2010 = vmatprep.subr.mxu0 0.0
        %2011 = vmatpush1.msra.mxu0 0.0
        %2012 = vmatprep.subr.mxu0 0.0
        %2013 = vmatpush1.msra.mxu0 0.0
        %2014 = vmatprep.subr.mxu0 0.0
        %2015 = vmatpush1.msra.mxu0 0.0
        %2016 = vmatprep.subr.mxu0 0.0
        %2017 = vmatpush1.msra.mxu0 0.0
        %2018 = vmatprep.subr.mxu0 0.0
        %2019 = vmatpush1.msra.mxu0 0.0
        %2020 = vmatprep.subr.mxu0 0.0
        %2021 = vmatpush1.msra.mxu0 0.0
        %2022 = vmatprep.subr.mxu0 0.0
        %2023 = vmatpush1.msra.mxu0 0.0
        %2024 = vmatprep.subr.mxu0 0.0
        %2025 = vmatpush1.msra.mxu0 0.0
        %2026 = vmatprep.subr.mxu0 0.0
        %2027 = vmatpush1.msra.mxu0 0.0
        %2028 = vmatprep.subr.mxu0 0.0
        %2029 = vmatpush1.msra.mxu0 0.0
        %2030 = vmatprep.subr.mxu0 0.0
        %2031 = vmatpush1.msra.mxu0 0.0
        %2032 = vmatprep.subr.mxu0 0.0
        %2033 = vmatpush1.msra.mxu0 0.0
        %2034 = vmatprep.subr.mxu0 0.0
        %2035 = vmatpush1.msra.mxu0 0.0
        %2036 = vmatprep.subr.mxu0 0.0
        %2037 = vmatpush1.msra.mxu0 0.0
        %2038 = vmatprep.subr.mxu0 0.0
        %2039 = vmatpush1.msra.mxu0 0.0
        %2040 = vmatprep.subr.mxu0 0.0
        %2041 = vmatpush1.msra.mxu0 0.0
        %2042 = vmatprep.subr.mxu0 0.0
        %2043 = vmatpush1.msra.mxu0 0.0
        %2044 = vmatprep.subr.mxu0 0.0
        %2045 = vmatpush1.msra.mxu0 0.0
        %2046 = vmatprep.subr.mxu0 0.0
        %2047 = vmatpush1.msra.mxu0 0.0
        %2048 = vmatprep.subr.mxu0 0.0
        %2049 = vmatpush1.msra.mxu0 0.0
        %2050 = vmatprep.subr.mxu0 0.0
        %2051 = vmatpush1.msra.mxu0 0.0
        %2052 = vmatprep.subr.mxu0 0.0
        %2053 = vmatpush1.msra.mxu0 0.0
        %2054 = vmatprep.subr.mxu0 0.0
        %2055 = vmatpush1.msra.mxu0 0.0
        %2056 = vmatprep.subr.mxu0 0.0
        %2057 = vmatpush1.msra.mxu0 0.0
        %2058 = vmatprep.subr.mxu0 0.0
        %2059 = vmatpush1.msra.mxu0 0.0
        %2060 = vmatprep.mubr.f32.mxu0 0.0
        %2061 = vmatmul.mubr.f32.gmra.mrb[0].mxu0 %v1911
        %v2062 = vpop.f32.mrb[0].mxu0
        %v2063 = vadd.f32 0.0, %v2062
        %v2064 = vpop.f32.mrb[0].mxu0
        %2065 = vmatprep.mubr.f32.mxu0 0.0
        %2066 = vmatmul.mubr.f32.gmra.mrb[0].mxu0 %v1914
        %v2067 = vpop.f32.mrb[0].mxu0
        %v2068 = vadd.f32 0.0, %v2067
        %v2069 = vpop.f32.mrb[0].mxu0
        %2070 = vdwg.mxu0
        %s2071 = scalar_lea.vmem %s6, 4
        %v2072 = vld [vmem:[%s2071] sm:$0xf]
        %v2075 = vrot.slane %v1983, 5
        %v2076 = vrot.slane %v1988, 5
        %v2077 = vsel %vm855, %v2075, %v2076
        %v2080 = vsel %vm855, 0.0, %v2075
        %v2081 = vlaneseq
        %v2082 = vshrl.u32 %v2081, 7
        %v2083 = vsub.s32 0, %v2082
        %v2084 = vrot.slane %v2072, %v2083
        %v2085 = vmul.f32 %v2080, %v2084
        %v2086 = vmul.f32 %v2077, %v2084
        %v2087 = vadd.f32 %v2085, 0.0
        %v2088 = vadd.f32 %v2086, 0.0
        %v2089 = vlaneseq
        %v2090 = vshrl.u32 %v2089, 7
        %v2091 = vsub.s32 1, %v2090
        %v2092 = vrot.slane %v2072, %v2091
        %v2093 = vmul.f32 %v2080, %v2092
        %v2094 = vmul.f32 %v2077, %v2092
        %v2097 = vrot.slane %v2093, 1
        %v2098 = vrot.slane %v2094, 1
        %v2099 = vsel %vm878, %v2097, %v2098
        %v2102 = vadd.f32 %v2087, %v2099
        %v2103 = vadd.f32 %v2088, %v2098
        %v2104 = vlaneseq
        %v2105 = vshrl.u32 %v2104, 7
        %v2106 = vsub.s32 2, %v2105
        %v2107 = vrot.slane %v2072, %v2106
        %v2108 = vmul.f32 %v2080, %v2107
        %v2109 = vmul.f32 %v2077, %v2107
        %v2112 = vrot.slane %v2108, 2
        %v2113 = vrot.slane %v2109, 2
        %v2114 = vsel %vm894, %v2112, %v2113
        %v2117 = vadd.f32 %v2102, %v2114
        %v2118 = vadd.f32 %v2103, %v2113
        %v2119 = vlaneseq
        %v2120 = vshrl.u32 %v2119, 7
        %v2121 = vsub.s32 3, %v2120
        %v2122 = vrot.slane %v2072, %v2121
        %v2123 = vmul.f32 %v2080, %v2122
        %v2124 = vmul.f32 %v2077, %v2122
        %v2127 = vrot.slane %v2123, 3
        %v2128 = vrot.slane %v2124, 3
        %v2129 = vsel %vm910, %v2127, %v2128
        %v2132 = vadd.f32 %v2117, %v2129
        %v2133 = vadd.f32 %v2118, %v2128
        %s2134 = scalar_lea.vmem %s7, 1
        %v2135 = vld [vmem:[%s2134] sm:$0x1]
        %v2137 = vlaneseq
        %v2138 = vshrl.u32 %v2137, 7
        %v2139 = vsub.s32 0, %v2138
        %v2140 = vrot.slane %v2135, %v2139
        %v2142 = vadd.f32 %v2132, %v2140
        %v2143 = vadd.f32 %v2133, %v2140
        %v2144 = vxor.u32 %v2142, 2147483648
        %v2145 = vxor.u32 %v2143, 2147483648
        %v2146 = vmul.f32 %v2144, 1.442695
        %v2147 = vpow.pop %v2146
        %v2148 = vmul.f32 %v2145, 1.442695
        %v2149 = vpow.pop %v2148
        %v2150 = vadd.f32 %v2147, 1.0
        %v2151 = vadd.f32 %v2149, 1.0
        %v2152 = vrcp.pop %v2150
        %v2153 = vmul.f32 1.0, %v2152
        %v2154 = vrcp.pop %v2151
        %v2155 = vmul.f32 1.0, %v2154
        %v2156 = vmul.f32 %v2142, %v2153
        %v2157 = vmul.f32 %v2143, %v2155
        %s2158 = scalar_lea.vmem %s8, 64
        %v2159 = vld [vmem:[%s2158] sm:$0xff]
        %v2160 = vld [vmem:[%s2158 + $0x8] sm:$0xff]
        %v2161 = vld [vmem:[%s2158 + $0x10] sm:$0xff]
        %v2162 = vld [vmem:[%s2158 + $0x18] sm:$0xff]
        %v2163 = vld [vmem:[%s2158 + $0x20] sm:$0xff]
        %v2164 = vld [vmem:[%s2158 + $0x28] sm:$0xff]
        %v2165 = vld [vmem:[%s2158 + $0x30] sm:$0xff]
        %v2166 = vld [vmem:[%s2158 + $0x38] sm:$0xff]
        %v2168 = vsel %vm949, %v2156, 0
        %v2171 = vsel %vm949, %v2157, 0
        %2173 = vmatprep.subr.mxu0 0.0
        %2174 = vmatpush1.msra.mxu0 %v2159
        %2175 = vmatprep.subr.mxu0 0.0
        %2176 = vmatpush1.msra.mxu0 %v2160
        %2177 = vmatprep.subr.mxu0 0.0
        %2178 = vmatpush1.msra.mxu0 %v2161
        %2179 = vmatprep.subr.mxu0 0.0
        %2180 = vmatpush1.msra.mxu0 %v2162
        %2181 = vmatprep.subr.mxu0 0.0
        %2182 = vmatpush1.msra.mxu0 %v2163
        %2183 = vmatprep.subr.mxu0 0.0
        %2184 = vmatpush1.msra.mxu0 %v2164
        %2185 = vmatprep.subr.mxu0 0.0
        %2186 = vmatpush1.msra.mxu0 %v2165
        %2187 = vmatprep.subr.mxu0 0.0
        %2188 = vmatpush1.msra.mxu0 %v2166
        %2189 = vmatprep.subr.mxu0 0.0
        %2190 = vmatpush1.msra.mxu0 0.0
        %2191 = vmatprep.subr.mxu0 0.0
        %2192 = vmatpush1.msra.mxu0 0.0
        %2193 = vmatprep.subr.mxu0 0.0
        %2194 = vmatpush1.msra.mxu0 0.0
        %2195 = vmatprep.subr.mxu0 0.0
        %2196 = vmatpush1.msra.mxu0 0.0
        %2197 = vmatprep.subr.mxu0 0.0
        %2198 = vmatpush1.msra.mxu0 0.0
        %2199 = vmatprep.subr.mxu0 0.0
        %2200 = vmatpush1.msra.mxu0 0.0
        %2201 = vmatprep.subr.mxu0 0.0
        %2202 = vmatpush1.msra.mxu0 0.0
        %2203 = vmatprep.subr.mxu0 0.0
        %2204 = vmatpush1.msra.mxu0 0.0
        %2205 = vmatprep.subr.mxu0 0.0
        %2206 = vmatpush1.msra.mxu0 0.0
        %2207 = vmatprep.subr.mxu0 0.0
        %2208 = vmatpush1.msra.mxu0 0.0
        %2209 = vmatprep.subr.mxu0 0.0
        %2210 = vmatpush1.msra.mxu0 0.0
        %2211 = vmatprep.subr.mxu0 0.0
        %2212 = vmatpush1.msra.mxu0 0.0
        %2213 = vmatprep.subr.mxu0 0.0
        %2214 = vmatpush1.msra.mxu0 0.0
        %2215 = vmatprep.subr.mxu0 0.0
        %2216 = vmatpush1.msra.mxu0 0.0
        %2217 = vmatprep.subr.mxu0 0.0
        %2218 = vmatpush1.msra.mxu0 0.0
        %2219 = vmatprep.subr.mxu0 0.0
        %2220 = vmatpush1.msra.mxu0 0.0
        %2221 = vmatprep.subr.mxu0 0.0
        %2222 = vmatpush1.msra.mxu0 0.0
        %2223 = vmatprep.subr.mxu0 0.0
        %2224 = vmatpush1.msra.mxu0 0.0
        %2225 = vmatprep.subr.mxu0 0.0
        %2226 = vmatpush1.msra.mxu0 0.0
        %2227 = vmatprep.subr.mxu0 0.0
        %2228 = vmatpush1.msra.mxu0 0.0
        %2229 = vmatprep.subr.mxu0 0.0
        %2230 = vmatpush1.msra.mxu0 0.0
        %2231 = vmatprep.subr.mxu0 0.0
        %2232 = vmatpush1.msra.mxu0 0.0
        %2233 = vmatprep.subr.mxu0 0.0
        %2234 = vmatpush1.msra.mxu0 0.0
        %2235 = vmatprep.subr.mxu0 0.0
        %2236 = vmatpush1.msra.mxu0 0.0
        %2237 = vmatprep.mubr.f32.mxu0 0.0
        %2238 = vmatmul.mubr.f32.gmra.mrb[0].mxu0 %v2168
        %v2239 = vpop.f32.mrb[0].mxu0
        %v2240 = vadd.f32 0.0, %v2239
        %v2241 = vpop.f32.mrb[0].mxu0
        %2242 = vmatprep.mubr.f32.mxu0 0.0
        %2243 = vmatmul.mubr.f32.gmra.mrb[0].mxu0 %v2171
        %v2244 = vpop.f32.mrb[0].mxu0
        %v2245 = vadd.f32 0.0, %v2244
        %v2246 = vpop.f32.mrb[0].mxu0
        %2247 = vdwg.mxu0
        %s2248 = scalar_lea.vmem %s11, 2
        %v2249 = vld [vmem:[%s2248] sm:$0x3]
        %s2250 = scalar_lea.vmem %s12, 1
        %v2251 = vld [vmem:[%s2250] sm:$0x1]
        %v2253 = vlaneseq
        %v2254 = vshrl.u32 %v2253, 7
        %v2255 = vsub.s32 0, %v2254
        %v2256 = vrot.slane %v2251, %v2255
        %v2259 = vsel %vm1039, %v2240, 0
        %v2262 = vsel %vm1039, %v2245, 0
        %v2265 = vsel %vm1046, %v2249, 0
        %2267 = vmatprep.subr.mxu0 0.0
        %2268 = vmatpush1.msra.mxu0 %v2265
        %2269 = vmatprep.subr.mxu0 0.0
        %2270 = vmatpush1.msra.mxu0 0.0
        %2271 = vmatprep.subr.mxu0 0.0
        %2272 = vmatpush1.msra.mxu0 0.0
        %2273 = vmatprep.subr.mxu0 0.0
        %2274 = vmatpush1.msra.mxu0 0.0
        %2275 = vmatprep.subr.mxu0 0.0
        %2276 = vmatpush1.msra.mxu0 0.0
        %2277 = vmatprep.subr.mxu0 0.0
        %2278 = vmatpush1.msra.mxu0 0.0
        %2279 = vmatprep.subr.mxu0 0.0
        %2280 = vmatpush1.msra.mxu0 0.0
        %2281 = vmatprep.subr.mxu0 0.0
        %2282 = vmatpush1.msra.mxu0 0.0
        %2283 = vmatprep.subr.mxu0 0.0
        %2284 = vmatpush1.msra.mxu0 0.0
        %2285 = vmatprep.subr.mxu0 0.0
        %2286 = vmatpush1.msra.mxu0 0.0
        %2287 = vmatprep.subr.mxu0 0.0
        %2288 = vmatpush1.msra.mxu0 0.0
        %2289 = vmatprep.subr.mxu0 0.0
        %2290 = vmatpush1.msra.mxu0 0.0
        %2291 = vmatprep.subr.mxu0 0.0
        %2292 = vmatpush1.msra.mxu0 0.0
        %2293 = vmatprep.subr.mxu0 0.0
        %2294 = vmatpush1.msra.mxu0 0.0
        %2295 = vmatprep.subr.mxu0 0.0
        %2296 = vmatpush1.msra.mxu0 0.0
        %2297 = vmatprep.subr.mxu0 0.0
        %2298 = vmatpush1.msra.mxu0 0.0
        %2299 = vmatprep.subr.mxu0 0.0
        %2300 = vmatpush1.msra.mxu0 0.0
        %2301 = vmatprep.subr.mxu0 0.0
        %2302 = vmatpush1.msra.mxu0 0.0
        %2303 = vmatprep.subr.mxu0 0.0
        %2304 = vmatpush1.msra.mxu0 0.0
        %2305 = vmatprep.subr.mxu0 0.0
        %2306 = vmatpush1.msra.mxu0 0.0
        %2307 = vmatprep.subr.mxu0 0.0
        %2308 = vmatpush1.msra.mxu0 0.0
        %2309 = vmatprep.subr.mxu0 0.0
        %2310 = vmatpush1.msra.mxu0 0.0
        %2311 = vmatprep.subr.mxu0 0.0
        %2312 = vmatpush1.msra.mxu0 0.0
        %2313 = vmatprep.subr.mxu0 0.0
        %2314 = vmatpush1.msra.mxu0 0.0
        %2315 = vmatprep.subr.mxu0 0.0
        %2316 = vmatpush1.msra.mxu0 0.0
        %2317 = vmatprep.subr.mxu0 0.0
        %2318 = vmatpush1.msra.mxu0 0.0
        %2319 = vmatprep.subr.mxu0 0.0
        %2320 = vmatpush1.msra.mxu0 0.0
        %2321 = vmatprep.subr.mxu0 0.0
        %2322 = vmatpush1.msra.mxu0 0.0
        %2323 = vmatprep.subr.mxu0 0.0
        %2324 = vmatpush1.msra.mxu0 0.0
        %2325 = vmatprep.subr.mxu0 0.0
        %2326 = vmatpush1.msra.mxu0 0.0
        %2327 = vmatprep.subr.mxu0 0.0
        %2328 = vmatpush1.msra.mxu0 0.0
        %2329 = vmatprep.subr.mxu0 0.0
        %2330 = vmatpush1.msra.mxu0 0.0
        %2331 = vmatprep.mubr.f32.mxu0 0.0
        %2332 = vmatmul.mubr.f32.gmra.mrb[0].mxu0 %v2259
        %v2333 = vpop.f32.mrb[0].mxu0
        %v2334 = vadd.f32 %v2256, %v2333
        %v2335 = vpop.f32.mrb[0].mxu0
        %2336 = vmatprep.mubr.f32.mxu0 0.0
        %2337 = vmatmul.mubr.f32.gmra.mrb[0].mxu0 %v2262
        %v2338 = vpop.f32.mrb[0].mxu0
        %v2339 = vadd.f32 %v2256, %v2338
        %v2340 = vpop.f32.mrb[0].mxu0
        %2341 = vdwg.mxu0
        %vm2342 = vcmp.gt.f32.partialorder %v2334, 20.0
        %vm2343 = vcmp.gt.f32.partialorder %v2339, 20.0
        %v2344 = vmin.f32 %v2334, 20.0
        %v2345 = vmin.f32 %v2339, 20.0
        %v2346 = vmul.f32 %v2344, 1.442695
        %v2347 = vpow.pop %v2346
        %v2348 = vmul.f32 %v2345, 1.442695
        %v2349 = vpow.pop %v2348
        %v2350 = vadd.f32 %v2347, 1.0
        %v2351 = vlog2.pop %v2350
        %v2352 = vmul.f32 %v2351, 0.6931472
        %v2353 = vmul.f32 -0.5, %v2347
        %v2354 = vadd.f32 %v2353, 1.0
        %v2355 = vmul.f32 %v2354, %v2347
        %v2356 = vand.u32 2147483647, %v2347
        %vm2357 = vcmp.lt.f32.partialorder %v2356, 0.0004427343
        %v2358 = vsel %vm2357, %v2355, %v2352
        %v2359 = vadd.f32 %v2349, 1.0
        %v2360 = vlog2.pop %v2359
        %v2361 = vmul.f32 %v2360, 0.6931472
        %v2362 = vmul.f32 -0.5, %v2349
        %v2363 = vadd.f32 %v2362, 1.0
        %v2364 = vmul.f32 %v2363, %v2349
        %v2365 = vand.u32 2147483647, %v2349
        %vm2366 = vcmp.lt.f32.partialorder %v2365, 0.0004427343
        %v2367 = vsel %vm2366, %v2364, %v2361
        %v2368 = vsel %vm2342, %v2334, %v2358
        %v2369 = vsel %vm2343, %v2339, %v2367
        %s2370 = scalar_lea.vmem %s9, 16
        %v2371 = vld [vmem:[%s2370] sm:$0xff]
        %v2372 = vld [vmem:[%s2370 + $0x8] sm:$0xff]
        %v2374 = vsel %vm949, %v2371, 0
        %v2377 = vsel %vm949, %v2372, 0
        %2379 = vmatprep.subr.mxu0 0.0
        %2380 = vmatpush1.xpose.msra.mxu0 %v2168
        %2381 = vmatprep.subr.mxu0 0.0
        %2382 = vmatpush1.xpose.msra.mxu0 %v2171
        %2383 = vmatprep.subr.mxu0 0.0
        %2384 = vmatpush1.xpose.msra.mxu0 0.0
        %2385 = vmatprep.subr.mxu0 0.0
        %2386 = vmatpush1.xpose.msra.mxu0 0.0
        %2387 = vmatprep.subr.mxu0 0.0
        %2388 = vmatpush1.xpose.msra.mxu0 0.0
        %2389 = vmatprep.subr.mxu0 0.0
        %2390 = vmatpush1.xpose.msra.mxu0 0.0
        %2391 = vmatprep.subr.mxu0 0.0
        %2392 = vmatpush1.xpose.msra.mxu0 0.0
        %2393 = vmatprep.subr.mxu0 0.0
        %2394 = vmatpush1.xpose.msra.mxu0 0.0
        %2395 = vmatprep.subr.mxu0 0.0
        %2396 = vmatpush1.xpose.msra.mxu0 0.0
        %2397 = vmatprep.subr.mxu0 0.0
        %2398 = vmatpush1.xpose.msra.mxu0 0.0
        %2399 = vmatprep.subr.mxu0 0.0
        %2400 = vmatpush1.xpose.msra.mxu0 0.0
        %2401 = vmatprep.subr.mxu0 0.0
        %2402 = vmatpush1.xpose.msra.mxu0 0.0
        %2403 = vmatprep.subr.mxu0 0.0
        %2404 = vmatpush1.xpose.msra.mxu0 0.0
        %2405 = vmatprep.subr.mxu0 0.0
        %2406 = vmatpush1.xpose.msra.mxu0 0.0
        %2407 = vmatprep.subr.mxu0 0.0
        %2408 = vmatpush1.xpose.msra.mxu0 0.0
        %2409 = vmatprep.subr.mxu0 0.0
        %2410 = vmatpush1.xpose.msra.mxu0 0.0
        %2411 = vmatprep.subr.mxu0 0.0
        %2412 = vmatpush1.xpose.msra.mxu0 0.0
        %2413 = vmatprep.subr.mxu0 0.0
        %2414 = vmatpush1.xpose.msra.mxu0 0.0
        %2415 = vmatprep.subr.mxu0 0.0
        %2416 = vmatpush1.xpose.msra.mxu0 0.0
        %2417 = vmatprep.subr.mxu0 0.0
        %2418 = vmatpush1.xpose.msra.mxu0 0.0
        %2419 = vmatprep.subr.mxu0 0.0
        %2420 = vmatpush1.xpose.msra.mxu0 0.0
        %2421 = vmatprep.subr.mxu0 0.0
        %2422 = vmatpush1.xpose.msra.mxu0 0.0
        %2423 = vmatprep.subr.mxu0 0.0
        %2424 = vmatpush1.xpose.msra.mxu0 0.0
        %2425 = vmatprep.subr.mxu0 0.0
        %2426 = vmatpush1.xpose.msra.mxu0 0.0
        %2427 = vmatprep.subr.mxu0 0.0
        %2428 = vmatpush1.xpose.msra.mxu0 0.0
        %2429 = vmatprep.subr.mxu0 0.0
        %2430 = vmatpush1.xpose.msra.mxu0 0.0
        %2431 = vmatprep.subr.mxu0 0.0
        %2432 = vmatpush1.xpose.msra.mxu0 0.0
        %2433 = vmatprep.subr.mxu0 0.0
        %2434 = vmatpush1.xpose.msra.mxu0 0.0
        %2435 = vmatprep.subr.mxu0 0.0
        %2436 = vmatpush1.xpose.msra.mxu0 0.0
        %2437 = vmatprep.subr.mxu0 0.0
        %2438 = vmatpush1.xpose.msra.mxu0 0.0
        %2439 = vmatprep.subr.mxu0 0.0
        %2440 = vmatpush1.xpose.msra.mxu0 0.0
        %2441 = vmatprep.subr.mxu0 0.0
        %2442 = vmatpush1.xpose.msra.mxu0 0.0
        %2443 = vmatprep.mubr.f32.mxu0 0.0
        %2444 = vmatmul.mubr.f32.gmra.mrb[0].mxu0 %v2374
        %v2445 = vpop.f32.mrb[0].mxu0
        %v2446 = vadd.f32 0.0, %v2445
        %v2447 = vpop.f32.mrb[0].mxu0
        %2448 = vmatprep.mubr.f32.mxu0 0.0
        %2449 = vmatmul.mubr.f32.gmra.mrb[0].mxu0 %v2377
        %v2450 = vpop.f32.mrb[0].mxu0
        %v2451 = vadd.f32 0.0, %v2450
        %v2452 = vpop.f32.mrb[0].mxu0
        %2453 = vdwg.mxu0
        %s2454 = scalar_lea.vmem %s10, 16
        %v2455 = vld [vmem:[%s2454] sm:$0xff]
        %v2456 = vld [vmem:[%s2454 + $0x8] sm:$0xff]
        %v2458 = vsel %vm949, %v2455, 0
        %v2461 = vsel %vm949, %v2456, 0
        %2463 = vmatprep.subr.mxu0 0.0
        %2464 = vmatpush1.xpose.msra.mxu0 %v2168
        %2465 = vmatprep.subr.mxu0 0.0
        %2466 = vmatpush1.xpose.msra.mxu0 %v2171
        %2467 = vmatprep.subr.mxu0 0.0
        %2468 = vmatpush1.xpose.msra.mxu0 0.0
        %2469 = vmatprep.subr.mxu0 0.0
        %2470 = vmatpush1.xpose.msra.mxu0 0.0
        %2471 = vmatprep.subr.mxu0 0.0
        %2472 = vmatpush1.xpose.msra.mxu0 0.0
        %2473 = vmatprep.subr.mxu0 0.0
        %2474 = vmatpush1.xpose.msra.mxu0 0.0
        %2475 = vmatprep.subr.mxu0 0.0
        %2476 = vmatpush1.xpose.msra.mxu0 0.0
        %2477 = vmatprep.subr.mxu0 0.0
        %2478 = vmatpush1.xpose.msra.mxu0 0.0
        %2479 = vmatprep.subr.mxu0 0.0
        %2480 = vmatpush1.xpose.msra.mxu0 0.0
        %2481 = vmatprep.subr.mxu0 0.0
        %2482 = vmatpush1.xpose.msra.mxu0 0.0
        %2483 = vmatprep.subr.mxu0 0.0
        %2484 = vmatpush1.xpose.msra.mxu0 0.0
        %2485 = vmatprep.subr.mxu0 0.0
        %2486 = vmatpush1.xpose.msra.mxu0 0.0
        %2487 = vmatprep.subr.mxu0 0.0
        %2488 = vmatpush1.xpose.msra.mxu0 0.0
        %2489 = vmatprep.subr.mxu0 0.0
        %2490 = vmatpush1.xpose.msra.mxu0 0.0
        %2491 = vmatprep.subr.mxu0 0.0
        %2492 = vmatpush1.xpose.msra.mxu0 0.0
        %2493 = vmatprep.subr.mxu0 0.0
        %2494 = vmatpush1.xpose.msra.mxu0 0.0
        %2495 = vmatprep.subr.mxu0 0.0
        %2496 = vmatpush1.xpose.msra.mxu0 0.0
        %2497 = vmatprep.subr.mxu0 0.0
        %2498 = vmatpush1.xpose.msra.mxu0 0.0
        %2499 = vmatprep.subr.mxu0 0.0
        %2500 = vmatpush1.xpose.msra.mxu0 0.0
        %2501 = vmatprep.subr.mxu0 0.0
        %2502 = vmatpush1.xpose.msra.mxu0 0.0
        %2503 = vmatprep.subr.mxu0 0.0
        %2504 = vmatpush1.xpose.msra.mxu0 0.0
        %2505 = vmatprep.subr.mxu0 0.0
        %2506 = vmatpush1.xpose.msra.mxu0 0.0
        %2507 = vmatprep.subr.mxu0 0.0
        %2508 = vmatpush1.xpose.msra.mxu0 0.0
        %2509 = vmatprep.subr.mxu0 0.0
        %2510 = vmatpush1.xpose.msra.mxu0 0.0
        %2511 = vmatprep.subr.mxu0 0.0
        %2512 = vmatpush1.xpose.msra.mxu0 0.0
        %2513 = vmatprep.subr.mxu0 0.0
        %2514 = vmatpush1.xpose.msra.mxu0 0.0
        %2515 = vmatprep.subr.mxu0 0.0
        %2516 = vmatpush1.xpose.msra.mxu0 0.0
        %2517 = vmatprep.subr.mxu0 0.0
        %2518 = vmatpush1.xpose.msra.mxu0 0.0
        %2519 = vmatprep.subr.mxu0 0.0
        %2520 = vmatpush1.xpose.msra.mxu0 0.0
        %2521 = vmatprep.subr.mxu0 0.0
        %2522 = vmatpush1.xpose.msra.mxu0 0.0
        %2523 = vmatprep.subr.mxu0 0.0
        %2524 = vmatpush1.xpose.msra.mxu0 0.0
        %2525 = vmatprep.subr.mxu0 0.0
        %2526 = vmatpush1.xpose.msra.mxu0 0.0
        %2527 = vmatprep.mubr.f32.mxu0 0.0
        %2528 = vmatmul.mubr.f32.gmra.mrb[0].mxu0 %v2458
        %v2529 = vpop.f32.mrb[0].mxu0
        %v2530 = vadd.f32 0.0, %v2529
        %v2531 = vpop.f32.mrb[0].mxu0
        %2532 = vmatprep.mubr.f32.mxu0 0.0
        %2533 = vmatmul.mubr.f32.gmra.mrb[0].mxu0 %v2461
        %v2534 = vpop.f32.mrb[0].mxu0
        %v2535 = vadd.f32 0.0, %v2534
        %v2536 = vpop.f32.mrb[0].mxu0
        %2537 = vdwg.mxu0
        %s2538 = scalar_lea.vmem %s13, 16
        %v2539 = vld [vmem:[%s2538] sm:$0xff]
        %v2540 = vld [vmem:[%s2538 + $0x8] sm:$0xff]
        %v2541 = vmul.f32 %v2368, %v2156
        %v2542 = vmul.f32 %v2369, %v2157
        %v2543 = vlaneseq
        %v2544 = vshrl.u32 %v2543, 7
        %v2545 = vsub.s32 0, %v2544
        %v2546 = vrot.slane %v2368, %v2545
        %v2547 = vmul.f32 %v2546, %v2539
        %v2548 = vmul.f32 %v2546, %v2540
        %v2549 = vmul.f32 %v2547, 1.442695
        %v2550 = vpow.pop %v2549
        %v2551 = vmul.f32 %v2548, 1.442695
        %v2552 = vpow.pop %v2551
        %v2553 = vlaneseq
        %v2554 = vshrl.u32 %v2553, 7
        %v2555 = vsub.s32 1, %v2554
        %v2556 = vrot.slane %v2368, %v2555
        %v2557 = vmul.f32 %v2556, %v2539
        %v2558 = vmul.f32 %v2556, %v2540
        %v2559 = vmul.f32 %v2557, 1.442695
        %v2560 = vpow.pop %v2559
        %v2561 = vmul.f32 %v2558, 1.442695
        %v2562 = vpow.pop %v2561
        %v2563 = vlaneseq
        %v2564 = vshrl.u32 %v2563, 7
        %v2565 = vsub.s32 2, %v2564
        %v2566 = vrot.slane %v2368, %v2565
        %v2567 = vmul.f32 %v2566, %v2539
        %v2568 = vmul.f32 %v2566, %v2540
        %v2569 = vmul.f32 %v2567, 1.442695
        %v2570 = vpow.pop %v2569
        %v2571 = vmul.f32 %v2568, 1.442695
        %v2572 = vpow.pop %v2571
        %v2573 = vlaneseq
        %v2574 = vshrl.u32 %v2573, 7
        %v2575 = vsub.s32 3, %v2574
        %v2576 = vrot.slane %v2368, %v2575
        %v2577 = vmul.f32 %v2576, %v2539
        %v2578 = vmul.f32 %v2576, %v2540
        %v2579 = vmul.f32 %v2577, 1.442695
        %v2580 = vpow.pop %v2579
        %v2581 = vmul.f32 %v2578, 1.442695
        %v2582 = vpow.pop %v2581
        %v2583 = vlaneseq
        %v2584 = vshrl.u32 %v2583, 7
        %v2585 = vsub.s32 4, %v2584
        %v2586 = vrot.slane %v2368, %v2585
        %v2587 = vmul.f32 %v2586, %v2539
        %v2588 = vmul.f32 %v2586, %v2540
        %v2589 = vmul.f32 %v2587, 1.442695
        %v2590 = vpow.pop %v2589
        %v2591 = vmul.f32 %v2588, 1.442695
        %v2592 = vpow.pop %v2591
        %v2593 = vlaneseq
        %v2594 = vshrl.u32 %v2593, 7
        %v2595 = vsub.s32 5, %v2594
        %v2596 = vrot.slane %v2368, %v2595
        %v2597 = vmul.f32 %v2596, %v2539
        %v2598 = vmul.f32 %v2596, %v2540
        %v2599 = vmul.f32 %v2597, 1.442695
        %v2600 = vpow.pop %v2599
        %v2601 = vmul.f32 %v2598, 1.442695
        %v2602 = vpow.pop %v2601
        %v2603 = vlaneseq
        %v2604 = vshrl.u32 %v2603, 7
        %v2605 = vsub.s32 6, %v2604
        %v2606 = vrot.slane %v2368, %v2605
        %v2607 = vmul.f32 %v2606, %v2539
        %v2608 = vmul.f32 %v2606, %v2540
        %v2609 = vmul.f32 %v2607, 1.442695
        %v2610 = vpow.pop %v2609
        %v2611 = vmul.f32 %v2608, 1.442695
        %v2612 = vpow.pop %v2611
        %v2613 = vlaneseq
        %v2614 = vshrl.u32 %v2613, 7
        %v2615 = vsub.s32 7, %v2614
        %v2616 = vrot.slane %v2368, %v2615
        %v2617 = vmul.f32 %v2616, %v2539
        %v2618 = vmul.f32 %v2616, %v2540
        %v2619 = vmul.f32 %v2617, 1.442695
        %v2620 = vpow.pop %v2619
        %v2621 = vmul.f32 %v2618, 1.442695
        %v2622 = vpow.pop %v2621
        %v2623 = vlaneseq
        %v2624 = vshrl.u32 %v2623, 7
        %v2625 = vsub.s32 0, %v2624
        %v2626 = vrot.slane %v2369, %v2625
        %v2627 = vmul.f32 %v2626, %v2539
        %v2628 = vmul.f32 %v2626, %v2540
        %v2629 = vmul.f32 %v2627, 1.442695
        %v2630 = vpow.pop %v2629
        %v2631 = vmul.f32 %v2628, 1.442695
        %v2632 = vpow.pop %v2631
        %v2633 = vlaneseq
        %v2634 = vshrl.u32 %v2633, 7
        %v2635 = vsub.s32 0, %v2634
        %v2636 = vrot.slane %v2541, %v2635
        %2638 = vset.pattern.permute.xlu0 0
        %2639 = vperm.xlu0 %2638, %v2446
        %v2640 = vpop.permute.xlu0 %2639
        %2643 = vset.pattern.permute.xlu0 0
        %2644 = vperm.xlu0 %2643, %v2451
        %v2645 = vpop.permute.xlu0 %2644
        %v2647 = vmul.f32 %v2636, %v2640
        %v2648 = vmul.f32 %v2636, %v2645
        %v2649 = vlaneseq
        %v2650 = vshrl.u32 %v2649, 7
        %v2651 = vsub.s32 1, %v2650
        %v2652 = vrot.slane %v2541, %v2651
        %2653 = vset.pattern.permute.xlu0 1
        %2654 = vperm.xlu0 %2653, %v2446
        %v2655 = vpop.permute.xlu0 %2654
        %2657 = vset.pattern.permute.xlu0 1
        %2658 = vperm.xlu0 %2657, %v2451
        %v2659 = vpop.permute.xlu0 %2658
        %v2661 = vmul.f32 %v2652, %v2655
        %v2662 = vmul.f32 %v2652, %v2659
        %v2663 = vlaneseq
        %v2664 = vshrl.u32 %v2663, 7
        %v2665 = vsub.s32 2, %v2664
        %v2666 = vrot.slane %v2541, %v2665
        %2667 = vset.pattern.permute.xlu0 2
        %2668 = vperm.xlu0 %2667, %v2446
        %v2669 = vpop.permute.xlu0 %2668
        %2671 = vset.pattern.permute.xlu0 2
        %2672 = vperm.xlu0 %2671, %v2451
        %v2673 = vpop.permute.xlu0 %2672
        %v2675 = vmul.f32 %v2666, %v2669
        %v2676 = vmul.f32 %v2666, %v2673
        %v2677 = vlaneseq
        %v2678 = vshrl.u32 %v2677, 7
        %v2679 = vsub.s32 3, %v2678
        %v2680 = vrot.slane %v2541, %v2679
        %2681 = vset.pattern.permute.xlu0 3
        %2682 = vperm.xlu0 %2681, %v2446
        %v2683 = vpop.permute.xlu0 %2682
        %2685 = vset.pattern.permute.xlu0 3
        %2686 = vperm.xlu0 %2685, %v2451
        %v2687 = vpop.permute.xlu0 %2686
        %v2689 = vmul.f32 %v2680, %v2683
        %v2690 = vmul.f32 %v2680, %v2687
        %v2691 = vlaneseq
        %v2692 = vshrl.u32 %v2691, 7
        %v2693 = vsub.s32 4, %v2692
        %v2694 = vrot.slane %v2541, %v2693
        %2695 = vset.pattern.permute.xlu0 4
        %2696 = vperm.xlu0 %2695, %v2446
        %v2697 = vpop.permute.xlu0 %2696
        %2699 = vset.pattern.permute.xlu0 4
        %2700 = vperm.xlu0 %2699, %v2451
        %v2701 = vpop.permute.xlu0 %2700
        %v2703 = vmul.f32 %v2694, %v2697
        %v2704 = vmul.f32 %v2694, %v2701
        %v2705 = vlaneseq
        %v2706 = vshrl.u32 %v2705, 7
        %v2707 = vsub.s32 5, %v2706
        %v2708 = vrot.slane %v2541, %v2707
        %2709 = vset.pattern.permute.xlu0 5
        %2710 = vperm.xlu0 %2709, %v2446
        %v2711 = vpop.permute.xlu0 %2710
        %2713 = vset.pattern.permute.xlu0 5
        %2714 = vperm.xlu0 %2713, %v2451
        %v2715 = vpop.permute.xlu0 %2714
        %v2717 = vmul.f32 %v2708, %v2711
        %v2718 = vmul.f32 %v2708, %v2715
        %v2719 = vlaneseq
        %v2720 = vshrl.u32 %v2719, 7
        %v2721 = vsub.s32 6, %v2720
        %v2722 = vrot.slane %v2541, %v2721
        %2723 = vset.pattern.permute.xlu0 6
        %2724 = vperm.xlu0 %2723, %v2446
        %v2725 = vpop.permute.xlu0 %2724
        %2727 = vset.pattern.permute.xlu0 6
        %2728 = vperm.xlu0 %2727, %v2451
        %v2729 = vpop.permute.xlu0 %2728
        %v2731 = vmul.f32 %v2722, %v2725
        %v2732 = vmul.f32 %v2722, %v2729
        %v2733 = vlaneseq
        %v2734 = vshrl.u32 %v2733, 7
        %v2735 = vsub.s32 7, %v2734
        %v2736 = vrot.slane %v2541, %v2735
        %2737 = vset.pattern.permute.xlu0 7
        %2738 = vperm.xlu0 %2737, %v2446
        %v2739 = vpop.permute.xlu0 %2738
        %2741 = vset.pattern.permute.xlu0 7
        %2742 = vperm.xlu0 %2741, %v2451
        %v2743 = vpop.permute.xlu0 %2742
        %v2745 = vmul.f32 %v2736, %v2739
        %v2746 = vmul.f32 %v2736, %v2743
        %v2747 = vlaneseq
        %v2748 = vshrl.u32 %v2747, 7
        %v2749 = vsub.s32 0, %v2748
        %v2750 = vrot.slane %v2542, %v2749
        %2751 = vset.pattern.permute.xlu0 8
        %2752 = vperm.xlu0 %2751, %v2446
        %v2753 = vpop.permute.xlu0 %2752
        %2755 = vset.pattern.permute.xlu0 8
        %2756 = vperm.xlu0 %2755, %v2451
        %v2757 = vpop.permute.xlu0 %2756
        %v2759 = vmul.f32 %v2750, %v2753
        %v2760 = vmul.f32 %v2750, %v2757
        %v2761 = vmul.f32 %v2550, 0.0
        %v2762 = vmul.f32 %v2552, 0.0
        %v2763 = vadd.f32 %v2761, %v2647
        %v2764 = vadd.f32 %v2762, %v2648
        %2766 = vset.pattern.permute.xlu0 0
        %2767 = vperm.xlu0 %2766, %v2530
        %v2768 = vpop.permute.xlu0 %2767
        %2771 = vset.pattern.permute.xlu0 0
        %2772 = vperm.xlu0 %2771, %v2535
        %v2773 = vpop.permute.xlu0 %2772
        %v2775 = vmul.f32 %v2763, %v2768
        %v2776 = vmul.f32 %v2764, %v2773
        %v2777 = vsel %vm949, %v2775, 0.0
        %v2778 = vsel %vm949, %v2776, 0.0
        %v2779 = vadd.f32 %v2777, %v2778
        %v2780 = vrot.slane %v2779, 4
        %v2781 = vadd.f32 %v2779, %v2780
        %v2782 = vrot.slane %v2781, 2
        %v2783 = vadd.f32 %v2781, %v2782
        %v2784 = vrot.slane %v2783, 1
        %v2785 = vadd.f32 %v2783, %v2784
        %2786 = vst.msk [vmem:[#allocation2] sm:$0x1] %vm1566, %v2785
        %v2787 = vmul.f32 %v2560, %v2763
        %v2788 = vmul.f32 %v2562, %v2764
        %v2789 = vadd.f32 %v2787, %v2661
        %v2790 = vadd.f32 %v2788, %v2662
        %2791 = vset.pattern.permute.xlu0 1
        %2792 = vperm.xlu0 %2791, %v2530
        %v2793 = vpop.permute.xlu0 %2792
        %2795 = vset.pattern.permute.xlu0 1
        %2796 = vperm.xlu0 %2795, %v2535
        %v2797 = vpop.permute.xlu0 %2796
        %v2799 = vmul.f32 %v2789, %v2793
        %v2800 = vmul.f32 %v2790, %v2797
        %v2801 = vsel %vm949, %v2799, 0.0
        %v2802 = vsel %vm949, %v2800, 0.0
        %v2803 = vadd.f32 %v2801, %v2802
        %v2804 = vrot.slane %v2803, 4
        %v2805 = vadd.f32 %v2803, %v2804
        %v2806 = vrot.slane %v2805, 2
        %v2807 = vadd.f32 %v2805, %v2806
        %v2808 = vrot.slane %v2807, 1
        %v2809 = vadd.f32 %v2807, %v2808
        %2810 = vst.msk [vmem:[#allocation2 + $0x1] sm:$0x1] %vm1566, %v2809
        %v2811 = vmul.f32 %v2570, %v2789
        %v2812 = vmul.f32 %v2572, %v2790
        %v2813 = vadd.f32 %v2811, %v2675
        %v2814 = vadd.f32 %v2812, %v2676
        %2815 = vset.pattern.permute.xlu0 2
        %2816 = vperm.xlu0 %2815, %v2530
        %v2817 = vpop.permute.xlu0 %2816
        %2819 = vset.pattern.permute.xlu0 2
        %2820 = vperm.xlu0 %2819, %v2535
        %v2821 = vpop.permute.xlu0 %2820
        %v2823 = vmul.f32 %v2813, %v2817
        %v2824 = vmul.f32 %v2814, %v2821
        %v2825 = vsel %vm949, %v2823, 0.0
        %v2826 = vsel %vm949, %v2824, 0.0
        %v2827 = vadd.f32 %v2825, %v2826
        %v2828 = vrot.slane %v2827, 4
        %v2829 = vadd.f32 %v2827, %v2828
        %v2830 = vrot.slane %v2829, 2
        %v2831 = vadd.f32 %v2829, %v2830
        %v2832 = vrot.slane %v2831, 1
        %v2833 = vadd.f32 %v2831, %v2832
        %2834 = vst.msk [vmem:[#allocation2 + $0x2] sm:$0x1] %vm1566, %v2833
        %v2835 = vmul.f32 %v2580, %v2813
        %v2836 = vmul.f32 %v2582, %v2814
        %v2837 = vadd.f32 %v2835, %v2689
        %v2838 = vadd.f32 %v2836, %v2690
        %2839 = vset.pattern.permute.xlu0 3
        %2840 = vperm.xlu0 %2839, %v2530
        %v2841 = vpop.permute.xlu0 %2840
        %2843 = vset.pattern.permute.xlu0 3
        %2844 = vperm.xlu0 %2843, %v2535
        %v2845 = vpop.permute.xlu0 %2844
        %v2847 = vmul.f32 %v2837, %v2841
        %v2848 = vmul.f32 %v2838, %v2845
        %v2849 = vsel %vm949, %v2847, 0.0
        %v2850 = vsel %vm949, %v2848, 0.0
        %v2851 = vadd.f32 %v2849, %v2850
        %v2852 = vrot.slane %v2851, 4
        %v2853 = vadd.f32 %v2851, %v2852
        %v2854 = vrot.slane %v2853, 2
        %v2855 = vadd.f32 %v2853, %v2854
        %v2856 = vrot.slane %v2855, 1
        %v2857 = vadd.f32 %v2855, %v2856
        %2858 = vst.msk [vmem:[#allocation2 + $0x3] sm:$0x1] %vm1566, %v2857
        %v2859 = vmul.f32 %v2590, %v2837
        %v2860 = vmul.f32 %v2592, %v2838
        %v2861 = vadd.f32 %v2859, %v2703
        %v2862 = vadd.f32 %v2860, %v2704
        %2863 = vset.pattern.permute.xlu0 4
        %2864 = vperm.xlu0 %2863, %v2530
        %v2865 = vpop.permute.xlu0 %2864
        %2867 = vset.pattern.permute.xlu0 4
        %2868 = vperm.xlu0 %2867, %v2535
        %v2869 = vpop.permute.xlu0 %2868
        %v2871 = vmul.f32 %v2861, %v2865
        %v2872 = vmul.f32 %v2862, %v2869
        %v2873 = vsel %vm949, %v2871, 0.0
        %v2874 = vsel %vm949, %v2872, 0.0
        %v2875 = vadd.f32 %v2873, %v2874
        %v2876 = vrot.slane %v2875, 4
        %v2877 = vadd.f32 %v2875, %v2876
        %v2878 = vrot.slane %v2877, 2
        %v2879 = vadd.f32 %v2877, %v2878
        %v2880 = vrot.slane %v2879, 1
        %v2881 = vadd.f32 %v2879, %v2880
        %2882 = vst.msk [vmem:[#allocation2 + $0x4] sm:$0x1] %vm1566, %v2881
        %v2883 = vmul.f32 %v2600, %v2861
        %v2884 = vmul.f32 %v2602, %v2862
        %v2885 = vadd.f32 %v2883, %v2717
        %v2886 = vadd.f32 %v2884, %v2718
        %2887 = vset.pattern.permute.xlu0 5
        %2888 = vperm.xlu0 %2887, %v2530
        %v2889 = vpop.permute.xlu0 %2888
        %2891 = vset.pattern.permute.xlu0 5
        %2892 = vperm.xlu0 %2891, %v2535
        %v2893 = vpop.permute.xlu0 %2892
        %v2895 = vmul.f32 %v2885, %v2889
        %v2896 = vmul.f32 %v2886, %v2893
        %v2897 = vsel %vm949, %v2895, 0.0
        %v2898 = vsel %vm949, %v2896, 0.0
        %v2899 = vadd.f32 %v2897, %v2898
        %v2900 = vrot.slane %v2899, 4
        %v2901 = vadd.f32 %v2899, %v2900
        %v2902 = vrot.slane %v2901, 2
        %v2903 = vadd.f32 %v2901, %v2902
        %v2904 = vrot.slane %v2903, 1
        %v2905 = vadd.f32 %v2903, %v2904
        %2906 = vst.msk [vmem:[#allocation2 + $0x5] sm:$0x1] %vm1566, %v2905
        %v2907 = vmul.f32 %v2610, %v2885
        %v2908 = vmul.f32 %v2612, %v2886
        %v2909 = vadd.f32 %v2907, %v2731
        %v2910 = vadd.f32 %v2908, %v2732
        %2911 = vset.pattern.permute.xlu0 6
        %2912 = vperm.xlu0 %2911, %v2530
        %v2913 = vpop.permute.xlu0 %2912
        %2915 = vset.pattern.permute.xlu0 6
        %2916 = vperm.xlu0 %2915, %v2535
        %v2917 = vpop.permute.xlu0 %2916
        %v2919 = vmul.f32 %v2909, %v2913
        %v2920 = vmul.f32 %v2910, %v2917
        %v2921 = vsel %vm949, %v2919, 0.0
        %v2922 = vsel %vm949, %v2920, 0.0
        %v2923 = vadd.f32 %v2921, %v2922
        %v2924 = vrot.slane %v2923, 4
        %v2925 = vadd.f32 %v2923, %v2924
        %v2926 = vrot.slane %v2925, 2
        %v2927 = vadd.f32 %v2925, %v2926
        %v2928 = vrot.slane %v2927, 1
        %v2929 = vadd.f32 %v2927, %v2928
        %2930 = vst.msk [vmem:[#allocation2 + $0x6] sm:$0x1] %vm1566, %v2929
        %v2931 = vmul.f32 %v2620, %v2909
        %v2932 = vmul.f32 %v2622, %v2910
        %v2933 = vadd.f32 %v2931, %v2745
        %v2934 = vadd.f32 %v2932, %v2746
        %2935 = vset.pattern.permute.xlu0 7
        %2936 = vperm.xlu0 %2935, %v2530
        %v2937 = vpop.permute.xlu0 %2936
        %2939 = vset.pattern.permute.xlu0 7
        %2940 = vperm.xlu0 %2939, %v2535
        %v2941 = vpop.permute.xlu0 %2940
        %v2943 = vmul.f32 %v2933, %v2937
        %v2944 = vmul.f32 %v2934, %v2941
        %v2945 = vsel %vm949, %v2943, 0.0
        %v2946 = vsel %vm949, %v2944, 0.0
        %v2947 = vadd.f32 %v2945, %v2946
        %v2948 = vrot.slane %v2947, 4
        %v2949 = vadd.f32 %v2947, %v2948
        %v2950 = vrot.slane %v2949, 2
        %v2951 = vadd.f32 %v2949, %v2950
        %v2952 = vrot.slane %v2951, 1
        %v2953 = vadd.f32 %v2951, %v2952
        %2954 = vst.msk [vmem:[#allocation2 + $0x7] sm:$0x1] %vm1566, %v2953
        %v2955 = vmul.f32 %v2630, %v2933
        %v2956 = vmul.f32 %v2632, %v2934
        %v2957 = vadd.f32 %v2955, %v2759
        %v2958 = vadd.f32 %v2956, %v2760
        %2959 = vset.pattern.permute.xlu0 8
        %2960 = vperm.xlu0 %2959, %v2530
        %v2961 = vpop.permute.xlu0 %2960
        %2963 = vset.pattern.permute.xlu0 8
        %2964 = vperm.xlu0 %2963, %v2535
        %v2965 = vpop.permute.xlu0 %2964
        %v2967 = vmul.f32 %v2957, %v2961
        %v2968 = vmul.f32 %v2958, %v2965
        %v2969 = vsel %vm949, %v2967, 0.0
        %v2970 = vsel %vm949, %v2968, 0.0
        %v2971 = vadd.f32 %v2969, %v2970
        %v2972 = vrot.slane %v2971, 4
        %v2973 = vadd.f32 %v2971, %v2972
        %v2974 = vrot.slane %v2973, 2
        %v2975 = vadd.f32 %v2973, %v2974
        %v2976 = vrot.slane %v2975, 1
        %v2977 = vadd.f32 %v2975, %v2976
        %2978 = vst.msk [vmem:[#allocation2 + $0x8] sm:$0x1] %vm1566, %v2977
        %v2979 = vld [vmem:[#allocation2] sm:$0xff]
        %v2980 = vld [vmem:[#allocation2 + $0x8] sm:$0x1]
        %s2981 = scalar_lea.vmem %s14, 1
        %v2982 = vld [vmem:[%s2981] sm:$0x1]
        %v2984 = vlaneseq
        %v2985 = vshrl.u32 %v2984, 7
        %v2986 = vsub.s32 0, %v2985
        %v2987 = vrot.slane %v2982, %v2986
        %v2989 = vmul.f32 %v2987, %v2156
        %v2990 = vmul.f32 %v2987, %v2157
        %v2991 = vadd.f32 %v2979, %v2989
        %v2992 = vadd.f32 %v2980, %v2990
        %v2993 = vxor.u32 %v2063, 2147483648
        %v2994 = vxor.u32 %v2068, 2147483648
        %v2995 = vmul.f32 %v2993, 1.442695
        %v2996 = vpow.pop %v2995
        %v2997 = vmul.f32 %v2994, 1.442695
        %v2998 = vpow.pop %v2997
        %v2999 = vadd.f32 %v2996, 1.0
        %v3000 = vadd.f32 %v2998, 1.0
        %v3001 = vrcp.pop %v2999
        %v3002 = vmul.f32 1.0, %v3001
        %v3003 = vrcp.pop %v3000
        %v3004 = vmul.f32 1.0, %v3003
        %v3005 = vmul.f32 %v2063, %v3002
        %v3006 = vmul.f32 %v2068, %v3004
        %v3007 = vmul.f32 %v2991, %v3005
        %v3008 = vmul.f32 %v2992, %v3006
        %s3009 = scalar_lea.vmem %s15, 64
        %v3010 = vld [vmem:[%s3009] sm:$0xff]
        %v3011 = vld [vmem:[%s3009 + $0x8] sm:$0xff]
        %v3012 = vld [vmem:[%s3009 + $0x10] sm:$0xff]
        %v3013 = vld [vmem:[%s3009 + $0x18] sm:$0xff]
        %v3014 = vld [vmem:[%s3009 + $0x20] sm:$0xff]
        %v3015 = vld [vmem:[%s3009 + $0x28] sm:$0xff]
        %v3016 = vld [vmem:[%s3009 + $0x30] sm:$0xff]
        %v3017 = vld [vmem:[%s3009 + $0x38] sm:$0xff]
        %v3019 = vsel %vm949, %v3007, 0
        %v3022 = vsel %vm949, %v3008, 0
        %3024 = vmatprep.subr.mxu0 0.0
        %3025 = vmatpush1.msra.mxu0 %v3010
        %3026 = vmatprep.subr.mxu0 0.0
        %3027 = vmatpush1.msra.mxu0 %v3011
        %3028 = vmatprep.subr.mxu0 0.0
        %3029 = vmatpush1.msra.mxu0 %v3012
        %3030 = vmatprep.subr.mxu0 0.0
        %3031 = vmatpush1.msra.mxu0 %v3013
        %3032 = vmatprep.subr.mxu0 0.0
        %3033 = vmatpush1.msra.mxu0 %v3014
        %3034 = vmatprep.subr.mxu0 0.0
        %3035 = vmatpush1.msra.mxu0 %v3015
        %3036 = vmatprep.subr.mxu0 0.0
        %3037 = vmatpush1.msra.mxu0 %v3016
        %3038 = vmatprep.subr.mxu0 0.0
        %3039 = vmatpush1.msra.mxu0 %v3017
        %3040 = vmatprep.subr.mxu0 0.0
        %3041 = vmatpush1.msra.mxu0 0.0
        %3042 = vmatprep.subr.mxu0 0.0
        %3043 = vmatpush1.msra.mxu0 0.0
        %3044 = vmatprep.subr.mxu0 0.0
        %3045 = vmatpush1.msra.mxu0 0.0
        %3046 = vmatprep.subr.mxu0 0.0
        %3047 = vmatpush1.msra.mxu0 0.0
        %3048 = vmatprep.subr.mxu0 0.0
        %3049 = vmatpush1.msra.mxu0 0.0
        %3050 = vmatprep.subr.mxu0 0.0
        %3051 = vmatpush1.msra.mxu0 0.0
        %3052 = vmatprep.subr.mxu0 0.0
        %3053 = vmatpush1.msra.mxu0 0.0
        %3054 = vmatprep.subr.mxu0 0.0
        %3055 = vmatpush1.msra.mxu0 0.0
        %3056 = vmatprep.subr.mxu0 0.0
        %3057 = vmatpush1.msra.mxu0 0.0
        %3058 = vmatprep.subr.mxu0 0.0
        %3059 = vmatpush1.msra.mxu0 0.0
        %3060 = vmatprep.subr.mxu0 0.0
        %3061 = vmatpush1.msra.mxu0 0.0
        %3062 = vmatprep.subr.mxu0 0.0
        %3063 = vmatpush1.msra.mxu0 0.0
        %3064 = vmatprep.subr.mxu0 0.0
        %3065 = vmatpush1.msra.mxu0 0.0
        %3066 = vmatprep.subr.mxu0 0.0
        %3067 = vmatpush1.msra.mxu0 0.0
        %3068 = vmatprep.subr.mxu0 0.0
        %3069 = vmatpush1.msra.mxu0 0.0
        %3070 = vmatprep.subr.mxu0 0.0
        %3071 = vmatpush1.msra.mxu0 0.0
        %3072 = vmatprep.subr.mxu0 0.0
        %3073 = vmatpush1.msra.mxu0 0.0
        %3074 = vmatprep.subr.mxu0 0.0
        %3075 = vmatpush1.msra.mxu0 0.0
        %3076 = vmatprep.subr.mxu0 0.0
        %3077 = vmatpush1.msra.mxu0 0.0
        %3078 = vmatprep.subr.mxu0 0.0
        %3079 = vmatpush1.msra.mxu0 0.0
        %3080 = vmatprep.subr.mxu0 0.0
        %3081 = vmatpush1.msra.mxu0 0.0
        %3082 = vmatprep.subr.mxu0 0.0
        %3083 = vmatpush1.msra.mxu0 0.0
        %3084 = vmatprep.subr.mxu0 0.0
        %3085 = vmatpush1.msra.mxu0 0.0
        %3086 = vmatprep.subr.mxu0 0.0
        %3087 = vmatpush1.msra.mxu0 0.0
        %3088 = vmatprep.mubr.f32.mxu0 0.0
        %3089 = vmatmul.mubr.f32.gmra.mrb[0].mxu0 %v3019
        %v3090 = vpop.f32.mrb[0].mxu0
        %v3091 = vpop.f32.mrb[0].mxu0
        %3092 = vmatprep.mubr.f32.mxu0 0.0
        %3093 = vmatmul.mubr.f32.gmra.mrb[0].mxu0 %v3022
        %v3094 = vpop.f32.mrb[0].mxu0
        %v3095 = vadd.f32 0.0, %v3094
        %v3096 = vpop.f32.mrb[0].mxu0
        %3097 = vdwg.mxu0
        %v3098 = vmul.f32 %v3095, %v3095
        %v3099 = vsel %vm1883, %v3098, 0.0
        %3100 = vadd.xlane.f32.xlu0 %v3099
        %v3101 = vpop.xlane.xlu0 %3100
        %v3102 = vmul.f32 %v3101, %v1887
        %v3103 = vadd.f32 %v3102, 1.1920929e-07
        %v3104 = vrsqrt.pop %v3103
        %v3105 = vmul.f32 %v3095, %v3104
        %s3106 = scalar_lea.vmem %s16, 1
        %v3107 = vld [vmem:[%s3106] sm:$0x1]
        %v3109 = vlaneseq
        %v3110 = vshrl.u32 %v3109, 7
        %v3111 = vsub.s32 0, %v3110
        %v3112 = vrot.slane %v3107, %v3111
        %v3114 = vmul.f32 %v3105, %v3112
        %v3115 = vld [vmem:[%s17] sm:$0xff]
        %v3116 = vld [vmem:[%s17 + $0x8] sm:$0xff]
        %v3117 = vld [vmem:[%s17 + $0x10] sm:$0xff]
        %v3118 = vld [vmem:[%s17 + $0x18] sm:$0xff]
        %v3119 = vld [vmem:[%s18] sm:$0x1]
        %v3121 = vsel %vm691, %v3114, 0
        %3123 = vmatprep.subr.mxu0 0.0
        %3124 = vmatpush1.msra.mxu0 %v3115
        %3125 = vmatprep.subr.mxu0 0.0
        %3126 = vmatpush1.msra.mxu0 %v3116
        %3127 = vmatprep.subr.mxu0 0.0
        %3128 = vmatpush1.msra.mxu0 %v3117
        %3129 = vmatprep.subr.mxu0 0.0
        %3130 = vmatpush1.msra.mxu0 %v3118
        %3131 = vmatprep.subr.mxu0 0.0
        %3132 = vmatpush1.msra.mxu0 0.0
        %3133 = vmatprep.subr.mxu0 0.0
        %3134 = vmatpush1.msra.mxu0 0.0
        %3135 = vmatprep.subr.mxu0 0.0
        %3136 = vmatpush1.msra.mxu0 0.0
        %3137 = vmatprep.subr.mxu0 0.0
        %3138 = vmatpush1.msra.mxu0 0.0
        %3139 = vmatprep.subr.mxu0 0.0
        %3140 = vmatpush1.msra.mxu0 0.0
        %3141 = vmatprep.subr.mxu0 0.0
        %3142 = vmatpush1.msra.mxu0 0.0
        %3143 = vmatprep.subr.mxu0 0.0
        %3144 = vmatpush1.msra.mxu0 0.0
        %3145 = vmatprep.subr.mxu0 0.0
        %3146 = vmatpush1.msra.mxu0 0.0
        %3147 = vmatprep.subr.mxu0 0.0
        %3148 = vmatpush1.msra.mxu0 0.0
        %3149 = vmatprep.subr.mxu0 0.0
        %3150 = vmatpush1.msra.mxu0 0.0
        %3151 = vmatprep.subr.mxu0 0.0
        %3152 = vmatpush1.msra.mxu0 0.0
        %3153 = vmatprep.subr.mxu0 0.0
        %3154 = vmatpush1.msra.mxu0 0.0
        %3155 = vmatprep.subr.mxu0 0.0
        %3156 = vmatpush1.msra.mxu0 0.0
        %3157 = vmatprep.subr.mxu0 0.0
        %3158 = vmatpush1.msra.mxu0 0.0
        %3159 = vmatprep.subr.mxu0 0.0
        %3160 = vmatpush1.msra.mxu0 0.0
        %3161 = vmatprep.subr.mxu0 0.0
        %3162 = vmatpush1.msra.mxu0 0.0
        %3163 = vmatprep.subr.mxu0 0.0
        %3164 = vmatpush1.msra.mxu0 0.0
        %3165 = vmatprep.subr.mxu0 0.0
        %3166 = vmatpush1.msra.mxu0 0.0
        %3167 = vmatprep.subr.mxu0 0.0
        %3168 = vmatpush1.msra.mxu0 0.0
        %3169 = vmatprep.subr.mxu0 0.0
        %3170 = vmatpush1.msra.mxu0 0.0
        %3171 = vmatprep.subr.mxu0 0.0
        %3172 = vmatpush1.msra.mxu0 0.0
        %3173 = vmatprep.subr.mxu0 0.0
        %3174 = vmatpush1.msra.mxu0 0.0
        %3175 = vmatprep.subr.mxu0 0.0
        %3176 = vmatpush1.msra.mxu0 0.0
        %3177 = vmatprep.subr.mxu0 0.0
        %3178 = vmatpush1.msra.mxu0 0.0
        %3179 = vmatprep.subr.mxu0 0.0
        %3180 = vmatpush1.msra.mxu0 0.0
        %3181 = vmatprep.subr.mxu0 0.0
        %3182 = vmatpush1.msra.mxu0 0.0
        %3183 = vmatprep.subr.mxu0 0.0
        %3184 = vmatpush1.msra.mxu0 0.0
        %3185 = vmatprep.subr.mxu0 0.0
        %3186 = vmatpush1.msra.mxu0 0.0
        %3187 = vmatprep.mubr.f32.mxu0 0.0
        %3188 = vmatmul.mubr.f32.gmra.mrb[0].mxu0 %v3121
        %v3189 = vpop.f32.mrb[0].mxu0
        %v3190 = vadd.f32 %v3119, %v3189
        %v3191 = vpop.f32.mrb[0].mxu0
        %3192 = vdwg.mxu0
        %vm3193 = vcmask 73728
        %3194 = vst.msk [vmem:[%s592] sm:$0x1] %vm3193, %v3190
        %s3195 = sand.u32 %s445, 1
        %s3196 = scalar_lea.sflag [#allocation4], %s3195
        %s3197 = sand.u32 %s445, 1
        %s3198 = scalar_lea.vmem [#allocation3], %s3197
        // Predicated region
        $region97: #{tpu_custom_call.1} parent=95 // pred_check
          %p3199 = pneg %p455
        $region98: #{tpu_custom_call.1} parent=95 // pred_check_branch
          %3201 = sbr.rel (%p3199) target = $region100
        $region99: #{tpu_custom_call.1} parent=95 // pred_region
          %s3203 = ssub.s32 16, 16
          %3204 = vsyncadd %s3196, %s3203
          %s3205 = smul.addr %s33, 16
          %s3206 = scalar_lea.hbm %s19, %s3205
          %s3208 = sshll.u32 %s3198, 4
          %s3209 = int_to_ptr.vmem [resolvable:$true] %s3208
          %3211 = dma.vmem_to_hbm [thread:$0]  %s3209, 16, %s3206, %s3196
        $region100: #{tpu_custom_call.1} parent=95 // pred_fallthru
          _
      $region96: #{tpu_custom_call.1} parent=5 // pred_fallthru
        _
      %p3212 = scmp.le.s32.totalorder 2, %s28
      // Predicated region
      $region101: #{tpu_custom_call.1} parent=5 // pred_check
        %p3213 = pneg %p3212
      $region102: #{tpu_custom_call.1} parent=5 // pred_check_branch
        %3215 = sbr.rel (%p3213) target = $region104
      $region103: #{tpu_custom_call.1} parent=5 // pred_region
        %s3216 = ssub.s32 %s28, 2
        // Predicated region
        $region105: #{tpu_custom_call.1} parent=103 // pred_check
          %p3217 = pneg %p461
        $region106: #{tpu_custom_call.1} parent=103 // pred_check_branch
          %3219 = sbr.rel (%p3217) target = $region108
        $region107: #{tpu_custom_call.1} parent=103 // pred_region
          %s3220 = sand.u32 %s446, 1
          %s3221 = scalar_lea.sflag [#allocation4], %s3220
          %s3222 = sand.u32 %s446, 1
          %s3223 = scalar_lea.vmem [#allocation3], %s3222
          %3224 = dma.done %s3221, 16
        $region108: #{tpu_custom_call.1} parent=103 // pred_fallthru
          _
      $region104: #{tpu_custom_call.1} parent=5 // pred_fallthru
        _
    $region6: #{tpu_custom_call.1} parent=1 // loop_footer
      %s32 = sadd.s32 1, %s28
    $region7: #{tpu_custom_call.1} parent=1 // loop_footer_branch
      %27 = sbr.rel target = $region3
    $region8: #{tpu_custom_call.1} parent=1 // loop_exit
      _
    %3225 = vsyncpa [#allocation4], 1
    %s3226 = scalar_lea.sflag [#allocation4], 1
    %3227 = vsyncpa %s3226, 1

</llo_original>
